<compile_context>
chip_gen: v7x
topology: tpu7x:2x2x1
jax: 0.10.0
libtpu: 0.0.40
codegen_flags: <defaults>
</compile_context>

<pallas_src>
import jax
import jax.numpy as jnp
from jax.experimental import pallas as pl
from jax.experimental.pallas import tpu as pltpu


def mlp_kernel(x_ref, w1_ref, b1_ref, w2_ref, b2_ref, w3_ref, b3_ref,
               w4_ref, b4_ref, o_ref):
    # fc1 + ReLU: bf16 x bf16 on the MXU, f32 accumulation, f32 elementwise.
    h = jnp.dot(x_ref[...].astype(jnp.bfloat16), w1_ref[...],
                preferred_element_type=jnp.float32)
    h = jnp.maximum(h + b1_ref[...], 0.0)
    # fc2 + ReLU
    h = jnp.dot(h.astype(jnp.bfloat16), w2_ref[...],
                preferred_element_type=jnp.float32)
    h = jnp.maximum(h + b2_ref[...], 0.0)
    # fc3 + ReLU
    h = jnp.dot(h.astype(jnp.bfloat16), w3_ref[...],
                preferred_element_type=jnp.float32)
    h = jnp.maximum(h + b3_ref[...], 0.0)
    # Output layer (64 -> 1), evaluated transposed so the per-row scalar lands
    # lane-dense: w4 (1, 64) contracted against h (tm, 64) on dim 1 -> (1, tm).
    z = jax.lax.dot_general(
        w4_ref[...], h.astype(jnp.bfloat16),
        dimension_numbers=(((1,), (1,)), ((), ())),
        preferred_element_type=jnp.float32)              # (1, tm)
    z = z + b4_ref[...]                                   # (1, 1) broadcasts
    # Numerically stable sigmoid (no overflow for very negative logits).
    e = jnp.exp(-jnp.abs(z))
    sig = jnp.where(z >= 0.0, 1.0 / (1.0 + e), e / (1.0 + e))
    o_ref[...] = sig[None].astype(o_ref.dtype)            # (1, 1, tm) slab


def _pick_tile(B):
    """Batch tile size: >= 2 grid steps when possible (v7x 2-TC sharding),
    capped at 512 rows so tiles fit well inside v7x's 64 MiB per-core VMEM."""
    if B < 16 or B % 8 != 0:
        return B                      # single full-batch block
    tm = max(8, min(512, (B // 2) // 8 * 8))
    while B % tm:
        tm -= 8
    return tm


def simple_mlp(x, params, *, tm=None):
    B, F = x.shape
    (w1, b1), (w2, b2), (w3, b3), (w4, b4) = params

    if tm is None:
        tm = _pick_tile(B)
    assert B % tm == 0, "batch must be divisible by the tile size tm"
    assert tm == B or tm % 8 == 0, "tm must be a multiple of 8 (sublane tiling)"
    num_tiles = B // tm
    grid = (num_tiles,)

    # bf16 weight stream: halves HBM bytes for the dominant (weight) traffic.
    # Biases are tiny and stay f32.
    w1, w2, w3, w4 = (w.astype(jnp.bfloat16) for w in (w1, w2, w3, w4))

    def resident(shape):
        # Entire weight/bias resident in VMEM; same block for every grid step,
        # so it is DMA'd once and revisited thereafter.
        return pl.BlockSpec(shape, lambda i, _n=len(shape): (0,) * _n)

    out = pl.pallas_call(
        mlp_kernel,
        # Lane-dense output slab: (num_tiles, 1, tm); reshaped to (B, 1) below.
        out_shape=jax.ShapeDtypeStruct((num_tiles, 1, tm), jnp.float32),
        grid_spec=pltpu.PrefetchScalarGridSpec(
            num_scalar_prefetch=0,
            grid=grid,
            in_specs=[
                pl.BlockSpec((tm, F), lambda i: (i, 0)),
                resident(w1.shape), resident(b1.shape),
                resident(w2.shape), resident(b2.shape),
                resident(w3.shape), resident(b3.shape),
                resident(w4.shape), resident(b4.shape),
            ],
            out_specs=pl.BlockSpec((1, 1, tm), lambda i: (i, 0, 0)),
        ),
        compiler_params=pltpu.CompilerParams(
            dimension_semantics=("parallel",),
            # tm=512 footprint: ~5 MiB double-buffered x blocks + ~6.4 MiB
            # (double-buffered) bf16 weights + a few MiB of activations.
            vmem_limit_bytes=32 << 20,
        ),
    )(x, w1, b1, w2, b2, w3, b3, w4, b4)

    # (num_tiles, 1, tm) row-major == batch order; metadata-only reshape.
    return out.reshape(B, 1)


def init_params(key):
    """Deterministic synthetic parameters matching the PyTorch module shapes.

    fc1..fc3 weights are stored [in, out] (transpose of PyTorch's [out, in]) so
    the kernel computes x @ W + b. The output layer stays in PyTorch [1, 64]
    orientation because the kernel contracts it against h on dim 1.
    Biases are [1, out] rows for lane-friendly broadcasting.
    """
    dims = [(1280, 1024), (1024, 256), (256, 64), (64, 1)]
    params = []
    for fan_in, fan_out in dims:
        key, kw, kb = jax.random.split(key, 3)
        bound = 1.0 / jnp.sqrt(fan_in)  # PyTorch default init range
        if fan_out == 1:
            w = jax.random.uniform(kw, (fan_out, fan_in), jnp.float32, -bound, bound)
        else:
            w = jax.random.uniform(kw, (fan_in, fan_out), jnp.float32, -bound, bound)
        b = jax.random.uniform(kb, (1, fan_out), jnp.float32, -bound, bound)
        params.append((w, b))
    return params


def reference_mlp(x, params):
    """Pure-JAX reference mirroring the kernel's quantization exactly:
    bf16 weights AND bf16 matmul activations, f32 accumulation/elementwise.
    (Relative to the fp32 PyTorch module this is a deliberate bf16-MXU choice.)
    """
    (w1, b1), (w2, b2), (w3, b3), (w4, b4) = params
    bf = lambda a: a.astype(jnp.bfloat16)
    f32 = jnp.float32
    h = jnp.maximum(jnp.dot(bf(x), bf(w1), preferred_element_type=f32) + b1, 0.0)
    h = jnp.maximum(jnp.dot(bf(h), bf(w2), preferred_element_type=f32) + b2, 0.0)
    h = jnp.maximum(jnp.dot(bf(h), bf(w3), preferred_element_type=f32) + b3, 0.0)
    z = jax.lax.dot_general(bf(h), bf(w4),
                            dimension_numbers=(((1,), (1,)), ((), ())),
                            preferred_element_type=f32) + b4
    return jax.nn.sigmoid(z)


if __name__ == "__main__":
    key = jax.random.PRNGKey(0)
    key, kx = jax.random.split(key)
    B = 8
    x = jax.random.normal(kx, (B, 1280), jnp.float32)

    params = init_params(key)

    out = simple_mlp(x, params)
    out = jax.block_until_ready(out)

    ref = reference_mlp(x, params)
    assert out.shape == (B, 1)
    assert jnp.allclose(out, ref, atol=2e-3, rtol=2e-3), \
        float(jnp.max(jnp.abs(out - ref)))

    print("KERNEL_OK")
</pallas_src>

<mosaic_0001>
module attributes {stable_mosaic.version = 11 : i64} {
  func.func @mlp_kernel(%arg0: i32, %arg1: memref<8x1280xf32, #tpu.memory_space<vmem>>, %arg2: memref<1280x1024xbf16, #tpu.memory_space<vmem>>, %arg3: memref<1x1024xf32, #tpu.memory_space<vmem>>, %arg4: memref<1024x256xbf16, #tpu.memory_space<vmem>>, %arg5: memref<1x256xf32, #tpu.memory_space<vmem>>, %arg6: memref<256x64xbf16, #tpu.memory_space<vmem>>, %arg7: memref<1x64xf32, #tpu.memory_space<vmem>>, %arg8: memref<1x64xbf16, #tpu.memory_space<vmem>>, %arg9: memref<1x1xf32, #tpu.memory_space<vmem>>, %arg10: memref<1x1x8xf32, #tpu.memory_space<vmem>>) attributes {dimension_semantics = [#tpu.dimension_semantics<parallel>], iteration_bounds = array<i64: 1>, scalar_prefetch = 0 : i64, scratch_operands = 0 : i64, tpu.core_type = #tpu.core_type<tc>, window_params = [{transform_indices = @transform_0, window_bounds = array<i64: 8, 1280>}, {pipeline_mode = #tpu.pipeline_mode<synchronous>, transform_indices = @transform_1, window_bounds = array<i64: 1280, 1024>}, {pipeline_mode = #tpu.pipeline_mode<synchronous>, transform_indices = @transform_2, window_bounds = array<i64: 1, 1024>}, {pipeline_mode = #tpu.pipeline_mode<synchronous>, transform_indices = @transform_3, window_bounds = array<i64: 1024, 256>}, {pipeline_mode = #tpu.pipeline_mode<synchronous>, transform_indices = @transform_4, window_bounds = array<i64: 1, 256>}, {pipeline_mode = #tpu.pipeline_mode<synchronous>, transform_indices = @transform_5, window_bounds = array<i64: 256, 64>}, {pipeline_mode = #tpu.pipeline_mode<synchronous>, transform_indices = @transform_6, window_bounds = array<i64: 1, 64>}, {pipeline_mode = #tpu.pipeline_mode<synchronous>, transform_indices = @transform_7, window_bounds = array<i64: 1, 64>}, {pipeline_mode = #tpu.pipeline_mode<synchronous>, transform_indices = @transform_8, window_bounds = array<i64: 1, 1>}, {transform_indices = @transform_9, window_bounds = array<i64: 1, 1, 8>}]} {
    %c0 = arith.constant 0 : index
    %c0_0 = arith.constant 0 : index
    %0 = vector.load %arg1[%c0, %c0_0] : memref<8x1280xf32, #tpu.memory_space<vmem>>, vector<8x1280xf32>
    %1 = arith.truncf %0 : vector<8x1280xf32> to vector<8x1280xbf16>
    %c0_1 = arith.constant 0 : index
    %c0_2 = arith.constant 0 : index
    %2 = vector.load %arg2[%c0_1, %c0_2] : memref<1280x1024xbf16, #tpu.memory_space<vmem>>, vector<1280x1024xbf16>
    %cst = arith.constant dense<0.000000e+00> : vector<8x1024xf32>
    %3 = tpu.matmul %1, %2, %cst {dimension_numbers = #tpu.dot_dimension_numbers<[1], [0], [0], [1], [0, 0, 1, 1], [], []>} : vector<8x1280xbf16>, vector<1280x1024xbf16>, vector<8x1024xf32> -> vector<8x1024xf32>
    %c0_3 = arith.constant 0 : index
    %c0_4 = arith.constant 0 : index
    %4 = vector.load %arg3[%c0_3, %c0_4] : memref<1x1024xf32, #tpu.memory_space<vmem>>, vector<1x1024xf32>
    %5 = vector.broadcast %4 : vector<1x1024xf32> to vector<8x1024xf32>
    %6 = arith.addf %3, %5 : vector<8x1024xf32>
    %cst_5 = arith.constant 0.000000e+00 : f32
    %7 = vector.broadcast %cst_5 : f32 to vector<8x1024xf32>
    %8 = arith.maximumf %6, %7 : vector<8x1024xf32>
    %9 = arith.truncf %8 : vector<8x1024xf32> to vector<8x1024xbf16>
    %c0_6 = arith.constant 0 : index
    %c0_7 = arith.constant 0 : index
    %10 = vector.load %arg4[%c0_6, %c0_7] : memref<1024x256xbf16, #tpu.memory_space<vmem>>, vector<1024x256xbf16>
    %cst_8 = arith.constant dense<0.000000e+00> : vector<8x256xf32>
    %11 = tpu.matmul %9, %10, %cst_8 {dimension_numbers = #tpu.dot_dimension_numbers<[1], [0], [0], [1], [0, 0, 1, 1], [], []>} : vector<8x1024xbf16>, vector<1024x256xbf16>, vector<8x256xf32> -> vector<8x256xf32>
    %c0_9 = arith.constant 0 : index
    %c0_10 = arith.constant 0 : index
    %12 = vector.load %arg5[%c0_9, %c0_10] : memref<1x256xf32, #tpu.memory_space<vmem>>, vector<1x256xf32>
    %13 = vector.broadcast %12 : vector<1x256xf32> to vector<8x256xf32>
    %14 = arith.addf %11, %13 : vector<8x256xf32>
    %cst_11 = arith.constant 0.000000e+00 : f32
    %15 = vector.broadcast %cst_11 : f32 to vector<8x256xf32>
    %16 = arith.maximumf %14, %15 : vector<8x256xf32>
    %17 = arith.truncf %16 : vector<8x256xf32> to vector<8x256xbf16>
    %c0_12 = arith.constant 0 : index
    %c0_13 = arith.constant 0 : index
    %18 = vector.load %arg6[%c0_12, %c0_13] : memref<256x64xbf16, #tpu.memory_space<vmem>>, vector<256x64xbf16>
    %cst_14 = arith.constant dense<0.000000e+00> : vector<8x64xf32>
    %19 = tpu.matmul %17, %18, %cst_14 {dimension_numbers = #tpu.dot_dimension_numbers<[1], [0], [0], [1], [0, 0, 1, 1], [], []>} : vector<8x256xbf16>, vector<256x64xbf16>, vector<8x64xf32> -> vector<8x64xf32>
    %c0_15 = arith.constant 0 : index
    %c0_16 = arith.constant 0 : index
    %20 = vector.load %arg7[%c0_15, %c0_16] : memref<1x64xf32, #tpu.memory_space<vmem>>, vector<1x64xf32>
    %21 = vector.broadcast %20 : vector<1x64xf32> to vector<8x64xf32>
    %22 = arith.addf %19, %21 : vector<8x64xf32>
    %cst_17 = arith.constant 0.000000e+00 : f32
    %23 = vector.broadcast %cst_17 : f32 to vector<8x64xf32>
    %24 = arith.maximumf %22, %23 : vector<8x64xf32>
    %c0_18 = arith.constant 0 : index
    %c0_19 = arith.constant 0 : index
    %25 = vector.load %arg8[%c0_18, %c0_19] : memref<1x64xbf16, #tpu.memory_space<vmem>>, vector<1x64xbf16>
    %26 = arith.truncf %24 : vector<8x64xf32> to vector<8x64xbf16>
    %cst_20 = arith.constant dense<0.000000e+00> : vector<1x8xf32>
    %27 = tpu.matmul %25, %26, %cst_20 {dimension_numbers = #tpu.dot_dimension_numbers<[1], [1], [0], [0], [0, 0, 1, 0], [], []>} : vector<1x64xbf16>, vector<8x64xbf16>, vector<1x8xf32> -> vector<1x8xf32>
    %c0_21 = arith.constant 0 : index
    %c0_22 = arith.constant 0 : index
    %28 = vector.load %arg9[%c0_21, %c0_22] : memref<1x1xf32, #tpu.memory_space<vmem>>, vector<1x1xf32>
    %29 = vector.broadcast %28 : vector<1x1xf32> to vector<1x8xf32>
    %30 = arith.addf %27, %29 : vector<1x8xf32>
    %31 = math.absf %30 : vector<1x8xf32>
    %cst_23 = arith.constant 0.000000e+00 : f32
    %32 = vector.broadcast %cst_23 : f32 to vector<1x8xf32>
    %33 = arith.subf %32, %31 : vector<1x8xf32>
    %34 = math.exp %33 : vector<1x8xf32>
    %cst_24 = arith.constant 0.000000e+00 : f32
    %35 = vector.broadcast %cst_24 : f32 to vector<1x8xf32>
    %36 = arith.cmpf oge, %30, %35 : vector<1x8xf32>
    %cst_25 = arith.constant 1.000000e+00 : f32
    %37 = vector.broadcast %cst_25 : f32 to vector<1x8xf32>
    %38 = arith.addf %37, %34 : vector<1x8xf32>
    %cst_26 = arith.constant 1.000000e+00 : f32
    %39 = vector.broadcast %cst_26 : f32 to vector<1x8xf32>
    %40 = arith.divf %39, %38 : vector<1x8xf32>
    %cst_27 = arith.constant 1.000000e+00 : f32
    %41 = vector.broadcast %cst_27 : f32 to vector<1x8xf32>
    %42 = arith.addf %41, %34 : vector<1x8xf32>
    %43 = arith.divf %34, %42 : vector<1x8xf32>
    %44 = arith.select %36, %40, %43 : vector<1x8xi1>, vector<1x8xf32>
    %45 = vector.shape_cast %44 : vector<1x8xf32> to vector<1x1x8xf32>
    %c0_28 = arith.constant 0 : index
    %c0_29 = arith.constant 0 : index
    %c0_30 = arith.constant 0 : index
    %46 = vector.load %arg10[%c0_28, %c0_29, %c0_30] : memref<1x1x8xf32, #tpu.memory_space<vmem>>, vector<1x1x8xf32>
    tpu.vector_store %arg10[%c0_28, %c0_29, %c0_30], %45 {strides = array<i32>} : memref<1x1x8xf32, #tpu.memory_space<vmem>>, vector<1x1x8xf32>,
    return
  }
  func.func @transform_0(%arg0: i32) -> (i32, i32) {
    %c0_i32 = arith.constant 0 : i32
    %c0_i32_0 = arith.constant 0 : i32
    return %arg0, %c0_i32 : i32, i32
  }
  func.func @transform_1(%arg0: i32) -> (i32, i32) {
    %c0_i32 = arith.constant 0 : i32
    %c0_i32_0 = arith.constant 0 : i32
    %c0_i32_1 = arith.constant 0 : i32
    return %c0_i32, %c0_i32_0 : i32, i32
  }
  func.func @transform_2(%arg0: i32) -> (i32, i32) {
    %c0_i32 = arith.constant 0 : i32
    %c0_i32_0 = arith.constant 0 : i32
    %c0_i32_1 = arith.constant 0 : i32
    return %c0_i32, %c0_i32_0 : i32, i32
  }
  func.func @transform_3(%arg0: i32) -> (i32, i32) {
    %c0_i32 = arith.constant 0 : i32
    %c0_i32_0 = arith.constant 0 : i32
    %c0_i32_1 = arith.constant 0 : i32
    return %c0_i32, %c0_i32_0 : i32, i32
  }
  func.func @transform_4(%arg0: i32) -> (i32, i32) {
    %c0_i32 = arith.constant 0 : i32
    %c0_i32_0 = arith.constant 0 : i32
    %c0_i32_1 = arith.constant 0 : i32
    return %c0_i32, %c0_i32_0 : i32, i32
  }
  func.func @transform_5(%arg0: i32) -> (i32, i32) {
    %c0_i32 = arith.constant 0 : i32
    %c0_i32_0 = arith.constant 0 : i32
    %c0_i32_1 = arith.constant 0 : i32
    return %c0_i32, %c0_i32_0 : i32, i32
  }
  func.func @transform_6(%arg0: i32) -> (i32, i32) {
    %c0_i32 = arith.constant 0 : i32
    %c0_i32_0 = arith.constant 0 : i32
    %c0_i32_1 = arith.constant 0 : i32
    return %c0_i32, %c0_i32_0 : i32, i32
  }
  func.func @transform_7(%arg0: i32) -> (i32, i32) {
    %c0_i32 = arith.constant 0 : i32
    %c0_i32_0 = arith.constant 0 : i32
    %c0_i32_1 = arith.constant 0 : i32
    return %c0_i32, %c0_i32_0 : i32, i32
  }
  func.func @transform_8(%arg0: i32) -> (i32, i32) {
    %c0_i32 = arith.constant 0 : i32
    %c0_i32_0 = arith.constant 0 : i32
    %c0_i32_1 = arith.constant 0 : i32
    return %c0_i32, %c0_i32_0 : i32, i32
  }
  func.func @transform_9(%arg0: i32) -> (i32, i32, i32) {
    %c0_i32 = arith.constant 0 : i32
    %c0_i32_0 = arith.constant 0 : i32
    %c0_i32_1 = arith.constant 0 : i32
    return %arg0, %c0_i32, %c0_i32_0 : i32, i32, i32
  }
}

</mosaic_0001>

<llo_original>
// kernel: tpu_custom_call.1
$region0: #{tpu_custom_call.1}
  #allocation0 [shape = 'u32[]', space=smem, size = 0x4, offset = 0x4, fixed_abs, tag = 'smem constant byte address 0x4 - core index']
  #allocation1 [shape = 'u32[144,128]{1,0:T(1,128)}', space=vmem, size = 0x12000, scoped, tag = 'internal scratch']
  #allocation2 [shape = 'f32[1,1]{1,0:T(1,128)S(1)}', space=vmem, size = 0x200, scoped, tag = 'scoped memory for tpu_custom_call.1']
  %s0 = inlined_call_operand.hbm [shape: f32[8,1280], index: 0, kind: input, shape index: {}]
  %s1 = inlined_call_operand.hbm [shape: bf16[1280,1024], index: 1, kind: input, shape index: {}]
  %s2 = inlined_call_operand.hbm [shape: f32[1,1024], index: 2, kind: input, shape index: {}]
  %s3 = inlined_call_operand.hbm [shape: bf16[1024,256], index: 3, kind: input, shape index: {}]
  %s4 = inlined_call_operand.hbm [shape: f32[1,256], index: 4, kind: input, shape index: {}]
  %s5 = inlined_call_operand.vmem [shape: bf16[256,64], index: 5, kind: input, shape index: {}]
  %s6 = inlined_call_operand.hbm [shape: f32[1,64], index: 6, kind: input, shape index: {}]
  %s7 = inlined_call_operand.hbm [shape: bf16[1,64], index: 7, kind: input, shape index: {}]
  %s8 = inlined_call_operand.<no memory space> [shape: f32[1,1], index: 8, kind: input, shape index: {}]
  %s9 = inlined_call_operand.hbm [shape: f32[1,1,8], index: 9, kind: output, shape index: {}]
  %s10 = sld [smem:[#allocation0]]
  $region74: #{tpu_custom_call.1} parent=0
    _
  %s12 = ssub.s32 1, %s10
  %s13 = scalar_select 0, %s12, %s10
  %v14 = vstv %s8
  %15 = vst [vmem:[#allocation2] sm:$0x1] %v14
  $region1: #{tpu_custom_call.1} parent=0
    #allocation3 [shape = 'u8[40960]{0}', space=vmem, size = 0xa000, scoped, tag = 'input window, operand 0, single buffered']
    #allocation4 [shape = 's32[1]{0}', space=sflag, size = 0x4, scoped, tag = 'scoped memory for tpu_custom_call.1']
    #allocation5 [shape = 's32[1]{0}', space=sflag, size = 0x4, scoped, tag = 'scoped memory for tpu_custom_call.1']
    #allocation6 [shape = 'u8[2621440]{0}', space=vmem, size = 0x280000, scoped, tag = 'input window, operand 1, single buffered']
    #allocation7 [shape = 's32[1]{0}', space=sflag, size = 0x4, scoped, tag = 'scoped memory for tpu_custom_call.1']
    #allocation8 [shape = 'u8[4096]{0}', space=vmem, size = 0x1000, scoped, tag = 'input window, operand 2, single buffered']
    #allocation9 [shape = 'u8[524288]{0}', space=vmem, size = 0x80000, scoped, tag = 'input window, operand 3, single buffered']
    #allocation10 [shape = 's32[1]{0}', space=sflag, size = 0x4, scoped, tag = 'scoped memory for tpu_custom_call.1']
    #allocation11 [shape = 'u8[1024]{0}', space=vmem, size = 0x400, scoped, tag = 'input window, operand 4, single buffered']
    #allocation12 [shape = 'u8[512]{0}', space=vmem, size = 0x400, scoped, tag = 'input window, operand 6, single buffered']
    #allocation13 [shape = 's32[1]{0}', space=sflag, size = 0x4, scoped, tag = 'scoped memory for tpu_custom_call.1']
    #allocation14 [shape = 'u8[512]{0}', space=vmem, size = 0x400, scoped, tag = 'input window, operand 7, single buffered']
    #allocation15 [shape = 'u8[512]{0}', space=vmem, size = 0x400, scoped, tag = 'output window, operand 0, single buffered']
    %16 = vsyncpa [#allocation4], 0
    %17 = vsyncpa [#allocation7], 0
    %18 = vsyncpa [#allocation10], 0
    %19 = vsyncpa [#allocation13], 0
    %20 = vsyncpa [#allocation5], 0
    // Predicated region
    $region2: #{tpu_custom_call.1} parent=1 // pred_check
      _
    $region3: #{tpu_custom_call.1} parent=1 // pred_check_branch
      %22 = sbr.rel (0) target = $region5
    $region4: #{tpu_custom_call.1} parent=1 // pred_region
      %s24 = ssub.s32 1280, 1280
      %25 = vsyncadd [#allocation4], %s24
      %s27 = sshll.u32 [#allocation3], 4
      %s28 = int_to_ptr.vmem [resolvable:$true] %s27
      %30 = dma.hbm_to_vmem [thread:$0]  %s0, 1280, %s28, [#allocation4]
    $region5: #{tpu_custom_call.1} parent=1 // pred_fallthru
      _
    // Predicated region
    $region6: #{tpu_custom_call.1} parent=1 // pred_check
      _
    $region7: #{tpu_custom_call.1} parent=1 // pred_check_branch
      %32 = sbr.rel (0) target = $region9
    $region8: #{tpu_custom_call.1} parent=1 // pred_region
      %s34 = ssub.s32 81920, 81920
      %35 = vsyncadd [#allocation7], %s34
      %s36 = sshll.u32 [#allocation6], 4
      %s37 = int_to_ptr.vmem [resolvable:$true] %s36
      %42 = dma.hbm_to_vmem [thread:$0]  %s1, 81920, %s37, [#allocation7], 512, 512, 32
    $region9: #{tpu_custom_call.1} parent=1 // pred_fallthru
      _
    // Predicated region
    $region10: #{tpu_custom_call.1} parent=1 // pred_check
      _
    $region11: #{tpu_custom_call.1} parent=1 // pred_check_branch
      %44 = sbr.rel (0) target = $region13
    $region12: #{tpu_custom_call.1} parent=1 // pred_region
      %s46 = ssub.s32 128, 128
      %47 = vsyncadd [#allocation7], %s46
      %s49 = sshll.u32 [#allocation8], 4
      %s50 = int_to_ptr.vmem [resolvable:$true] %s49
      %52 = dma.hbm_to_vmem [thread:$0]  %s2, 128, %s50, [#allocation7]
    $region13: #{tpu_custom_call.1} parent=1 // pred_fallthru
      _
    // Predicated region
    $region14: #{tpu_custom_call.1} parent=1 // pred_check
      _
    $region15: #{tpu_custom_call.1} parent=1 // pred_check_branch
      %54 = sbr.rel (0) target = $region17
    $region16: #{tpu_custom_call.1} parent=1 // pred_region
      %s56 = ssub.s32 16384, 16384
      %57 = vsyncadd [#allocation10], %s56
      %s58 = sshll.u32 [#allocation9], 4
      %s59 = int_to_ptr.vmem [resolvable:$true] %s58
      %64 = dma.hbm_to_vmem [thread:$0]  %s3, 16384, %s59, [#allocation10], 128, 128, 8
    $region17: #{tpu_custom_call.1} parent=1 // pred_fallthru
      _
    // Predicated region
    $region18: #{tpu_custom_call.1} parent=1 // pred_check
      _
    $region19: #{tpu_custom_call.1} parent=1 // pred_check_branch
      %66 = sbr.rel (0) target = $region21
    $region20: #{tpu_custom_call.1} parent=1 // pred_region
      %s68 = ssub.s32 32, 32
      %69 = vsyncadd [#allocation10], %s68
      %s71 = sshll.u32 [#allocation11], 4
      %s72 = int_to_ptr.vmem [resolvable:$true] %s71
      %74 = dma.hbm_to_vmem [thread:$0]  %s4, 32, %s72, [#allocation10]
    $region21: #{tpu_custom_call.1} parent=1 // pred_fallthru
      _
    // Predicated region
    $region22: #{tpu_custom_call.1} parent=1 // pred_check
      _
    $region23: #{tpu_custom_call.1} parent=1 // pred_check_branch
      %76 = sbr.rel (0) target = $region25
    $region24: #{tpu_custom_call.1} parent=1 // pred_region
      _
    $region25: #{tpu_custom_call.1} parent=1 // pred_fallthru
      _
    // Predicated region
    $region26: #{tpu_custom_call.1} parent=1 // pred_check
      _
    $region27: #{tpu_custom_call.1} parent=1 // pred_check_branch
      %78 = sbr.rel (0) target = $region29
    $region28: #{tpu_custom_call.1} parent=1 // pred_region
      %s80 = ssub.s32 16, 16
      %81 = vsyncadd [#allocation13], %s80
      %s83 = sshll.u32 [#allocation12], 4
      %s84 = int_to_ptr.vmem [resolvable:$true] %s83
      %86 = dma.hbm_to_vmem [thread:$0]  %s6, 16, %s84, [#allocation13]
    $region29: #{tpu_custom_call.1} parent=1 // pred_fallthru
      _
    // Predicated region
    $region30: #{tpu_custom_call.1} parent=1 // pred_check
      _
    $region31: #{tpu_custom_call.1} parent=1 // pred_check_branch
      %88 = sbr.rel (0) target = $region33
    $region32: #{tpu_custom_call.1} parent=1 // pred_region
      %s90 = ssub.s32 16, 16
      %91 = vsyncadd [#allocation13], %s90
      %s93 = sshll.u32 [#allocation14], 4
      %s94 = int_to_ptr.vmem [resolvable:$true] %s93
      %96 = dma.hbm_to_vmem [thread:$0]  %s7, 16, %s94, [#allocation13]
    $region33: #{tpu_custom_call.1} parent=1 // pred_fallthru
      _
    // Predicated region
    $region34: #{tpu_custom_call.1} parent=1 // pred_check
      _
    $region35: #{tpu_custom_call.1} parent=1 // pred_check_branch
      %98 = sbr.rel (0) target = $region37
    $region36: #{tpu_custom_call.1} parent=1 // pred_region
      _
    $region37: #{tpu_custom_call.1} parent=1 // pred_fallthru
      _
    // Predicated region
    $region38: #{tpu_custom_call.1} parent=1 // pred_check
      _
    $region39: #{tpu_custom_call.1} parent=1 // pred_check_branch
      %100 = sbr.rel (0) target = $region41
    $region40: #{tpu_custom_call.1} parent=1 // pred_region
      %101 = dma.done [#allocation4], 1280
    $region41: #{tpu_custom_call.1} parent=1 // pred_fallthru
      _
    // Predicated region
    $region42: #{tpu_custom_call.1} parent=1 // pred_check
      _
    $region43: #{tpu_custom_call.1} parent=1 // pred_check_branch
      %103 = sbr.rel (0) target = $region45
    $region44: #{tpu_custom_call.1} parent=1 // pred_region
      %104 = dma.done [#allocation7], 81920
    $region45: #{tpu_custom_call.1} parent=1 // pred_fallthru
      _
    // Predicated region
    $region46: #{tpu_custom_call.1} parent=1 // pred_check
      _
    $region47: #{tpu_custom_call.1} parent=1 // pred_check_branch
      %106 = sbr.rel (0) target = $region49
    $region48: #{tpu_custom_call.1} parent=1 // pred_region
      %107 = dma.done [#allocation7], 128
    $region49: #{tpu_custom_call.1} parent=1 // pred_fallthru
      _
    // Predicated region
    $region50: #{tpu_custom_call.1} parent=1 // pred_check
      _
    $region51: #{tpu_custom_call.1} parent=1 // pred_check_branch
      %109 = sbr.rel (0) target = $region53
    $region52: #{tpu_custom_call.1} parent=1 // pred_region
      %110 = dma.done [#allocation10], 16384
    $region53: #{tpu_custom_call.1} parent=1 // pred_fallthru
      _
    // Predicated region
    $region54: #{tpu_custom_call.1} parent=1 // pred_check
      _
    $region55: #{tpu_custom_call.1} parent=1 // pred_check_branch
      %112 = sbr.rel (0) target = $region57
    $region56: #{tpu_custom_call.1} parent=1 // pred_region
      %113 = dma.done [#allocation10], 32
    $region57: #{tpu_custom_call.1} parent=1 // pred_fallthru
      _
    // Predicated region
    $region58: #{tpu_custom_call.1} parent=1 // pred_check
      _
    $region59: #{tpu_custom_call.1} parent=1 // pred_check_branch
      %115 = sbr.rel (0) target = $region61
    $region60: #{tpu_custom_call.1} parent=1 // pred_region
      %116 = dma.done [#allocation13], 16
    $region61: #{tpu_custom_call.1} parent=1 // pred_fallthru
      _
    // Predicated region
    $region62: #{tpu_custom_call.1} parent=1 // pred_check
      _
    $region63: #{tpu_custom_call.1} parent=1 // pred_check_branch
      %118 = sbr.rel (0) target = $region65
    $region64: #{tpu_custom_call.1} parent=1 // pred_region
      %119 = dma.done [#allocation13], 16
    $region65: #{tpu_custom_call.1} parent=1 // pred_fallthru
      _
    %v121 = vld [vmem:[#allocation3] sm:$0xff]
    %v122 = vld [vmem:[#allocation3 + $0x8] sm:$0xff]
    %v123 = vld [vmem:[#allocation3 + $0x10] sm:$0xff]
    %v124 = vld [vmem:[#allocation3 + $0x18] sm:$0xff]
    %v125 = vld [vmem:[#allocation3 + $0x20] sm:$0xff]
    %v126 = vld [vmem:[#allocation3 + $0x28] sm:$0xff]
    %v127 = vld [vmem:[#allocation3 + $0x30] sm:$0xff]
    %v128 = vld [vmem:[#allocation3 + $0x38] sm:$0xff]
    %v129 = vld [vmem:[#allocation3 + $0x40] sm:$0xff]
    %v130 = vld [vmem:[#allocation3 + $0x48] sm:$0xff]
    %v131 = vpack.c.bf16 %v121, %v121
    %v132 = vpack.c.bf16 %v122, %v122
    %v133 = vpack.c.bf16 %v123, %v123
    %v134 = vpack.c.bf16 %v124, %v124
    %v135 = vpack.c.bf16 %v125, %v125
    %v136 = vpack.c.bf16 %v126, %v126
    %v137 = vpack.c.bf16 %v127, %v127
    %v138 = vpack.c.bf16 %v128, %v128
    %v139 = vpack.c.bf16 %v129, %v129
    %v140 = vpack.c.bf16 %v130, %v130
    %v141 = vld [vmem:[#allocation6] sm:$0xff]
    %v142 = vld [vmem:[#allocation6 + $0x8] sm:$0xff]
    %v143 = vld [vmem:[#allocation6 + $0x10] sm:$0xff]
    %v144 = vld [vmem:[#allocation6 + $0x18] sm:$0xff]
    %v145 = vld [vmem:[#allocation6 + $0x20] sm:$0xff]
    %v146 = vld [vmem:[#allocation6 + $0x28] sm:$0xff]
    %v147 = vld [vmem:[#allocation6 + $0x30] sm:$0xff]
    %v148 = vld [vmem:[#allocation6 + $0x38] sm:$0xff]
    %v149 = vld [vmem:[#allocation6 + $0x40] sm:$0xff]
    %v150 = vld [vmem:[#allocation6 + $0x48] sm:$0xff]
    %v151 = vld [vmem:[#allocation6 + $0x50] sm:$0xff]
    %v152 = vld [vmem:[#allocation6 + $0x58] sm:$0xff]
    %v153 = vld [vmem:[#allocation6 + $0x60] sm:$0xff]
    %v154 = vld [vmem:[#allocation6 + $0x68] sm:$0xff]
    %v155 = vld [vmem:[#allocation6 + $0x70] sm:$0xff]
    %v156 = vld [vmem:[#allocation6 + $0x78] sm:$0xff]
    %v157 = vld [vmem:[#allocation6 + $0x80] sm:$0xff]
    %v158 = vld [vmem:[#allocation6 + $0x88] sm:$0xff]
    %v159 = vld [vmem:[#allocation6 + $0x90] sm:$0xff]
    %v160 = vld [vmem:[#allocation6 + $0x98] sm:$0xff]
    %v161 = vld [vmem:[#allocation6 + $0xa0] sm:$0xff]
    %v162 = vld [vmem:[#allocation6 + $0xa8] sm:$0xff]
    %v163 = vld [vmem:[#allocation6 + $0xb0] sm:$0xff]
    %v164 = vld [vmem:[#allocation6 + $0xb8] sm:$0xff]
    %v165 = vld [vmem:[#allocation6 + $0xc0] sm:$0xff]
    %v166 = vld [vmem:[#allocation6 + $0xc8] sm:$0xff]
    %v167 = vld [vmem:[#allocation6 + $0xd0] sm:$0xff]
    %v168 = vld [vmem:[#allocation6 + $0xd8] sm:$0xff]
    %v169 = vld [vmem:[#allocation6 + $0xe0] sm:$0xff]
    %v170 = vld [vmem:[#allocation6 + $0xe8] sm:$0xff]
    %v171 = vld [vmem:[#allocation6 + $0xf0] sm:$0xff]
    %v172 = vld [vmem:[#allocation6 + $0xf8] sm:$0xff]
    %v173 = vld [vmem:[#allocation6 + $0x100] sm:$0xff]
    %v174 = vld [vmem:[#allocation6 + $0x108] sm:$0xff]
    %v175 = vld [vmem:[#allocation6 + $0x110] sm:$0xff]
    %v176 = vld [vmem:[#allocation6 + $0x118] sm:$0xff]
    %v177 = vld [vmem:[#allocation6 + $0x120] sm:$0xff]
    %v178 = vld [vmem:[#allocation6 + $0x128] sm:$0xff]
    %v179 = vld [vmem:[#allocation6 + $0x130] sm:$0xff]
    %v180 = vld [vmem:[#allocation6 + $0x138] sm:$0xff]
    %v181 = vld [vmem:[#allocation6 + $0x140] sm:$0xff]
    %v182 = vld [vmem:[#allocation6 + $0x148] sm:$0xff]
    %v183 = vld [vmem:[#allocation6 + $0x150] sm:$0xff]
    %v184 = vld [vmem:[#allocation6 + $0x158] sm:$0xff]
    %v185 = vld [vmem:[#allocation6 + $0x160] sm:$0xff]
    %v186 = vld [vmem:[#allocation6 + $0x168] sm:$0xff]
    %v187 = vld [vmem:[#allocation6 + $0x170] sm:$0xff]
    %v188 = vld [vmem:[#allocation6 + $0x178] sm:$0xff]
    %v189 = vld [vmem:[#allocation6 + $0x180] sm:$0xff]
    %v190 = vld [vmem:[#allocation6 + $0x188] sm:$0xff]
    %v191 = vld [vmem:[#allocation6 + $0x190] sm:$0xff]
    %v192 = vld [vmem:[#allocation6 + $0x198] sm:$0xff]
    %v193 = vld [vmem:[#allocation6 + $0x1a0] sm:$0xff]
    %v194 = vld [vmem:[#allocation6 + $0x1a8] sm:$0xff]
    %v195 = vld [vmem:[#allocation6 + $0x1b0] sm:$0xff]
    %v196 = vld [vmem:[#allocation6 + $0x1b8] sm:$0xff]
    %v197 = vld [vmem:[#allocation6 + $0x1c0] sm:$0xff]
    %v198 = vld [vmem:[#allocation6 + $0x1c8] sm:$0xff]
    %v199 = vld [vmem:[#allocation6 + $0x1d0] sm:$0xff]
    %v200 = vld [vmem:[#allocation6 + $0x1d8] sm:$0xff]
    %v201 = vld [vmem:[#allocation6 + $0x1e0] sm:$0xff]
    %v202 = vld [vmem:[#allocation6 + $0x1e8] sm:$0xff]
    %v203 = vld [vmem:[#allocation6 + $0x1f0] sm:$0xff]
    %v204 = vld [vmem:[#allocation6 + $0x1f8] sm:$0xff]
    %v205 = vld [vmem:[#allocation6 + $0x200] sm:$0xff]
    %v206 = vld [vmem:[#allocation6 + $0x208] sm:$0xff]
    %v207 = vld [vmem:[#allocation6 + $0x210] sm:$0xff]
    %v208 = vld [vmem:[#allocation6 + $0x218] sm:$0xff]
    %v209 = vld [vmem:[#allocation6 + $0x220] sm:$0xff]
    %v210 = vld [vmem:[#allocation6 + $0x228] sm:$0xff]
    %v211 = vld [vmem:[#allocation6 + $0x230] sm:$0xff]
    %v212 = vld [vmem:[#allocation6 + $0x238] sm:$0xff]
    %v213 = vld [vmem:[#allocation6 + $0x240] sm:$0xff]
    %v214 = vld [vmem:[#allocation6 + $0x248] sm:$0xff]
    %v215 = vld [vmem:[#allocation6 + $0x250] sm:$0xff]
    %v216 = vld [vmem:[#allocation6 + $0x258] sm:$0xff]
    %v217 = vld [vmem:[#allocation6 + $0x260] sm:$0xff]
    %v218 = vld [vmem:[#allocation6 + $0x268] sm:$0xff]
    %v219 = vld [vmem:[#allocation6 + $0x270] sm:$0xff]
    %v220 = vld [vmem:[#allocation6 + $0x278] sm:$0xff]
    %v221 = vld [vmem:[#allocation6 + $0x280] sm:$0xff]
    %v222 = vld [vmem:[#allocation6 + $0x288] sm:$0xff]
    %v223 = vld [vmem:[#allocation6 + $0x290] sm:$0xff]
    %v224 = vld [vmem:[#allocation6 + $0x298] sm:$0xff]
    %v225 = vld [vmem:[#allocation6 + $0x2a0] sm:$0xff]
    %v226 = vld [vmem:[#allocation6 + $0x2a8] sm:$0xff]
    %v227 = vld [vmem:[#allocation6 + $0x2b0] sm:$0xff]
    %v228 = vld [vmem:[#allocation6 + $0x2b8] sm:$0xff]
    %v229 = vld [vmem:[#allocation6 + $0x2c0] sm:$0xff]
    %v230 = vld [vmem:[#allocation6 + $0x2c8] sm:$0xff]
    %v231 = vld [vmem:[#allocation6 + $0x2d0] sm:$0xff]
    %v232 = vld [vmem:[#allocation6 + $0x2d8] sm:$0xff]
    %v233 = vld [vmem:[#allocation6 + $0x2e0] sm:$0xff]
    %v234 = vld [vmem:[#allocation6 + $0x2e8] sm:$0xff]
    %v235 = vld [vmem:[#allocation6 + $0x2f0] sm:$0xff]
    %v236 = vld [vmem:[#allocation6 + $0x2f8] sm:$0xff]
    %v237 = vld [vmem:[#allocation6 + $0x300] sm:$0xff]
    %v238 = vld [vmem:[#allocation6 + $0x308] sm:$0xff]
    %v239 = vld [vmem:[#allocation6 + $0x310] sm:$0xff]
    %v240 = vld [vmem:[#allocation6 + $0x318] sm:$0xff]
    %v241 = vld [vmem:[#allocation6 + $0x320] sm:$0xff]
    %v242 = vld [vmem:[#allocation6 + $0x328] sm:$0xff]
    %v243 = vld [vmem:[#allocation6 + $0x330] sm:$0xff]
    %v244 = vld [vmem:[#allocation6 + $0x338] sm:$0xff]
    %v245 = vld [vmem:[#allocation6 + $0x340] sm:$0xff]
    %v246 = vld [vmem:[#allocation6 + $0x348] sm:$0xff]
    %v247 = vld [vmem:[#allocation6 + $0x350] sm:$0xff]
    %v248 = vld [vmem:[#allocation6 + $0x358] sm:$0xff]
    %v249 = vld [vmem:[#allocation6 + $0x360] sm:$0xff]
    %v250 = vld [vmem:[#allocation6 + $0x368] sm:$0xff]
    %v251 = vld [vmem:[#allocation6 + $0x370] sm:$0xff]
    %v252 = vld [vmem:[#allocation6 + $0x378] sm:$0xff]
    %v253 = vld [vmem:[#allocation6 + $0x380] sm:$0xff]
    %v254 = vld [vmem:[#allocation6 + $0x388] sm:$0xff]
    %v255 = vld [vmem:[#allocation6 + $0x390] sm:$0xff]
    %v256 = vld [vmem:[#allocation6 + $0x398] sm:$0xff]
    %v257 = vld [vmem:[#allocation6 + $0x3a0] sm:$0xff]
    %v258 = vld [vmem:[#allocation6 + $0x3a8] sm:$0xff]
    %v259 = vld [vmem:[#allocation6 + $0x3b0] sm:$0xff]
    %v260 = vld [vmem:[#allocation6 + $0x3b8] sm:$0xff]
    %v261 = vld [vmem:[#allocation6 + $0x3c0] sm:$0xff]
    %v262 = vld [vmem:[#allocation6 + $0x3c8] sm:$0xff]
    %v263 = vld [vmem:[#allocation6 + $0x3d0] sm:$0xff]
    %v264 = vld [vmem:[#allocation6 + $0x3d8] sm:$0xff]
    %v265 = vld [vmem:[#allocation6 + $0x3e0] sm:$0xff]
    %v266 = vld [vmem:[#allocation6 + $0x3e8] sm:$0xff]
    %v267 = vld [vmem:[#allocation6 + $0x3f0] sm:$0xff]
    %v268 = vld [vmem:[#allocation6 + $0x3f8] sm:$0xff]
    %v269 = vld [vmem:[#allocation6 + $0x400] sm:$0xff]
    %v270 = vld [vmem:[#allocation6 + $0x408] sm:$0xff]
    %v271 = vld [vmem:[#allocation6 + $0x410] sm:$0xff]
    %v272 = vld [vmem:[#allocation6 + $0x418] sm:$0xff]
    %v273 = vld [vmem:[#allocation6 + $0x420] sm:$0xff]
    %v274 = vld [vmem:[#allocation6 + $0x428] sm:$0xff]
    %v275 = vld [vmem:[#allocation6 + $0x430] sm:$0xff]
    %v276 = vld [vmem:[#allocation6 + $0x438] sm:$0xff]
    %v277 = vld [vmem:[#allocation6 + $0x440] sm:$0xff]
    %v278 = vld [vmem:[#allocation6 + $0x448] sm:$0xff]
    %v279 = vld [vmem:[#allocation6 + $0x450] sm:$0xff]
    %v280 = vld [vmem:[#allocation6 + $0x458] sm:$0xff]
    %v281 = vld [vmem:[#allocation6 + $0x460] sm:$0xff]
    %v282 = vld [vmem:[#allocation6 + $0x468] sm:$0xff]
    %v283 = vld [vmem:[#allocation6 + $0x470] sm:$0xff]
    %v284 = vld [vmem:[#allocation6 + $0x478] sm:$0xff]
    %v285 = vld [vmem:[#allocation6 + $0x480] sm:$0xff]
    %v286 = vld [vmem:[#allocation6 + $0x488] sm:$0xff]
    %v287 = vld [vmem:[#allocation6 + $0x490] sm:$0xff]
    %v288 = vld [vmem:[#allocation6 + $0x498] sm:$0xff]
    %v289 = vld [vmem:[#allocation6 + $0x4a0] sm:$0xff]
    %v290 = vld [vmem:[#allocation6 + $0x4a8] sm:$0xff]
    %v291 = vld [vmem:[#allocation6 + $0x4b0] sm:$0xff]
    %v292 = vld [vmem:[#allocation6 + $0x4b8] sm:$0xff]
    %v293 = vld [vmem:[#allocation6 + $0x4c0] sm:$0xff]
    %v294 = vld [vmem:[#allocation6 + $0x4c8] sm:$0xff]
    %v295 = vld [vmem:[#allocation6 + $0x4d0] sm:$0xff]
    %v296 = vld [vmem:[#allocation6 + $0x4d8] sm:$0xff]
    %v297 = vld [vmem:[#allocation6 + $0x4e0] sm:$0xff]
    %v298 = vld [vmem:[#allocation6 + $0x4e8] sm:$0xff]
    %v299 = vld [vmem:[#allocation6 + $0x4f0] sm:$0xff]
    %v300 = vld [vmem:[#allocation6 + $0x4f8] sm:$0xff]
    %v301 = vld [vmem:[#allocation6 + $0x500] sm:$0xff]
    %v302 = vld [vmem:[#allocation6 + $0x508] sm:$0xff]
    %v303 = vld [vmem:[#allocation6 + $0x510] sm:$0xff]
    %v304 = vld [vmem:[#allocation6 + $0x518] sm:$0xff]
    %v305 = vld [vmem:[#allocation6 + $0x520] sm:$0xff]
    %v306 = vld [vmem:[#allocation6 + $0x528] sm:$0xff]
    %v307 = vld [vmem:[#allocation6 + $0x530] sm:$0xff]
    %v308 = vld [vmem:[#allocation6 + $0x538] sm:$0xff]
    %v309 = vld [vmem:[#allocation6 + $0x540] sm:$0xff]
    %v310 = vld [vmem:[#allocation6 + $0x548] sm:$0xff]
    %v311 = vld [vmem:[#allocation6 + $0x550] sm:$0xff]
    %v312 = vld [vmem:[#allocation6 + $0x558] sm:$0xff]
    %v313 = vld [vmem:[#allocation6 + $0x560] sm:$0xff]
    %v314 = vld [vmem:[#allocation6 + $0x568] sm:$0xff]
    %v315 = vld [vmem:[#allocation6 + $0x570] sm:$0xff]
    %v316 = vld [vmem:[#allocation6 + $0x578] sm:$0xff]
    %v317 = vld [vmem:[#allocation6 + $0x580] sm:$0xff]
    %v318 = vld [vmem:[#allocation6 + $0x588] sm:$0xff]
    %v319 = vld [vmem:[#allocation6 + $0x590] sm:$0xff]
    %v320 = vld [vmem:[#allocation6 + $0x598] sm:$0xff]
    %v321 = vld [vmem:[#allocation6 + $0x5a0] sm:$0xff]
    %v322 = vld [vmem:[#allocation6 + $0x5a8] sm:$0xff]
    %v323 = vld [vmem:[#allocation6 + $0x5b0] sm:$0xff]
    %v324 = vld [vmem:[#allocation6 + $0x5b8] sm:$0xff]
    %v325 = vld [vmem:[#allocation6 + $0x5c0] sm:$0xff]
    %v326 = vld [vmem:[#allocation6 + $0x5c8] sm:$0xff]
    %v327 = vld [vmem:[#allocation6 + $0x5d0] sm:$0xff]
    %v328 = vld [vmem:[#allocation6 + $0x5d8] sm:$0xff]
    %v329 = vld [vmem:[#allocation6 + $0x5e0] sm:$0xff]
    %v330 = vld [vmem:[#allocation6 + $0x5e8] sm:$0xff]
    %v331 = vld [vmem:[#allocation6 + $0x5f0] sm:$0xff]
    %v332 = vld [vmem:[#allocation6 + $0x5f8] sm:$0xff]
    %v333 = vld [vmem:[#allocation6 + $0x600] sm:$0xff]
    %v334 = vld [vmem:[#allocation6 + $0x608] sm:$0xff]
    %v335 = vld [vmem:[#allocation6 + $0x610] sm:$0xff]
    %v336 = vld [vmem:[#allocation6 + $0x618] sm:$0xff]
    %v337 = vld [vmem:[#allocation6 + $0x620] sm:$0xff]
    %v338 = vld [vmem:[#allocation6 + $0x628] sm:$0xff]
    %v339 = vld [vmem:[#allocation6 + $0x630] sm:$0xff]
    %v340 = vld [vmem:[#allocation6 + $0x638] sm:$0xff]
    %v341 = vld [vmem:[#allocation6 + $0x640] sm:$0xff]
    %v342 = vld [vmem:[#allocation6 + $0x648] sm:$0xff]
    %v343 = vld [vmem:[#allocation6 + $0x650] sm:$0xff]
    %v344 = vld [vmem:[#allocation6 + $0x658] sm:$0xff]
    %v345 = vld [vmem:[#allocation6 + $0x660] sm:$0xff]
    %v346 = vld [vmem:[#allocation6 + $0x668] sm:$0xff]
    %v347 = vld [vmem:[#allocation6 + $0x670] sm:$0xff]
    %v348 = vld [vmem:[#allocation6 + $0x678] sm:$0xff]
    %v349 = vld [vmem:[#allocation6 + $0x680] sm:$0xff]
    %v350 = vld [vmem:[#allocation6 + $0x688] sm:$0xff]
    %v351 = vld [vmem:[#allocation6 + $0x690] sm:$0xff]
    %v352 = vld [vmem:[#allocation6 + $0x698] sm:$0xff]
    %v353 = vld [vmem:[#allocation6 + $0x6a0] sm:$0xff]
    %v354 = vld [vmem:[#allocation6 + $0x6a8] sm:$0xff]
    %v355 = vld [vmem:[#allocation6 + $0x6b0] sm:$0xff]
    %v356 = vld [vmem:[#allocation6 + $0x6b8] sm:$0xff]
    %v357 = vld [vmem:[#allocation6 + $0x6c0] sm:$0xff]
    %v358 = vld [vmem:[#allocation6 + $0x6c8] sm:$0xff]
    %v359 = vld [vmem:[#allocation6 + $0x6d0] sm:$0xff]
    %v360 = vld [vmem:[#allocation6 + $0x6d8] sm:$0xff]
    %v361 = vld [vmem:[#allocation6 + $0x6e0] sm:$0xff]
    %v362 = vld [vmem:[#allocation6 + $0x6e8] sm:$0xff]
    %v363 = vld [vmem:[#allocation6 + $0x6f0] sm:$0xff]
    %v364 = vld [vmem:[#allocation6 + $0x6f8] sm:$0xff]
    %v365 = vld [vmem:[#allocation6 + $0x700] sm:$0xff]
    %v366 = vld [vmem:[#allocation6 + $0x708] sm:$0xff]
    %v367 = vld [vmem:[#allocation6 + $0x710] sm:$0xff]
    %v368 = vld [vmem:[#allocation6 + $0x718] sm:$0xff]
    %v369 = vld [vmem:[#allocation6 + $0x720] sm:$0xff]
    %v370 = vld [vmem:[#allocation6 + $0x728] sm:$0xff]
    %v371 = vld [vmem:[#allocation6 + $0x730] sm:$0xff]
    %v372 = vld [vmem:[#allocation6 + $0x738] sm:$0xff]
    %v373 = vld [vmem:[#allocation6 + $0x740] sm:$0xff]
    %v374 = vld [vmem:[#allocation6 + $0x748] sm:$0xff]
    %v375 = vld [vmem:[#allocation6 + $0x750] sm:$0xff]
    %v376 = vld [vmem:[#allocation6 + $0x758] sm:$0xff]
    %v377 = vld [vmem:[#allocation6 + $0x760] sm:$0xff]
    %v378 = vld [vmem:[#allocation6 + $0x768] sm:$0xff]
    %v379 = vld [vmem:[#allocation6 + $0x770] sm:$0xff]
    %v380 = vld [vmem:[#allocation6 + $0x778] sm:$0xff]
    %v381 = vld [vmem:[#allocation6 + $0x780] sm:$0xff]
    %v382 = vld [vmem:[#allocation6 + $0x788] sm:$0xff]
    %v383 = vld [vmem:[#allocation6 + $0x790] sm:$0xff]
    %v384 = vld [vmem:[#allocation6 + $0x798] sm:$0xff]
    %v385 = vld [vmem:[#allocation6 + $0x7a0] sm:$0xff]
    %v386 = vld [vmem:[#allocation6 + $0x7a8] sm:$0xff]
    %v387 = vld [vmem:[#allocation6 + $0x7b0] sm:$0xff]
    %v388 = vld [vmem:[#allocation6 + $0x7b8] sm:$0xff]
    %v389 = vld [vmem:[#allocation6 + $0x7c0] sm:$0xff]
    %v390 = vld [vmem:[#allocation6 + $0x7c8] sm:$0xff]
    %v391 = vld [vmem:[#allocation6 + $0x7d0] sm:$0xff]
    %v392 = vld [vmem:[#allocation6 + $0x7d8] sm:$0xff]
    %v393 = vld [vmem:[#allocation6 + $0x7e0] sm:$0xff]
    %v394 = vld [vmem:[#allocation6 + $0x7e8] sm:$0xff]
    %v395 = vld [vmem:[#allocation6 + $0x7f0] sm:$0xff]
    %v396 = vld [vmem:[#allocation6 + $0x7f8] sm:$0xff]
    %v397 = vld [vmem:[#allocation6 + $0x800] sm:$0xff]
    %v398 = vld [vmem:[#allocation6 + $0x808] sm:$0xff]
    %v399 = vld [vmem:[#allocation6 + $0x810] sm:$0xff]
    %v400 = vld [vmem:[#allocation6 + $0x818] sm:$0xff]
    %v401 = vld [vmem:[#allocation6 + $0x820] sm:$0xff]
    %v402 = vld [vmem:[#allocation6 + $0x828] sm:$0xff]
    %v403 = vld [vmem:[#allocation6 + $0x830] sm:$0xff]
    %v404 = vld [vmem:[#allocation6 + $0x838] sm:$0xff]
    %v405 = vld [vmem:[#allocation6 + $0x840] sm:$0xff]
    %v406 = vld [vmem:[#allocation6 + $0x848] sm:$0xff]
    %v407 = vld [vmem:[#allocation6 + $0x850] sm:$0xff]
    %v408 = vld [vmem:[#allocation6 + $0x858] sm:$0xff]
    %v409 = vld [vmem:[#allocation6 + $0x860] sm:$0xff]
    %v410 = vld [vmem:[#allocation6 + $0x868] sm:$0xff]
    %v411 = vld [vmem:[#allocation6 + $0x870] sm:$0xff]
    %v412 = vld [vmem:[#allocation6 + $0x878] sm:$0xff]
    %v413 = vld [vmem:[#allocation6 + $0x880] sm:$0xff]
    %v414 = vld [vmem:[#allocation6 + $0x888] sm:$0xff]
    %v415 = vld [vmem:[#allocation6 + $0x890] sm:$0xff]
    %v416 = vld [vmem:[#allocation6 + $0x898] sm:$0xff]
    %v417 = vld [vmem:[#allocation6 + $0x8a0] sm:$0xff]
    %v418 = vld [vmem:[#allocation6 + $0x8a8] sm:$0xff]
    %v419 = vld [vmem:[#allocation6 + $0x8b0] sm:$0xff]
    %v420 = vld [vmem:[#allocation6 + $0x8b8] sm:$0xff]
    %v421 = vld [vmem:[#allocation6 + $0x8c0] sm:$0xff]
    %v422 = vld [vmem:[#allocation6 + $0x8c8] sm:$0xff]
    %v423 = vld [vmem:[#allocation6 + $0x8d0] sm:$0xff]
    %v424 = vld [vmem:[#allocation6 + $0x8d8] sm:$0xff]
    %v425 = vld [vmem:[#allocation6 + $0x8e0] sm:$0xff]
    %v426 = vld [vmem:[#allocation6 + $0x8e8] sm:$0xff]
    %v427 = vld [vmem:[#allocation6 + $0x8f0] sm:$0xff]
    %v428 = vld [vmem:[#allocation6 + $0x8f8] sm:$0xff]
    %v429 = vld [vmem:[#allocation6 + $0x900] sm:$0xff]
    %v430 = vld [vmem:[#allocation6 + $0x908] sm:$0xff]
    %v431 = vld [vmem:[#allocation6 + $0x910] sm:$0xff]
    %v432 = vld [vmem:[#allocation6 + $0x918] sm:$0xff]
    %v433 = vld [vmem:[#allocation6 + $0x920] sm:$0xff]
    %v434 = vld [vmem:[#allocation6 + $0x928] sm:$0xff]
    %v435 = vld [vmem:[#allocation6 + $0x930] sm:$0xff]
    %v436 = vld [vmem:[#allocation6 + $0x938] sm:$0xff]
    %v437 = vld [vmem:[#allocation6 + $0x940] sm:$0xff]
    %v438 = vld [vmem:[#allocation6 + $0x948] sm:$0xff]
    %v439 = vld [vmem:[#allocation6 + $0x950] sm:$0xff]
    %v440 = vld [vmem:[#allocation6 + $0x958] sm:$0xff]
    %v441 = vld [vmem:[#allocation6 + $0x960] sm:$0xff]
    %v442 = vld [vmem:[#allocation6 + $0x968] sm:$0xff]
    %v443 = vld [vmem:[#allocation6 + $0x970] sm:$0xff]
    %v444 = vld [vmem:[#allocation6 + $0x978] sm:$0xff]
    %v445 = vld [vmem:[#allocation6 + $0x980] sm:$0xff]
    %v446 = vld [vmem:[#allocation6 + $0x988] sm:$0xff]
    %v447 = vld [vmem:[#allocation6 + $0x990] sm:$0xff]
    %v448 = vld [vmem:[#allocation6 + $0x998] sm:$0xff]
    %v449 = vld [vmem:[#allocation6 + $0x9a0] sm:$0xff]
    %v450 = vld [vmem:[#allocation6 + $0x9a8] sm:$0xff]
    %v451 = vld [vmem:[#allocation6 + $0x9b0] sm:$0xff]
    %v452 = vld [vmem:[#allocation6 + $0x9b8] sm:$0xff]
    %v453 = vld [vmem:[#allocation6 + $0x9c0] sm:$0xff]
    %v454 = vld [vmem:[#allocation6 + $0x9c8] sm:$0xff]
    %v455 = vld [vmem:[#allocation6 + $0x9d0] sm:$0xff]
    %v456 = vld [vmem:[#allocation6 + $0x9d8] sm:$0xff]
    %v457 = vld [vmem:[#allocation6 + $0x9e0] sm:$0xff]
    %v458 = vld [vmem:[#allocation6 + $0x9e8] sm:$0xff]
    %v459 = vld [vmem:[#allocation6 + $0x9f0] sm:$0xff]
    %v460 = vld [vmem:[#allocation6 + $0x9f8] sm:$0xff]
    %v461 = vld [vmem:[#allocation6 + $0xa00] sm:$0xff]
    %v462 = vld [vmem:[#allocation6 + $0xa08] sm:$0xff]
    %v463 = vld [vmem:[#allocation6 + $0xa10] sm:$0xff]
    %v464 = vld [vmem:[#allocation6 + $0xa18] sm:$0xff]
    %v465 = vld [vmem:[#allocation6 + $0xa20] sm:$0xff]
    %v466 = vld [vmem:[#allocation6 + $0xa28] sm:$0xff]
    %v467 = vld [vmem:[#allocation6 + $0xa30] sm:$0xff]
    %v468 = vld [vmem:[#allocation6 + $0xa38] sm:$0xff]
    %v469 = vld [vmem:[#allocation6 + $0xa40] sm:$0xff]
    %v470 = vld [vmem:[#allocation6 + $0xa48] sm:$0xff]
    %v471 = vld [vmem:[#allocation6 + $0xa50] sm:$0xff]
    %v472 = vld [vmem:[#allocation6 + $0xa58] sm:$0xff]
    %v473 = vld [vmem:[#allocation6 + $0xa60] sm:$0xff]
    %v474 = vld [vmem:[#allocation6 + $0xa68] sm:$0xff]
    %v475 = vld [vmem:[#allocation6 + $0xa70] sm:$0xff]
    %v476 = vld [vmem:[#allocation6 + $0xa78] sm:$0xff]
    %v477 = vld [vmem:[#allocation6 + $0xa80] sm:$0xff]
    %v478 = vld [vmem:[#allocation6 + $0xa88] sm:$0xff]
    %v479 = vld [vmem:[#allocation6 + $0xa90] sm:$0xff]
    %v480 = vld [vmem:[#allocation6 + $0xa98] sm:$0xff]
    %v481 = vld [vmem:[#allocation6 + $0xaa0] sm:$0xff]
    %v482 = vld [vmem:[#allocation6 + $0xaa8] sm:$0xff]
    %v483 = vld [vmem:[#allocation6 + $0xab0] sm:$0xff]
    %v484 = vld [vmem:[#allocation6 + $0xab8] sm:$0xff]
    %v485 = vld [vmem:[#allocation6 + $0xac0] sm:$0xff]
    %v486 = vld [vmem:[#allocation6 + $0xac8] sm:$0xff]
    %v487 = vld [vmem:[#allocation6 + $0xad0] sm:$0xff]
    %v488 = vld [vmem:[#allocation6 + $0xad8] sm:$0xff]
    %v489 = vld [vmem:[#allocation6 + $0xae0] sm:$0xff]
    %v490 = vld [vmem:[#allocation6 + $0xae8] sm:$0xff]
    %v491 = vld [vmem:[#allocation6 + $0xaf0] sm:$0xff]
    %v492 = vld [vmem:[#allocation6 + $0xaf8] sm:$0xff]
    %v493 = vld [vmem:[#allocation6 + $0xb00] sm:$0xff]
    %v494 = vld [vmem:[#allocation6 + $0xb08] sm:$0xff]
    %v495 = vld [vmem:[#allocation6 + $0xb10] sm:$0xff]
    %v496 = vld [vmem:[#allocation6 + $0xb18] sm:$0xff]
    %v497 = vld [vmem:[#allocation6 + $0xb20] sm:$0xff]
    %v498 = vld [vmem:[#allocation6 + $0xb28] sm:$0xff]
    %v499 = vld [vmem:[#allocation6 + $0xb30] sm:$0xff]
    %v500 = vld [vmem:[#allocation6 + $0xb38] sm:$0xff]
    %v501 = vld [vmem:[#allocation6 + $0xb40] sm:$0xff]
    %v502 = vld [vmem:[#allocation6 + $0xb48] sm:$0xff]
    %v503 = vld [vmem:[#allocation6 + $0xb50] sm:$0xff]
    %v504 = vld [vmem:[#allocation6 + $0xb58] sm:$0xff]
    %v505 = vld [vmem:[#allocation6 + $0xb60] sm:$0xff]
    %v506 = vld [vmem:[#allocation6 + $0xb68] sm:$0xff]
    %v507 = vld [vmem:[#allocation6 + $0xb70] sm:$0xff]
    %v508 = vld [vmem:[#allocation6 + $0xb78] sm:$0xff]
    %v509 = vld [vmem:[#allocation6 + $0xb80] sm:$0xff]
    %v510 = vld [vmem:[#allocation6 + $0xb88] sm:$0xff]
    %v511 = vld [vmem:[#allocation6 + $0xb90] sm:$0xff]
    %v512 = vld [vmem:[#allocation6 + $0xb98] sm:$0xff]
    %v513 = vld [vmem:[#allocation6 + $0xba0] sm:$0xff]
    %v514 = vld [vmem:[#allocation6 + $0xba8] sm:$0xff]
    %v515 = vld [vmem:[#allocation6 + $0xbb0] sm:$0xff]
    %v516 = vld [vmem:[#allocation6 + $0xbb8] sm:$0xff]
    %v517 = vld [vmem:[#allocation6 + $0xbc0] sm:$0xff]
    %v518 = vld [vmem:[#allocation6 + $0xbc8] sm:$0xff]
    %v519 = vld [vmem:[#allocation6 + $0xbd0] sm:$0xff]
    %v520 = vld [vmem:[#allocation6 + $0xbd8] sm:$0xff]
    %v521 = vld [vmem:[#allocation6 + $0xbe0] sm:$0xff]
    %v522 = vld [vmem:[#allocation6 + $0xbe8] sm:$0xff]
    %v523 = vld [vmem:[#allocation6 + $0xbf0] sm:$0xff]
    %v524 = vld [vmem:[#allocation6 + $0xbf8] sm:$0xff]
    %v525 = vld [vmem:[#allocation6 + $0xc00] sm:$0xff]
    %v526 = vld [vmem:[#allocation6 + $0xc08] sm:$0xff]
    %v527 = vld [vmem:[#allocation6 + $0xc10] sm:$0xff]
    %v528 = vld [vmem:[#allocation6 + $0xc18] sm:$0xff]
    %v529 = vld [vmem:[#allocation6 + $0xc20] sm:$0xff]
    %v530 = vld [vmem:[#allocation6 + $0xc28] sm:$0xff]
    %v531 = vld [vmem:[#allocation6 + $0xc30] sm:$0xff]
    %v532 = vld [vmem:[#allocation6 + $0xc38] sm:$0xff]
    %v533 = vld [vmem:[#allocation6 + $0xc40] sm:$0xff]
    %v534 = vld [vmem:[#allocation6 + $0xc48] sm:$0xff]
    %v535 = vld [vmem:[#allocation6 + $0xc50] sm:$0xff]
    %v536 = vld [vmem:[#allocation6 + $0xc58] sm:$0xff]
    %v537 = vld [vmem:[#allocation6 + $0xc60] sm:$0xff]
    %v538 = vld [vmem:[#allocation6 + $0xc68] sm:$0xff]
    %v539 = vld [vmem:[#allocation6 + $0xc70] sm:$0xff]
    %v540 = vld [vmem:[#allocation6 + $0xc78] sm:$0xff]
    %v541 = vld [vmem:[#allocation6 + $0xc80] sm:$0xff]
    %v542 = vld [vmem:[#allocation6 + $0xc88] sm:$0xff]
    %v543 = vld [vmem:[#allocation6 + $0xc90] sm:$0xff]
    %v544 = vld [vmem:[#allocation6 + $0xc98] sm:$0xff]
    %v545 = vld [vmem:[#allocation6 + $0xca0] sm:$0xff]
    %v546 = vld [vmem:[#allocation6 + $0xca8] sm:$0xff]
    %v547 = vld [vmem:[#allocation6 + $0xcb0] sm:$0xff]
    %v548 = vld [vmem:[#allocation6 + $0xcb8] sm:$0xff]
    %v549 = vld [vmem:[#allocation6 + $0xcc0] sm:$0xff]
    %v550 = vld [vmem:[#allocation6 + $0xcc8] sm:$0xff]
    %v551 = vld [vmem:[#allocation6 + $0xcd0] sm:$0xff]
    %v552 = vld [vmem:[#allocation6 + $0xcd8] sm:$0xff]
    %v553 = vld [vmem:[#allocation6 + $0xce0] sm:$0xff]
    %v554 = vld [vmem:[#allocation6 + $0xce8] sm:$0xff]
    %v555 = vld [vmem:[#allocation6 + $0xcf0] sm:$0xff]
    %v556 = vld [vmem:[#allocation6 + $0xcf8] sm:$0xff]
    %v557 = vld [vmem:[#allocation6 + $0xd00] sm:$0xff]
    %v558 = vld [vmem:[#allocation6 + $0xd08] sm:$0xff]
    %v559 = vld [vmem:[#allocation6 + $0xd10] sm:$0xff]
    %v560 = vld [vmem:[#allocation6 + $0xd18] sm:$0xff]
    %v561 = vld [vmem:[#allocation6 + $0xd20] sm:$0xff]
    %v562 = vld [vmem:[#allocation6 + $0xd28] sm:$0xff]
    %v563 = vld [vmem:[#allocation6 + $0xd30] sm:$0xff]
    %v564 = vld [vmem:[#allocation6 + $0xd38] sm:$0xff]
    %v565 = vld [vmem:[#allocation6 + $0xd40] sm:$0xff]
    %v566 = vld [vmem:[#allocation6 + $0xd48] sm:$0xff]
    %v567 = vld [vmem:[#allocation6 + $0xd50] sm:$0xff]
    %v568 = vld [vmem:[#allocation6 + $0xd58] sm:$0xff]
    %v569 = vld [vmem:[#allocation6 + $0xd60] sm:$0xff]
    %v570 = vld [vmem:[#allocation6 + $0xd68] sm:$0xff]
    %v571 = vld [vmem:[#allocation6 + $0xd70] sm:$0xff]
    %v572 = vld [vmem:[#allocation6 + $0xd78] sm:$0xff]
    %v573 = vld [vmem:[#allocation6 + $0xd80] sm:$0xff]
    %v574 = vld [vmem:[#allocation6 + $0xd88] sm:$0xff]
    %v575 = vld [vmem:[#allocation6 + $0xd90] sm:$0xff]
    %v576 = vld [vmem:[#allocation6 + $0xd98] sm:$0xff]
    %v577 = vld [vmem:[#allocation6 + $0xda0] sm:$0xff]
    %v578 = vld [vmem:[#allocation6 + $0xda8] sm:$0xff]
    %v579 = vld [vmem:[#allocation6 + $0xdb0] sm:$0xff]
    %v580 = vld [vmem:[#allocation6 + $0xdb8] sm:$0xff]
    %v581 = vld [vmem:[#allocation6 + $0xdc0] sm:$0xff]
    %v582 = vld [vmem:[#allocation6 + $0xdc8] sm:$0xff]
    %v583 = vld [vmem:[#allocation6 + $0xdd0] sm:$0xff]
    %v584 = vld [vmem:[#allocation6 + $0xdd8] sm:$0xff]
    %v585 = vld [vmem:[#allocation6 + $0xde0] sm:$0xff]
    %v586 = vld [vmem:[#allocation6 + $0xde8] sm:$0xff]
    %v587 = vld [vmem:[#allocation6 + $0xdf0] sm:$0xff]
    %v588 = vld [vmem:[#allocation6 + $0xdf8] sm:$0xff]
    %v589 = vld [vmem:[#allocation6 + $0xe00] sm:$0xff]
    %v590 = vld [vmem:[#allocation6 + $0xe08] sm:$0xff]
    %v591 = vld [vmem:[#allocation6 + $0xe10] sm:$0xff]
    %v592 = vld [vmem:[#allocation6 + $0xe18] sm:$0xff]
    %v593 = vld [vmem:[#allocation6 + $0xe20] sm:$0xff]
    %v594 = vld [vmem:[#allocation6 + $0xe28] sm:$0xff]
    %v595 = vld [vmem:[#allocation6 + $0xe30] sm:$0xff]
    %v596 = vld [vmem:[#allocation6 + $0xe38] sm:$0xff]
    %v597 = vld [vmem:[#allocation6 + $0xe40] sm:$0xff]
    %v598 = vld [vmem:[#allocation6 + $0xe48] sm:$0xff]
    %v599 = vld [vmem:[#allocation6 + $0xe50] sm:$0xff]
    %v600 = vld [vmem:[#allocation6 + $0xe58] sm:$0xff]
    %v601 = vld [vmem:[#allocation6 + $0xe60] sm:$0xff]
    %v602 = vld [vmem:[#allocation6 + $0xe68] sm:$0xff]
    %v603 = vld [vmem:[#allocation6 + $0xe70] sm:$0xff]
    %v604 = vld [vmem:[#allocation6 + $0xe78] sm:$0xff]
    %v605 = vld [vmem:[#allocation6 + $0xe80] sm:$0xff]
    %v606 = vld [vmem:[#allocation6 + $0xe88] sm:$0xff]
    %v607 = vld [vmem:[#allocation6 + $0xe90] sm:$0xff]
    %v608 = vld [vmem:[#allocation6 + $0xe98] sm:$0xff]
    %v609 = vld [vmem:[#allocation6 + $0xea0] sm:$0xff]
    %v610 = vld [vmem:[#allocation6 + $0xea8] sm:$0xff]
    %v611 = vld [vmem:[#allocation6 + $0xeb0] sm:$0xff]
    %v612 = vld [vmem:[#allocation6 + $0xeb8] sm:$0xff]
    %v613 = vld [vmem:[#allocation6 + $0xec0] sm:$0xff]
    %v614 = vld [vmem:[#allocation6 + $0xec8] sm:$0xff]
    %v615 = vld [vmem:[#allocation6 + $0xed0] sm:$0xff]
    %v616 = vld [vmem:[#allocation6 + $0xed8] sm:$0xff]
    %v617 = vld [vmem:[#allocation6 + $0xee0] sm:$0xff]
    %v618 = vld [vmem:[#allocation6 + $0xee8] sm:$0xff]
    %v619 = vld [vmem:[#allocation6 + $0xef0] sm:$0xff]
    %v620 = vld [vmem:[#allocation6 + $0xef8] sm:$0xff]
    %v621 = vld [vmem:[#allocation6 + $0xf00] sm:$0xff]
    %v622 = vld [vmem:[#allocation6 + $0xf08] sm:$0xff]
    %v623 = vld [vmem:[#allocation6 + $0xf10] sm:$0xff]
    %v624 = vld [vmem:[#allocation6 + $0xf18] sm:$0xff]
    %v625 = vld [vmem:[#allocation6 + $0xf20] sm:$0xff]
    %v626 = vld [vmem:[#allocation6 + $0xf28] sm:$0xff]
    %v627 = vld [vmem:[#allocation6 + $0xf30] sm:$0xff]
    %v628 = vld [vmem:[#allocation6 + $0xf38] sm:$0xff]
    %v629 = vld [vmem:[#allocation6 + $0xf40] sm:$0xff]
    %v630 = vld [vmem:[#allocation6 + $0xf48] sm:$0xff]
    %v631 = vld [vmem:[#allocation6 + $0xf50] sm:$0xff]
    %v632 = vld [vmem:[#allocation6 + $0xf58] sm:$0xff]
    %v633 = vld [vmem:[#allocation6 + $0xf60] sm:$0xff]
    %v634 = vld [vmem:[#allocation6 + $0xf68] sm:$0xff]
    %v635 = vld [vmem:[#allocation6 + $0xf70] sm:$0xff]
    %v636 = vld [vmem:[#allocation6 + $0xf78] sm:$0xff]
    %v637 = vld [vmem:[#allocation6 + $0xf80] sm:$0xff]
    %v638 = vld [vmem:[#allocation6 + $0xf88] sm:$0xff]
    %v639 = vld [vmem:[#allocation6 + $0xf90] sm:$0xff]
    %v640 = vld [vmem:[#allocation6 + $0xf98] sm:$0xff]
    %v641 = vld [vmem:[#allocation6 + $0xfa0] sm:$0xff]
    %v642 = vld [vmem:[#allocation6 + $0xfa8] sm:$0xff]
    %v643 = vld [vmem:[#allocation6 + $0xfb0] sm:$0xff]
    %v644 = vld [vmem:[#allocation6 + $0xfb8] sm:$0xff]
    %v645 = vld [vmem:[#allocation6 + $0xfc0] sm:$0xff]
    %v646 = vld [vmem:[#allocation6 + $0xfc8] sm:$0xff]
    %v647 = vld [vmem:[#allocation6 + $0xfd0] sm:$0xff]
    %v648 = vld [vmem:[#allocation6 + $0xfd8] sm:$0xff]
    %v649 = vld [vmem:[#allocation6 + $0xfe0] sm:$0xff]
    %v650 = vld [vmem:[#allocation6 + $0xfe8] sm:$0xff]
    %v651 = vld [vmem:[#allocation6 + $0xff0] sm:$0xff]
    %v652 = vld [vmem:[#allocation6 + $0xff8] sm:$0xff]
    %v653 = vld [vmem:[#allocation6 + $0x1000] sm:$0xff]
    %v654 = vld [vmem:[#allocation6 + $0x1008] sm:$0xff]
    %v655 = vld [vmem:[#allocation6 + $0x1010] sm:$0xff]
    %v656 = vld [vmem:[#allocation6 + $0x1018] sm:$0xff]
    %v657 = vld [vmem:[#allocation6 + $0x1020] sm:$0xff]
    %v658 = vld [vmem:[#allocation6 + $0x1028] sm:$0xff]
    %v659 = vld [vmem:[#allocation6 + $0x1030] sm:$0xff]
    %v660 = vld [vmem:[#allocation6 + $0x1038] sm:$0xff]
    %v661 = vld [vmem:[#allocation6 + $0x1040] sm:$0xff]
    %v662 = vld [vmem:[#allocation6 + $0x1048] sm:$0xff]
    %v663 = vld [vmem:[#allocation6 + $0x1050] sm:$0xff]
    %v664 = vld [vmem:[#allocation6 + $0x1058] sm:$0xff]
    %v665 = vld [vmem:[#allocation6 + $0x1060] sm:$0xff]
    %v666 = vld [vmem:[#allocation6 + $0x1068] sm:$0xff]
    %v667 = vld [vmem:[#allocation6 + $0x1070] sm:$0xff]
    %v668 = vld [vmem:[#allocation6 + $0x1078] sm:$0xff]
    %v669 = vld [vmem:[#allocation6 + $0x1080] sm:$0xff]
    %v670 = vld [vmem:[#allocation6 + $0x1088] sm:$0xff]
    %v671 = vld [vmem:[#allocation6 + $0x1090] sm:$0xff]
    %v672 = vld [vmem:[#allocation6 + $0x1098] sm:$0xff]
    %v673 = vld [vmem:[#allocation6 + $0x10a0] sm:$0xff]
    %v674 = vld [vmem:[#allocation6 + $0x10a8] sm:$0xff]
    %v675 = vld [vmem:[#allocation6 + $0x10b0] sm:$0xff]
    %v676 = vld [vmem:[#allocation6 + $0x10b8] sm:$0xff]
    %v677 = vld [vmem:[#allocation6 + $0x10c0] sm:$0xff]
    %v678 = vld [vmem:[#allocation6 + $0x10c8] sm:$0xff]
    %v679 = vld [vmem:[#allocation6 + $0x10d0] sm:$0xff]
    %v680 = vld [vmem:[#allocation6 + $0x10d8] sm:$0xff]
    %v681 = vld [vmem:[#allocation6 + $0x10e0] sm:$0xff]
    %v682 = vld [vmem:[#allocation6 + $0x10e8] sm:$0xff]
    %v683 = vld [vmem:[#allocation6 + $0x10f0] sm:$0xff]
    %v684 = vld [vmem:[#allocation6 + $0x10f8] sm:$0xff]
    %v685 = vld [vmem:[#allocation6 + $0x1100] sm:$0xff]
    %v686 = vld [vmem:[#allocation6 + $0x1108] sm:$0xff]
    %v687 = vld [vmem:[#allocation6 + $0x1110] sm:$0xff]
    %v688 = vld [vmem:[#allocation6 + $0x1118] sm:$0xff]
    %v689 = vld [vmem:[#allocation6 + $0x1120] sm:$0xff]
    %v690 = vld [vmem:[#allocation6 + $0x1128] sm:$0xff]
    %v691 = vld [vmem:[#allocation6 + $0x1130] sm:$0xff]
    %v692 = vld [vmem:[#allocation6 + $0x1138] sm:$0xff]
    %v693 = vld [vmem:[#allocation6 + $0x1140] sm:$0xff]
    %v694 = vld [vmem:[#allocation6 + $0x1148] sm:$0xff]
    %v695 = vld [vmem:[#allocation6 + $0x1150] sm:$0xff]
    %v696 = vld [vmem:[#allocation6 + $0x1158] sm:$0xff]
    %v697 = vld [vmem:[#allocation6 + $0x1160] sm:$0xff]
    %v698 = vld [vmem:[#allocation6 + $0x1168] sm:$0xff]
    %v699 = vld [vmem:[#allocation6 + $0x1170] sm:$0xff]
    %v700 = vld [vmem:[#allocation6 + $0x1178] sm:$0xff]
    %v701 = vld [vmem:[#allocation6 + $0x1180] sm:$0xff]
    %v702 = vld [vmem:[#allocation6 + $0x1188] sm:$0xff]
    %v703 = vld [vmem:[#allocation6 + $0x1190] sm:$0xff]
    %v704 = vld [vmem:[#allocation6 + $0x1198] sm:$0xff]
    %v705 = vld [vmem:[#allocation6 + $0x11a0] sm:$0xff]
    %v706 = vld [vmem:[#allocation6 + $0x11a8] sm:$0xff]
    %v707 = vld [vmem:[#allocation6 + $0x11b0] sm:$0xff]
    %v708 = vld [vmem:[#allocation6 + $0x11b8] sm:$0xff]
    %v709 = vld [vmem:[#allocation6 + $0x11c0] sm:$0xff]
    %v710 = vld [vmem:[#allocation6 + $0x11c8] sm:$0xff]
    %v711 = vld [vmem:[#allocation6 + $0x11d0] sm:$0xff]
    %v712 = vld [vmem:[#allocation6 + $0x11d8] sm:$0xff]
    %v713 = vld [vmem:[#allocation6 + $0x11e0] sm:$0xff]
    %v714 = vld [vmem:[#allocation6 + $0x11e8] sm:$0xff]
    %v715 = vld [vmem:[#allocation6 + $0x11f0] sm:$0xff]
    %v716 = vld [vmem:[#allocation6 + $0x11f8] sm:$0xff]
    %v717 = vld [vmem:[#allocation6 + $0x1200] sm:$0xff]
    %v718 = vld [vmem:[#allocation6 + $0x1208] sm:$0xff]
    %v719 = vld [vmem:[#allocation6 + $0x1210] sm:$0xff]
    %v720 = vld [vmem:[#allocation6 + $0x1218] sm:$0xff]
    %v721 = vld [vmem:[#allocation6 + $0x1220] sm:$0xff]
    %v722 = vld [vmem:[#allocation6 + $0x1228] sm:$0xff]
    %v723 = vld [vmem:[#allocation6 + $0x1230] sm:$0xff]
    %v724 = vld [vmem:[#allocation6 + $0x1238] sm:$0xff]
    %v725 = vld [vmem:[#allocation6 + $0x1240] sm:$0xff]
    %v726 = vld [vmem:[#allocation6 + $0x1248] sm:$0xff]
    %v727 = vld [vmem:[#allocation6 + $0x1250] sm:$0xff]
    %v728 = vld [vmem:[#allocation6 + $0x1258] sm:$0xff]
    %v729 = vld [vmem:[#allocation6 + $0x1260] sm:$0xff]
    %v730 = vld [vmem:[#allocation6 + $0x1268] sm:$0xff]
    %v731 = vld [vmem:[#allocation6 + $0x1270] sm:$0xff]
    %v732 = vld [vmem:[#allocation6 + $0x1278] sm:$0xff]
    %v733 = vld [vmem:[#allocation6 + $0x1280] sm:$0xff]
    %v734 = vld [vmem:[#allocation6 + $0x1288] sm:$0xff]
    %v735 = vld [vmem:[#allocation6 + $0x1290] sm:$0xff]
    %v736 = vld [vmem:[#allocation6 + $0x1298] sm:$0xff]
    %v737 = vld [vmem:[#allocation6 + $0x12a0] sm:$0xff]
    %v738 = vld [vmem:[#allocation6 + $0x12a8] sm:$0xff]
    %v739 = vld [vmem:[#allocation6 + $0x12b0] sm:$0xff]
    %v740 = vld [vmem:[#allocation6 + $0x12b8] sm:$0xff]
    %v741 = vld [vmem:[#allocation6 + $0x12c0] sm:$0xff]
    %v742 = vld [vmem:[#allocation6 + $0x12c8] sm:$0xff]
    %v743 = vld [vmem:[#allocation6 + $0x12d0] sm:$0xff]
    %v744 = vld [vmem:[#allocation6 + $0x12d8] sm:$0xff]
    %v745 = vld [vmem:[#allocation6 + $0x12e0] sm:$0xff]
    %v746 = vld [vmem:[#allocation6 + $0x12e8] sm:$0xff]
    %v747 = vld [vmem:[#allocation6 + $0x12f0] sm:$0xff]
    %v748 = vld [vmem:[#allocation6 + $0x12f8] sm:$0xff]
    %v749 = vld [vmem:[#allocation6 + $0x1300] sm:$0xff]
    %v750 = vld [vmem:[#allocation6 + $0x1308] sm:$0xff]
    %v751 = vld [vmem:[#allocation6 + $0x1310] sm:$0xff]
    %v752 = vld [vmem:[#allocation6 + $0x1318] sm:$0xff]
    %v753 = vld [vmem:[#allocation6 + $0x1320] sm:$0xff]
    %v754 = vld [vmem:[#allocation6 + $0x1328] sm:$0xff]
    %v755 = vld [vmem:[#allocation6 + $0x1330] sm:$0xff]
    %v756 = vld [vmem:[#allocation6 + $0x1338] sm:$0xff]
    %v757 = vld [vmem:[#allocation6 + $0x1340] sm:$0xff]
    %v758 = vld [vmem:[#allocation6 + $0x1348] sm:$0xff]
    %v759 = vld [vmem:[#allocation6 + $0x1350] sm:$0xff]
    %v760 = vld [vmem:[#allocation6 + $0x1358] sm:$0xff]
    %v761 = vld [vmem:[#allocation6 + $0x1360] sm:$0xff]
    %v762 = vld [vmem:[#allocation6 + $0x1368] sm:$0xff]
    %v763 = vld [vmem:[#allocation6 + $0x1370] sm:$0xff]
    %v764 = vld [vmem:[#allocation6 + $0x1378] sm:$0xff]
    %v765 = vld [vmem:[#allocation6 + $0x1380] sm:$0xff]
    %v766 = vld [vmem:[#allocation6 + $0x1388] sm:$0xff]
    %v767 = vld [vmem:[#allocation6 + $0x1390] sm:$0xff]
    %v768 = vld [vmem:[#allocation6 + $0x1398] sm:$0xff]
    %v769 = vld [vmem:[#allocation6 + $0x13a0] sm:$0xff]
    %v770 = vld [vmem:[#allocation6 + $0x13a8] sm:$0xff]
    %v771 = vld [vmem:[#allocation6 + $0x13b0] sm:$0xff]
    %v772 = vld [vmem:[#allocation6 + $0x13b8] sm:$0xff]
    %v773 = vld [vmem:[#allocation6 + $0x13c0] sm:$0xff]
    %v774 = vld [vmem:[#allocation6 + $0x13c8] sm:$0xff]
    %v775 = vld [vmem:[#allocation6 + $0x13d0] sm:$0xff]
    %v776 = vld [vmem:[#allocation6 + $0x13d8] sm:$0xff]
    %v777 = vld [vmem:[#allocation6 + $0x13e0] sm:$0xff]
    %v778 = vld [vmem:[#allocation6 + $0x13e8] sm:$0xff]
    %v779 = vld [vmem:[#allocation6 + $0x13f0] sm:$0xff]
    %v780 = vld [vmem:[#allocation6 + $0x13f8] sm:$0xff]
    %v781 = vld [vmem:[#allocation8] sm:$0xff]
    %v783 = vlaneseq
    %v784 = vshrl.u32 %v783, 7
    %v785 = vsub.s32 0, %v784
    %v786 = vrot.slane %v781, %v785
    %v787 = vlaneseq
    %v788 = vshrl.u32 %v787, 7
    %v789 = vsub.s32 1, %v788
    %v790 = vrot.slane %v781, %v789
    %v791 = vlaneseq
    %v792 = vshrl.u32 %v791, 7
    %v793 = vsub.s32 2, %v792
    %v794 = vrot.slane %v781, %v793
    %v795 = vlaneseq
    %v796 = vshrl.u32 %v795, 7
    %v797 = vsub.s32 3, %v796
    %v798 = vrot.slane %v781, %v797
    %v799 = vlaneseq
    %v800 = vshrl.u32 %v799, 7
    %v801 = vsub.s32 4, %v800
    %v802 = vrot.slane %v781, %v801
    %v803 = vlaneseq
    %v804 = vshrl.u32 %v803, 7
    %v805 = vsub.s32 5, %v804
    %v806 = vrot.slane %v781, %v805
    %v807 = vlaneseq
    %v808 = vshrl.u32 %v807, 7
    %v809 = vsub.s32 6, %v808
    %v810 = vrot.slane %v781, %v809
    %v811 = vlaneseq
    %v812 = vshrl.u32 %v811, 7
    %v813 = vsub.s32 7, %v812
    %v814 = vrot.slane %v781, %v813
    %v1463 = vunpack.c.l.b16 %v141
    %v1464 = vunpack.c.h.b16 %v141
    %v1465 = vunpack.c.l.b16 %v142
    %v1466 = vunpack.c.h.b16 %v142
    %v1467 = vunpack.c.l.b16 %v143
    %v1468 = vunpack.c.h.b16 %v143
    %v1469 = vunpack.c.l.b16 %v144
    %v1470 = vunpack.c.h.b16 %v144
    %v1471 = vunpack.c.l.b16 %v145
    %v1472 = vunpack.c.h.b16 %v145
    %v1473 = vunpack.c.l.b16 %v146
    %v1474 = vunpack.c.h.b16 %v146
    %v1475 = vunpack.c.l.b16 %v147
    %v1476 = vunpack.c.h.b16 %v147
    %v1477 = vunpack.c.l.b16 %v148
    %v1478 = vunpack.c.h.b16 %v148
    %v1479 = vunpack.c.l.b16 %v149
    %v1480 = vunpack.c.h.b16 %v149
    %v1481 = vunpack.c.l.b16 %v150
    %v1482 = vunpack.c.h.b16 %v150
    %v1483 = vunpack.c.l.b16 %v151
    %v1484 = vunpack.c.h.b16 %v151
    %v1485 = vunpack.c.l.b16 %v152
    %v1486 = vunpack.c.h.b16 %v152
    %v1487 = vunpack.c.l.b16 %v153
    %v1488 = vunpack.c.h.b16 %v153
    %v1489 = vunpack.c.l.b16 %v154
    %v1490 = vunpack.c.h.b16 %v154
    %v1491 = vunpack.c.l.b16 %v155
    %v1492 = vunpack.c.h.b16 %v155
    %v1493 = vunpack.c.l.b16 %v156
    %v1494 = vunpack.c.h.b16 %v156
    %v1495 = vunpack.c.l.b16 %v157
    %v1496 = vunpack.c.h.b16 %v157
    %v1497 = vunpack.c.l.b16 %v158
    %v1498 = vunpack.c.h.b16 %v158
    %v1499 = vunpack.c.l.b16 %v159
    %v1500 = vunpack.c.h.b16 %v159
    %v1501 = vunpack.c.l.b16 %v160
    %v1502 = vunpack.c.h.b16 %v160
    %v1503 = vunpack.c.l.b16 %v161
    %v1504 = vunpack.c.h.b16 %v161
    %v1505 = vunpack.c.l.b16 %v162
    %v1506 = vunpack.c.h.b16 %v162
    %v1507 = vunpack.c.l.b16 %v163
    %v1508 = vunpack.c.h.b16 %v163
    %v1509 = vunpack.c.l.b16 %v164
    %v1510 = vunpack.c.h.b16 %v164
    %v1511 = vunpack.c.l.b16 %v165
    %v1512 = vunpack.c.h.b16 %v165
    %v1513 = vunpack.c.l.b16 %v166
    %v1514 = vunpack.c.h.b16 %v166
    %v1515 = vunpack.c.l.b16 %v167
    %v1516 = vunpack.c.h.b16 %v167
    %v1517 = vunpack.c.l.b16 %v168
    %v1518 = vunpack.c.h.b16 %v168
    %v1519 = vunpack.c.l.b16 %v169
    %v1520 = vunpack.c.h.b16 %v169
    %v1521 = vunpack.c.l.b16 %v170
    %v1522 = vunpack.c.h.b16 %v170
    %v1523 = vunpack.c.l.b16 %v171
    %v1524 = vunpack.c.h.b16 %v171
    %v1525 = vunpack.c.l.b16 %v172
    %v1526 = vunpack.c.h.b16 %v172
    %v1527 = vunpack.c.l.b16 %v173
    %v1528 = vunpack.c.h.b16 %v173
    %v1529 = vunpack.c.l.b16 %v174
    %v1530 = vunpack.c.h.b16 %v174
    %v1531 = vunpack.c.l.b16 %v175
    %v1532 = vunpack.c.h.b16 %v175
    %v1533 = vunpack.c.l.b16 %v176
    %v1534 = vunpack.c.h.b16 %v176
    %v1535 = vunpack.c.l.b16 %v177
    %v1536 = vunpack.c.h.b16 %v177
    %v1537 = vunpack.c.l.b16 %v178
    %v1538 = vunpack.c.h.b16 %v178
    %v1539 = vunpack.c.l.b16 %v179
    %v1540 = vunpack.c.h.b16 %v179
    %v1541 = vunpack.c.l.b16 %v180
    %v1542 = vunpack.c.h.b16 %v180
    %v1543 = vunpack.c.l.b16 %v181
    %v1544 = vunpack.c.h.b16 %v181
    %v1545 = vunpack.c.l.b16 %v182
    %v1546 = vunpack.c.h.b16 %v182
    %v1547 = vunpack.c.l.b16 %v183
    %v1548 = vunpack.c.h.b16 %v183
    %v1549 = vunpack.c.l.b16 %v184
    %v1550 = vunpack.c.h.b16 %v184
    %v1551 = vunpack.c.l.b16 %v185
    %v1552 = vunpack.c.h.b16 %v185
    %v1553 = vunpack.c.l.b16 %v186
    %v1554 = vunpack.c.h.b16 %v186
    %v1555 = vunpack.c.l.b16 %v187
    %v1556 = vunpack.c.h.b16 %v187
    %v1557 = vunpack.c.l.b16 %v188
    %v1558 = vunpack.c.h.b16 %v188
    %v1559 = vunpack.c.l.b16 %v189
    %v1560 = vunpack.c.h.b16 %v189
    %v1561 = vunpack.c.l.b16 %v190
    %v1562 = vunpack.c.h.b16 %v190
    %v1563 = vunpack.c.l.b16 %v191
    %v1564 = vunpack.c.h.b16 %v191
    %v1565 = vunpack.c.l.b16 %v192
    %v1566 = vunpack.c.h.b16 %v192
    %v1567 = vunpack.c.l.b16 %v193
    %v1568 = vunpack.c.h.b16 %v193
    %v1569 = vunpack.c.l.b16 %v194
    %v1570 = vunpack.c.h.b16 %v194
    %v1571 = vunpack.c.l.b16 %v195
    %v1572 = vunpack.c.h.b16 %v195
    %v1573 = vunpack.c.l.b16 %v196
    %v1574 = vunpack.c.h.b16 %v196
    %v1575 = vunpack.c.l.b16 %v197
    %v1576 = vunpack.c.h.b16 %v197
    %v1577 = vunpack.c.l.b16 %v198
    %v1578 = vunpack.c.h.b16 %v198
    %v1579 = vunpack.c.l.b16 %v199
    %v1580 = vunpack.c.h.b16 %v199
    %v1581 = vunpack.c.l.b16 %v200
    %v1582 = vunpack.c.h.b16 %v200
    %v1583 = vunpack.c.l.b16 %v201
    %v1584 = vunpack.c.h.b16 %v201
    %v1585 = vunpack.c.l.b16 %v202
    %v1586 = vunpack.c.h.b16 %v202
    %v1587 = vunpack.c.l.b16 %v203
    %v1588 = vunpack.c.h.b16 %v203
    %v1589 = vunpack.c.l.b16 %v204
    %v1590 = vunpack.c.h.b16 %v204
    %v1591 = vunpack.c.l.b16 %v205
    %v1592 = vunpack.c.h.b16 %v205
    %v1593 = vunpack.c.l.b16 %v206
    %v1594 = vunpack.c.h.b16 %v206
    %v1595 = vunpack.c.l.b16 %v207
    %v1596 = vunpack.c.h.b16 %v207
    %v1597 = vunpack.c.l.b16 %v208
    %v1598 = vunpack.c.h.b16 %v208
    %v1599 = vunpack.c.l.b16 %v209
    %v1600 = vunpack.c.h.b16 %v209
    %v1601 = vunpack.c.l.b16 %v210
    %v1602 = vunpack.c.h.b16 %v210
    %v1603 = vunpack.c.l.b16 %v211
    %v1604 = vunpack.c.h.b16 %v211
    %v1605 = vunpack.c.l.b16 %v212
    %v1606 = vunpack.c.h.b16 %v212
    %v1607 = vunpack.c.l.b16 %v213
    %v1608 = vunpack.c.h.b16 %v213
    %v1609 = vunpack.c.l.b16 %v214
    %v1610 = vunpack.c.h.b16 %v214
    %v1611 = vunpack.c.l.b16 %v215
    %v1612 = vunpack.c.h.b16 %v215
    %v1613 = vunpack.c.l.b16 %v216
    %v1614 = vunpack.c.h.b16 %v216
    %v1615 = vunpack.c.l.b16 %v217
    %v1616 = vunpack.c.h.b16 %v217
    %v1617 = vunpack.c.l.b16 %v218
    %v1618 = vunpack.c.h.b16 %v218
    %v1619 = vunpack.c.l.b16 %v219
    %v1620 = vunpack.c.h.b16 %v219
    %v1621 = vunpack.c.l.b16 %v220
    %v1622 = vunpack.c.h.b16 %v220
    %v1623 = vunpack.c.l.b16 %v221
    %v1624 = vunpack.c.h.b16 %v221
    %v1625 = vunpack.c.l.b16 %v222
    %v1626 = vunpack.c.h.b16 %v222
    %v1627 = vunpack.c.l.b16 %v223
    %v1628 = vunpack.c.h.b16 %v223
    %v1629 = vunpack.c.l.b16 %v224
    %v1630 = vunpack.c.h.b16 %v224
    %v1631 = vunpack.c.l.b16 %v225
    %v1632 = vunpack.c.h.b16 %v225
    %v1633 = vunpack.c.l.b16 %v226
    %v1634 = vunpack.c.h.b16 %v226
    %v1635 = vunpack.c.l.b16 %v227
    %v1636 = vunpack.c.h.b16 %v227
    %v1637 = vunpack.c.l.b16 %v228
    %v1638 = vunpack.c.h.b16 %v228
    %v1639 = vunpack.c.l.b16 %v229
    %v1640 = vunpack.c.h.b16 %v229
    %v1641 = vunpack.c.l.b16 %v230
    %v1642 = vunpack.c.h.b16 %v230
    %v1643 = vunpack.c.l.b16 %v231
    %v1644 = vunpack.c.h.b16 %v231
    %v1645 = vunpack.c.l.b16 %v232
    %v1646 = vunpack.c.h.b16 %v232
    %v1647 = vunpack.c.l.b16 %v233
    %v1648 = vunpack.c.h.b16 %v233
    %v1649 = vunpack.c.l.b16 %v234
    %v1650 = vunpack.c.h.b16 %v234
    %v1651 = vunpack.c.l.b16 %v235
    %v1652 = vunpack.c.h.b16 %v235
    %v1653 = vunpack.c.l.b16 %v236
    %v1654 = vunpack.c.h.b16 %v236
    %v1655 = vunpack.c.l.b16 %v237
    %v1656 = vunpack.c.h.b16 %v237
    %v1657 = vunpack.c.l.b16 %v238
    %v1658 = vunpack.c.h.b16 %v238
    %v1659 = vunpack.c.l.b16 %v239
    %v1660 = vunpack.c.h.b16 %v239
    %v1661 = vunpack.c.l.b16 %v240
    %v1662 = vunpack.c.h.b16 %v240
    %v1663 = vunpack.c.l.b16 %v241
    %v1664 = vunpack.c.h.b16 %v241
    %v1665 = vunpack.c.l.b16 %v242
    %v1666 = vunpack.c.h.b16 %v242
    %v1667 = vunpack.c.l.b16 %v243
    %v1668 = vunpack.c.h.b16 %v243
    %v1669 = vunpack.c.l.b16 %v244
    %v1670 = vunpack.c.h.b16 %v244
    %v1671 = vunpack.c.l.b16 %v245
    %v1672 = vunpack.c.h.b16 %v245
    %v1673 = vunpack.c.l.b16 %v246
    %v1674 = vunpack.c.h.b16 %v246
    %v1675 = vunpack.c.l.b16 %v247
    %v1676 = vunpack.c.h.b16 %v247
    %v1677 = vunpack.c.l.b16 %v248
    %v1678 = vunpack.c.h.b16 %v248
    %v1679 = vunpack.c.l.b16 %v249
    %v1680 = vunpack.c.h.b16 %v249
    %v1681 = vunpack.c.l.b16 %v250
    %v1682 = vunpack.c.h.b16 %v250
    %v1683 = vunpack.c.l.b16 %v251
    %v1684 = vunpack.c.h.b16 %v251
    %v1685 = vunpack.c.l.b16 %v252
    %v1686 = vunpack.c.h.b16 %v252
    %v1687 = vunpack.c.l.b16 %v253
    %v1688 = vunpack.c.h.b16 %v253
    %v1689 = vunpack.c.l.b16 %v254
    %v1690 = vunpack.c.h.b16 %v254
    %v1691 = vunpack.c.l.b16 %v255
    %v1692 = vunpack.c.h.b16 %v255
    %v1693 = vunpack.c.l.b16 %v256
    %v1694 = vunpack.c.h.b16 %v256
    %v1695 = vunpack.c.l.b16 %v257
    %v1696 = vunpack.c.h.b16 %v257
    %v1697 = vunpack.c.l.b16 %v258
    %v1698 = vunpack.c.h.b16 %v258
    %v1699 = vunpack.c.l.b16 %v259
    %v1700 = vunpack.c.h.b16 %v259
    %v1701 = vunpack.c.l.b16 %v260
    %v1702 = vunpack.c.h.b16 %v260
    %v1703 = vunpack.c.l.b16 %v261
    %v1704 = vunpack.c.h.b16 %v261
    %v1705 = vunpack.c.l.b16 %v262
    %v1706 = vunpack.c.h.b16 %v262
    %v1707 = vunpack.c.l.b16 %v263
    %v1708 = vunpack.c.h.b16 %v263
    %v1709 = vunpack.c.l.b16 %v264
    %v1710 = vunpack.c.h.b16 %v264
    %v1711 = vunpack.c.l.b16 %v265
    %v1712 = vunpack.c.h.b16 %v265
    %v1713 = vunpack.c.l.b16 %v266
    %v1714 = vunpack.c.h.b16 %v266
    %v1715 = vunpack.c.l.b16 %v267
    %v1716 = vunpack.c.h.b16 %v267
    %v1717 = vunpack.c.l.b16 %v268
    %v1718 = vunpack.c.h.b16 %v268
    %v1719 = vunpack.c.l.b16 %v269
    %v1720 = vunpack.c.h.b16 %v269
    %v1721 = vunpack.c.l.b16 %v270
    %v1722 = vunpack.c.h.b16 %v270
    %v1723 = vunpack.c.l.b16 %v271
    %v1724 = vunpack.c.h.b16 %v271
    %v1725 = vunpack.c.l.b16 %v272
    %v1726 = vunpack.c.h.b16 %v272
    %v1727 = vunpack.c.l.b16 %v273
    %v1728 = vunpack.c.h.b16 %v273
    %v1729 = vunpack.c.l.b16 %v274
    %v1730 = vunpack.c.h.b16 %v274
    %v1731 = vunpack.c.l.b16 %v275
    %v1732 = vunpack.c.h.b16 %v275
    %v1733 = vunpack.c.l.b16 %v276
    %v1734 = vunpack.c.h.b16 %v276
    %v1735 = vunpack.c.l.b16 %v277
    %v1736 = vunpack.c.h.b16 %v277
    %v1737 = vunpack.c.l.b16 %v278
    %v1738 = vunpack.c.h.b16 %v278
    %v1739 = vunpack.c.l.b16 %v279
    %v1740 = vunpack.c.h.b16 %v279
    %v1741 = vunpack.c.l.b16 %v280
    %v1742 = vunpack.c.h.b16 %v280
    %v1743 = vunpack.c.l.b16 %v281
    %v1744 = vunpack.c.h.b16 %v281
    %v1745 = vunpack.c.l.b16 %v282
    %v1746 = vunpack.c.h.b16 %v282
    %v1747 = vunpack.c.l.b16 %v283
    %v1748 = vunpack.c.h.b16 %v283
    %v1749 = vunpack.c.l.b16 %v284
    %v1750 = vunpack.c.h.b16 %v284
    %v1751 = vunpack.c.l.b16 %v285
    %v1752 = vunpack.c.h.b16 %v285
    %v1753 = vunpack.c.l.b16 %v286
    %v1754 = vunpack.c.h.b16 %v286
    %v1755 = vunpack.c.l.b16 %v287
    %v1756 = vunpack.c.h.b16 %v287
    %v1757 = vunpack.c.l.b16 %v288
    %v1758 = vunpack.c.h.b16 %v288
    %v1759 = vunpack.c.l.b16 %v289
    %v1760 = vunpack.c.h.b16 %v289
    %v1761 = vunpack.c.l.b16 %v290
    %v1762 = vunpack.c.h.b16 %v290
    %v1763 = vunpack.c.l.b16 %v291
    %v1764 = vunpack.c.h.b16 %v291
    %v1765 = vunpack.c.l.b16 %v292
    %v1766 = vunpack.c.h.b16 %v292
    %v1767 = vunpack.c.l.b16 %v293
    %v1768 = vunpack.c.h.b16 %v293
    %v1769 = vunpack.c.l.b16 %v294
    %v1770 = vunpack.c.h.b16 %v294
    %v1771 = vunpack.c.l.b16 %v295
    %v1772 = vunpack.c.h.b16 %v295
    %v1773 = vunpack.c.l.b16 %v296
    %v1774 = vunpack.c.h.b16 %v296
    %v1775 = vunpack.c.l.b16 %v297
    %v1776 = vunpack.c.h.b16 %v297
    %v1777 = vunpack.c.l.b16 %v298
    %v1778 = vunpack.c.h.b16 %v298
    %v1779 = vunpack.c.l.b16 %v299
    %v1780 = vunpack.c.h.b16 %v299
    %v1781 = vunpack.c.l.b16 %v300
    %v1782 = vunpack.c.h.b16 %v300
    %v1783 = vunpack.c.l.b16 %v301
    %v1784 = vunpack.c.h.b16 %v301
    %v1785 = vunpack.c.l.b16 %v302
    %v1786 = vunpack.c.h.b16 %v302
    %v1787 = vunpack.c.l.b16 %v303
    %v1788 = vunpack.c.h.b16 %v303
    %v1789 = vunpack.c.l.b16 %v304
    %v1790 = vunpack.c.h.b16 %v304
    %v1791 = vunpack.c.l.b16 %v305
    %v1792 = vunpack.c.h.b16 %v305
    %v1793 = vunpack.c.l.b16 %v306
    %v1794 = vunpack.c.h.b16 %v306
    %v1795 = vunpack.c.l.b16 %v307
    %v1796 = vunpack.c.h.b16 %v307
    %v1797 = vunpack.c.l.b16 %v308
    %v1798 = vunpack.c.h.b16 %v308
    %v1799 = vunpack.c.l.b16 %v309
    %v1800 = vunpack.c.h.b16 %v309
    %v1801 = vunpack.c.l.b16 %v310
    %v1802 = vunpack.c.h.b16 %v310
    %v1803 = vunpack.c.l.b16 %v311
    %v1804 = vunpack.c.h.b16 %v311
    %v1805 = vunpack.c.l.b16 %v312
    %v1806 = vunpack.c.h.b16 %v312
    %v1807 = vunpack.c.l.b16 %v313
    %v1808 = vunpack.c.h.b16 %v313
    %v1809 = vunpack.c.l.b16 %v314
    %v1810 = vunpack.c.h.b16 %v314
    %v1811 = vunpack.c.l.b16 %v315
    %v1812 = vunpack.c.h.b16 %v315
    %v1813 = vunpack.c.l.b16 %v316
    %v1814 = vunpack.c.h.b16 %v316
    %v1815 = vunpack.c.l.b16 %v317
    %v1816 = vunpack.c.h.b16 %v317
    %v1817 = vunpack.c.l.b16 %v318
    %v1818 = vunpack.c.h.b16 %v318
    %v1819 = vunpack.c.l.b16 %v319
    %v1820 = vunpack.c.h.b16 %v319
    %v1821 = vunpack.c.l.b16 %v320
    %v1822 = vunpack.c.h.b16 %v320
    %v1823 = vunpack.c.l.b16 %v321
    %v1824 = vunpack.c.h.b16 %v321
    %v1825 = vunpack.c.l.b16 %v322
    %v1826 = vunpack.c.h.b16 %v322
    %v1827 = vunpack.c.l.b16 %v323
    %v1828 = vunpack.c.h.b16 %v323
    %v1829 = vunpack.c.l.b16 %v324
    %v1830 = vunpack.c.h.b16 %v324
    %v1831 = vunpack.c.l.b16 %v325
    %v1832 = vunpack.c.h.b16 %v325
    %v1833 = vunpack.c.l.b16 %v326
    %v1834 = vunpack.c.h.b16 %v326
    %v1835 = vunpack.c.l.b16 %v327
    %v1836 = vunpack.c.h.b16 %v327
    %v1837 = vunpack.c.l.b16 %v328
    %v1838 = vunpack.c.h.b16 %v328
    %v1839 = vunpack.c.l.b16 %v329
    %v1840 = vunpack.c.h.b16 %v329
    %v1841 = vunpack.c.l.b16 %v330
    %v1842 = vunpack.c.h.b16 %v330
    %v1843 = vunpack.c.l.b16 %v331
    %v1844 = vunpack.c.h.b16 %v331
    %v1845 = vunpack.c.l.b16 %v332
    %v1846 = vunpack.c.h.b16 %v332
    %v1847 = vunpack.c.l.b16 %v333
    %v1848 = vunpack.c.h.b16 %v333
    %v1849 = vunpack.c.l.b16 %v334
    %v1850 = vunpack.c.h.b16 %v334
    %v1851 = vunpack.c.l.b16 %v335
    %v1852 = vunpack.c.h.b16 %v335
    %v1853 = vunpack.c.l.b16 %v336
    %v1854 = vunpack.c.h.b16 %v336
    %v1855 = vunpack.c.l.b16 %v337
    %v1856 = vunpack.c.h.b16 %v337
    %v1857 = vunpack.c.l.b16 %v338
    %v1858 = vunpack.c.h.b16 %v338
    %v1859 = vunpack.c.l.b16 %v339
    %v1860 = vunpack.c.h.b16 %v339
    %v1861 = vunpack.c.l.b16 %v340
    %v1862 = vunpack.c.h.b16 %v340
    %v1863 = vunpack.c.l.b16 %v341
    %v1864 = vunpack.c.h.b16 %v341
    %v1865 = vunpack.c.l.b16 %v342
    %v1866 = vunpack.c.h.b16 %v342
    %v1867 = vunpack.c.l.b16 %v343
    %v1868 = vunpack.c.h.b16 %v343
    %v1869 = vunpack.c.l.b16 %v344
    %v1870 = vunpack.c.h.b16 %v344
    %v1871 = vunpack.c.l.b16 %v345
    %v1872 = vunpack.c.h.b16 %v345
    %v1873 = vunpack.c.l.b16 %v346
    %v1874 = vunpack.c.h.b16 %v346
    %v1875 = vunpack.c.l.b16 %v347
    %v1876 = vunpack.c.h.b16 %v347
    %v1877 = vunpack.c.l.b16 %v348
    %v1878 = vunpack.c.h.b16 %v348
    %v1879 = vunpack.c.l.b16 %v349
    %v1880 = vunpack.c.h.b16 %v349
    %v1881 = vunpack.c.l.b16 %v350
    %v1882 = vunpack.c.h.b16 %v350
    %v1883 = vunpack.c.l.b16 %v351
    %v1884 = vunpack.c.h.b16 %v351
    %v1885 = vunpack.c.l.b16 %v352
    %v1886 = vunpack.c.h.b16 %v352
    %v1887 = vunpack.c.l.b16 %v353
    %v1888 = vunpack.c.h.b16 %v353
    %v1889 = vunpack.c.l.b16 %v354
    %v1890 = vunpack.c.h.b16 %v354
    %v1891 = vunpack.c.l.b16 %v355
    %v1892 = vunpack.c.h.b16 %v355
    %v1893 = vunpack.c.l.b16 %v356
    %v1894 = vunpack.c.h.b16 %v356
    %v1895 = vunpack.c.l.b16 %v357
    %v1896 = vunpack.c.h.b16 %v357
    %v1897 = vunpack.c.l.b16 %v358
    %v1898 = vunpack.c.h.b16 %v358
    %v1899 = vunpack.c.l.b16 %v359
    %v1900 = vunpack.c.h.b16 %v359
    %v1901 = vunpack.c.l.b16 %v360
    %v1902 = vunpack.c.h.b16 %v360
    %v1903 = vunpack.c.l.b16 %v361
    %v1904 = vunpack.c.h.b16 %v361
    %v1905 = vunpack.c.l.b16 %v362
    %v1906 = vunpack.c.h.b16 %v362
    %v1907 = vunpack.c.l.b16 %v363
    %v1908 = vunpack.c.h.b16 %v363
    %v1909 = vunpack.c.l.b16 %v364
    %v1910 = vunpack.c.h.b16 %v364
    %v1911 = vunpack.c.l.b16 %v365
    %v1912 = vunpack.c.h.b16 %v365
    %v1913 = vunpack.c.l.b16 %v366
    %v1914 = vunpack.c.h.b16 %v366
    %v1915 = vunpack.c.l.b16 %v367
    %v1916 = vunpack.c.h.b16 %v367
    %v1917 = vunpack.c.l.b16 %v368
    %v1918 = vunpack.c.h.b16 %v368
    %v1919 = vunpack.c.l.b16 %v369
    %v1920 = vunpack.c.h.b16 %v369
    %v1921 = vunpack.c.l.b16 %v370
    %v1922 = vunpack.c.h.b16 %v370
    %v1923 = vunpack.c.l.b16 %v371
    %v1924 = vunpack.c.h.b16 %v371
    %v1925 = vunpack.c.l.b16 %v372
    %v1926 = vunpack.c.h.b16 %v372
    %v1927 = vunpack.c.l.b16 %v373
    %v1928 = vunpack.c.h.b16 %v373
    %v1929 = vunpack.c.l.b16 %v374
    %v1930 = vunpack.c.h.b16 %v374
    %v1931 = vunpack.c.l.b16 %v375
    %v1932 = vunpack.c.h.b16 %v375
    %v1933 = vunpack.c.l.b16 %v376
    %v1934 = vunpack.c.h.b16 %v376
    %v1935 = vunpack.c.l.b16 %v377
    %v1936 = vunpack.c.h.b16 %v377
    %v1937 = vunpack.c.l.b16 %v378
    %v1938 = vunpack.c.h.b16 %v378
    %v1939 = vunpack.c.l.b16 %v379
    %v1940 = vunpack.c.h.b16 %v379
    %v1941 = vunpack.c.l.b16 %v380
    %v1942 = vunpack.c.h.b16 %v380
    %v1943 = vunpack.c.l.b16 %v381
    %v1944 = vunpack.c.h.b16 %v381
    %v1945 = vunpack.c.l.b16 %v382
    %v1946 = vunpack.c.h.b16 %v382
    %v1947 = vunpack.c.l.b16 %v383
    %v1948 = vunpack.c.h.b16 %v383
    %v1949 = vunpack.c.l.b16 %v384
    %v1950 = vunpack.c.h.b16 %v384
    %v1951 = vunpack.c.l.b16 %v385
    %v1952 = vunpack.c.h.b16 %v385
    %v1953 = vunpack.c.l.b16 %v386
    %v1954 = vunpack.c.h.b16 %v386
    %v1955 = vunpack.c.l.b16 %v387
    %v1956 = vunpack.c.h.b16 %v387
    %v1957 = vunpack.c.l.b16 %v388
    %v1958 = vunpack.c.h.b16 %v388
    %v1959 = vunpack.c.l.b16 %v389
    %v1960 = vunpack.c.h.b16 %v389
    %v1961 = vunpack.c.l.b16 %v390
    %v1962 = vunpack.c.h.b16 %v390
    %v1963 = vunpack.c.l.b16 %v391
    %v1964 = vunpack.c.h.b16 %v391
    %v1965 = vunpack.c.l.b16 %v392
    %v1966 = vunpack.c.h.b16 %v392
    %v1967 = vunpack.c.l.b16 %v393
    %v1968 = vunpack.c.h.b16 %v393
    %v1969 = vunpack.c.l.b16 %v394
    %v1970 = vunpack.c.h.b16 %v394
    %v1971 = vunpack.c.l.b16 %v395
    %v1972 = vunpack.c.h.b16 %v395
    %v1973 = vunpack.c.l.b16 %v396
    %v1974 = vunpack.c.h.b16 %v396
    %v1975 = vunpack.c.l.b16 %v397
    %v1976 = vunpack.c.h.b16 %v397
    %v1977 = vunpack.c.l.b16 %v398
    %v1978 = vunpack.c.h.b16 %v398
    %v1979 = vunpack.c.l.b16 %v399
    %v1980 = vunpack.c.h.b16 %v399
    %v1981 = vunpack.c.l.b16 %v400
    %v1982 = vunpack.c.h.b16 %v400
    %v1983 = vunpack.c.l.b16 %v401
    %v1984 = vunpack.c.h.b16 %v401
    %v1985 = vunpack.c.l.b16 %v402
    %v1986 = vunpack.c.h.b16 %v402
    %v1987 = vunpack.c.l.b16 %v403
    %v1988 = vunpack.c.h.b16 %v403
    %v1989 = vunpack.c.l.b16 %v404
    %v1990 = vunpack.c.h.b16 %v404
    %v1991 = vunpack.c.l.b16 %v405
    %v1992 = vunpack.c.h.b16 %v405
    %v1993 = vunpack.c.l.b16 %v406
    %v1994 = vunpack.c.h.b16 %v406
    %v1995 = vunpack.c.l.b16 %v407
    %v1996 = vunpack.c.h.b16 %v407
    %v1997 = vunpack.c.l.b16 %v408
    %v1998 = vunpack.c.h.b16 %v408
    %v1999 = vunpack.c.l.b16 %v409
    %v2000 = vunpack.c.h.b16 %v409
    %v2001 = vunpack.c.l.b16 %v410
    %v2002 = vunpack.c.h.b16 %v410
    %v2003 = vunpack.c.l.b16 %v411
    %v2004 = vunpack.c.h.b16 %v411
    %v2005 = vunpack.c.l.b16 %v412
    %v2006 = vunpack.c.h.b16 %v412
    %v2007 = vunpack.c.l.b16 %v413
    %v2008 = vunpack.c.h.b16 %v413
    %v2009 = vunpack.c.l.b16 %v414
    %v2010 = vunpack.c.h.b16 %v414
    %v2011 = vunpack.c.l.b16 %v415
    %v2012 = vunpack.c.h.b16 %v415
    %v2013 = vunpack.c.l.b16 %v416
    %v2014 = vunpack.c.h.b16 %v416
    %v2015 = vunpack.c.l.b16 %v417
    %v2016 = vunpack.c.h.b16 %v417
    %v2017 = vunpack.c.l.b16 %v418
    %v2018 = vunpack.c.h.b16 %v418
    %v2019 = vunpack.c.l.b16 %v419
    %v2020 = vunpack.c.h.b16 %v419
    %v2021 = vunpack.c.l.b16 %v420
    %v2022 = vunpack.c.h.b16 %v420
    %v2023 = vunpack.c.l.b16 %v421
    %v2024 = vunpack.c.h.b16 %v421
    %v2025 = vunpack.c.l.b16 %v422
    %v2026 = vunpack.c.h.b16 %v422
    %v2027 = vunpack.c.l.b16 %v423
    %v2028 = vunpack.c.h.b16 %v423
    %v2029 = vunpack.c.l.b16 %v424
    %v2030 = vunpack.c.h.b16 %v424
    %v2031 = vunpack.c.l.b16 %v425
    %v2032 = vunpack.c.h.b16 %v425
    %v2033 = vunpack.c.l.b16 %v426
    %v2034 = vunpack.c.h.b16 %v426
    %v2035 = vunpack.c.l.b16 %v427
    %v2036 = vunpack.c.h.b16 %v427
    %v2037 = vunpack.c.l.b16 %v428
    %v2038 = vunpack.c.h.b16 %v428
    %v2039 = vunpack.c.l.b16 %v429
    %v2040 = vunpack.c.h.b16 %v429
    %v2041 = vunpack.c.l.b16 %v430
    %v2042 = vunpack.c.h.b16 %v430
    %v2043 = vunpack.c.l.b16 %v431
    %v2044 = vunpack.c.h.b16 %v431
    %v2045 = vunpack.c.l.b16 %v432
    %v2046 = vunpack.c.h.b16 %v432
    %v2047 = vunpack.c.l.b16 %v433
    %v2048 = vunpack.c.h.b16 %v433
    %v2049 = vunpack.c.l.b16 %v434
    %v2050 = vunpack.c.h.b16 %v434
    %v2051 = vunpack.c.l.b16 %v435
    %v2052 = vunpack.c.h.b16 %v435
    %v2053 = vunpack.c.l.b16 %v436
    %v2054 = vunpack.c.h.b16 %v436
    %v2055 = vunpack.c.l.b16 %v437
    %v2056 = vunpack.c.h.b16 %v437
    %v2057 = vunpack.c.l.b16 %v438
    %v2058 = vunpack.c.h.b16 %v438
    %v2059 = vunpack.c.l.b16 %v439
    %v2060 = vunpack.c.h.b16 %v439
    %v2061 = vunpack.c.l.b16 %v440
    %v2062 = vunpack.c.h.b16 %v440
    %v2063 = vunpack.c.l.b16 %v441
    %v2064 = vunpack.c.h.b16 %v441
    %v2065 = vunpack.c.l.b16 %v442
    %v2066 = vunpack.c.h.b16 %v442
    %v2067 = vunpack.c.l.b16 %v443
    %v2068 = vunpack.c.h.b16 %v443
    %v2069 = vunpack.c.l.b16 %v444
    %v2070 = vunpack.c.h.b16 %v444
    %v2071 = vunpack.c.l.b16 %v445
    %v2072 = vunpack.c.h.b16 %v445
    %v2073 = vunpack.c.l.b16 %v446
    %v2074 = vunpack.c.h.b16 %v446
    %v2075 = vunpack.c.l.b16 %v447
    %v2076 = vunpack.c.h.b16 %v447
    %v2077 = vunpack.c.l.b16 %v448
    %v2078 = vunpack.c.h.b16 %v448
    %v2079 = vunpack.c.l.b16 %v449
    %v2080 = vunpack.c.h.b16 %v449
    %v2081 = vunpack.c.l.b16 %v450
    %v2082 = vunpack.c.h.b16 %v450
    %v2083 = vunpack.c.l.b16 %v451
    %v2084 = vunpack.c.h.b16 %v451
    %v2085 = vunpack.c.l.b16 %v452
    %v2086 = vunpack.c.h.b16 %v452
    %v2087 = vunpack.c.l.b16 %v453
    %v2088 = vunpack.c.h.b16 %v453
    %v2089 = vunpack.c.l.b16 %v454
    %v2090 = vunpack.c.h.b16 %v454
    %v2091 = vunpack.c.l.b16 %v455
    %v2092 = vunpack.c.h.b16 %v455
    %v2093 = vunpack.c.l.b16 %v456
    %v2094 = vunpack.c.h.b16 %v456
    %v2095 = vunpack.c.l.b16 %v457
    %v2096 = vunpack.c.h.b16 %v457
    %v2097 = vunpack.c.l.b16 %v458
    %v2098 = vunpack.c.h.b16 %v458
    %v2099 = vunpack.c.l.b16 %v459
    %v2100 = vunpack.c.h.b16 %v459
    %v2101 = vunpack.c.l.b16 %v460
    %v2102 = vunpack.c.h.b16 %v460
    %v2103 = vunpack.c.l.b16 %v461
    %v2104 = vunpack.c.h.b16 %v461
    %v2105 = vunpack.c.l.b16 %v462
    %v2106 = vunpack.c.h.b16 %v462
    %v2107 = vunpack.c.l.b16 %v463
    %v2108 = vunpack.c.h.b16 %v463
    %v2109 = vunpack.c.l.b16 %v464
    %v2110 = vunpack.c.h.b16 %v464
    %v2111 = vunpack.c.l.b16 %v465
    %v2112 = vunpack.c.h.b16 %v465
    %v2113 = vunpack.c.l.b16 %v466
    %v2114 = vunpack.c.h.b16 %v466
    %v2115 = vunpack.c.l.b16 %v467
    %v2116 = vunpack.c.h.b16 %v467
    %v2117 = vunpack.c.l.b16 %v468
    %v2118 = vunpack.c.h.b16 %v468
    %v2119 = vunpack.c.l.b16 %v469
    %v2120 = vunpack.c.h.b16 %v469
    %v2121 = vunpack.c.l.b16 %v470
    %v2122 = vunpack.c.h.b16 %v470
    %v2123 = vunpack.c.l.b16 %v471
    %v2124 = vunpack.c.h.b16 %v471
    %v2125 = vunpack.c.l.b16 %v472
    %v2126 = vunpack.c.h.b16 %v472
    %v2127 = vunpack.c.l.b16 %v473
    %v2128 = vunpack.c.h.b16 %v473
    %v2129 = vunpack.c.l.b16 %v474
    %v2130 = vunpack.c.h.b16 %v474
    %v2131 = vunpack.c.l.b16 %v475
    %v2132 = vunpack.c.h.b16 %v475
    %v2133 = vunpack.c.l.b16 %v476
    %v2134 = vunpack.c.h.b16 %v476
    %v2135 = vunpack.c.l.b16 %v477
    %v2136 = vunpack.c.h.b16 %v477
    %v2137 = vunpack.c.l.b16 %v478
    %v2138 = vunpack.c.h.b16 %v478
    %v2139 = vunpack.c.l.b16 %v479
    %v2140 = vunpack.c.h.b16 %v479
    %v2141 = vunpack.c.l.b16 %v480
    %v2142 = vunpack.c.h.b16 %v480
    %v2143 = vunpack.c.l.b16 %v481
    %v2144 = vunpack.c.h.b16 %v481
    %v2145 = vunpack.c.l.b16 %v482
    %v2146 = vunpack.c.h.b16 %v482
    %v2147 = vunpack.c.l.b16 %v483
    %v2148 = vunpack.c.h.b16 %v483
    %v2149 = vunpack.c.l.b16 %v484
    %v2150 = vunpack.c.h.b16 %v484
    %v2151 = vunpack.c.l.b16 %v485
    %v2152 = vunpack.c.h.b16 %v485
    %v2153 = vunpack.c.l.b16 %v486
    %v2154 = vunpack.c.h.b16 %v486
    %v2155 = vunpack.c.l.b16 %v487
    %v2156 = vunpack.c.h.b16 %v487
    %v2157 = vunpack.c.l.b16 %v488
    %v2158 = vunpack.c.h.b16 %v488
    %v2159 = vunpack.c.l.b16 %v489
    %v2160 = vunpack.c.h.b16 %v489
    %v2161 = vunpack.c.l.b16 %v490
    %v2162 = vunpack.c.h.b16 %v490
    %v2163 = vunpack.c.l.b16 %v491
    %v2164 = vunpack.c.h.b16 %v491
    %v2165 = vunpack.c.l.b16 %v492
    %v2166 = vunpack.c.h.b16 %v492
    %v2167 = vunpack.c.l.b16 %v493
    %v2168 = vunpack.c.h.b16 %v493
    %v2169 = vunpack.c.l.b16 %v494
    %v2170 = vunpack.c.h.b16 %v494
    %v2171 = vunpack.c.l.b16 %v495
    %v2172 = vunpack.c.h.b16 %v495
    %v2173 = vunpack.c.l.b16 %v496
    %v2174 = vunpack.c.h.b16 %v496
    %v2175 = vunpack.c.l.b16 %v497
    %v2176 = vunpack.c.h.b16 %v497
    %v2177 = vunpack.c.l.b16 %v498
    %v2178 = vunpack.c.h.b16 %v498
    %v2179 = vunpack.c.l.b16 %v499
    %v2180 = vunpack.c.h.b16 %v499
    %v2181 = vunpack.c.l.b16 %v500
    %v2182 = vunpack.c.h.b16 %v500
    %v2183 = vunpack.c.l.b16 %v501
    %v2184 = vunpack.c.h.b16 %v501
    %v2185 = vunpack.c.l.b16 %v502
    %v2186 = vunpack.c.h.b16 %v502
    %v2187 = vunpack.c.l.b16 %v503
    %v2188 = vunpack.c.h.b16 %v503
    %v2189 = vunpack.c.l.b16 %v504
    %v2190 = vunpack.c.h.b16 %v504
    %v2191 = vunpack.c.l.b16 %v505
    %v2192 = vunpack.c.h.b16 %v505
    %v2193 = vunpack.c.l.b16 %v506
    %v2194 = vunpack.c.h.b16 %v506
    %v2195 = vunpack.c.l.b16 %v507
    %v2196 = vunpack.c.h.b16 %v507
    %v2197 = vunpack.c.l.b16 %v508
    %v2198 = vunpack.c.h.b16 %v508
    %v2199 = vunpack.c.l.b16 %v509
    %v2200 = vunpack.c.h.b16 %v509
    %v2201 = vunpack.c.l.b16 %v510
    %v2202 = vunpack.c.h.b16 %v510
    %v2203 = vunpack.c.l.b16 %v511
    %v2204 = vunpack.c.h.b16 %v511
    %v2205 = vunpack.c.l.b16 %v512
    %v2206 = vunpack.c.h.b16 %v512
    %v2207 = vunpack.c.l.b16 %v513
    %v2208 = vunpack.c.h.b16 %v513
    %v2209 = vunpack.c.l.b16 %v514
    %v2210 = vunpack.c.h.b16 %v514
    %v2211 = vunpack.c.l.b16 %v515
    %v2212 = vunpack.c.h.b16 %v515
    %v2213 = vunpack.c.l.b16 %v516
    %v2214 = vunpack.c.h.b16 %v516
    %v2215 = vunpack.c.l.b16 %v517
    %v2216 = vunpack.c.h.b16 %v517
    %v2217 = vunpack.c.l.b16 %v518
    %v2218 = vunpack.c.h.b16 %v518
    %v2219 = vunpack.c.l.b16 %v519
    %v2220 = vunpack.c.h.b16 %v519
    %v2221 = vunpack.c.l.b16 %v520
    %v2222 = vunpack.c.h.b16 %v520
    %v2223 = vunpack.c.l.b16 %v521
    %v2224 = vunpack.c.h.b16 %v521
    %v2225 = vunpack.c.l.b16 %v522
    %v2226 = vunpack.c.h.b16 %v522
    %v2227 = vunpack.c.l.b16 %v523
    %v2228 = vunpack.c.h.b16 %v523
    %v2229 = vunpack.c.l.b16 %v524
    %v2230 = vunpack.c.h.b16 %v524
    %v2231 = vunpack.c.l.b16 %v525
    %v2232 = vunpack.c.h.b16 %v525
    %v2233 = vunpack.c.l.b16 %v526
    %v2234 = vunpack.c.h.b16 %v526
    %v2235 = vunpack.c.l.b16 %v527
    %v2236 = vunpack.c.h.b16 %v527
    %v2237 = vunpack.c.l.b16 %v528
    %v2238 = vunpack.c.h.b16 %v528
    %v2239 = vunpack.c.l.b16 %v529
    %v2240 = vunpack.c.h.b16 %v529
    %v2241 = vunpack.c.l.b16 %v530
    %v2242 = vunpack.c.h.b16 %v530
    %v2243 = vunpack.c.l.b16 %v531
    %v2244 = vunpack.c.h.b16 %v531
    %v2245 = vunpack.c.l.b16 %v532
    %v2246 = vunpack.c.h.b16 %v532
    %v2247 = vunpack.c.l.b16 %v533
    %v2248 = vunpack.c.h.b16 %v533
    %v2249 = vunpack.c.l.b16 %v534
    %v2250 = vunpack.c.h.b16 %v534
    %v2251 = vunpack.c.l.b16 %v535
    %v2252 = vunpack.c.h.b16 %v535
    %v2253 = vunpack.c.l.b16 %v536
    %v2254 = vunpack.c.h.b16 %v536
    %v2255 = vunpack.c.l.b16 %v537
    %v2256 = vunpack.c.h.b16 %v537
    %v2257 = vunpack.c.l.b16 %v538
    %v2258 = vunpack.c.h.b16 %v538
    %v2259 = vunpack.c.l.b16 %v539
    %v2260 = vunpack.c.h.b16 %v539
    %v2261 = vunpack.c.l.b16 %v540
    %v2262 = vunpack.c.h.b16 %v540
    %v2263 = vunpack.c.l.b16 %v541
    %v2264 = vunpack.c.h.b16 %v541
    %v2265 = vunpack.c.l.b16 %v542
    %v2266 = vunpack.c.h.b16 %v542
    %v2267 = vunpack.c.l.b16 %v543
    %v2268 = vunpack.c.h.b16 %v543
    %v2269 = vunpack.c.l.b16 %v544
    %v2270 = vunpack.c.h.b16 %v544
    %v2271 = vunpack.c.l.b16 %v545
    %v2272 = vunpack.c.h.b16 %v545
    %v2273 = vunpack.c.l.b16 %v546
    %v2274 = vunpack.c.h.b16 %v546
    %v2275 = vunpack.c.l.b16 %v547
    %v2276 = vunpack.c.h.b16 %v547
    %v2277 = vunpack.c.l.b16 %v548
    %v2278 = vunpack.c.h.b16 %v548
    %v2279 = vunpack.c.l.b16 %v549
    %v2280 = vunpack.c.h.b16 %v549
    %v2281 = vunpack.c.l.b16 %v550
    %v2282 = vunpack.c.h.b16 %v550
    %v2283 = vunpack.c.l.b16 %v551
    %v2284 = vunpack.c.h.b16 %v551
    %v2285 = vunpack.c.l.b16 %v552
    %v2286 = vunpack.c.h.b16 %v552
    %v2287 = vunpack.c.l.b16 %v553
    %v2288 = vunpack.c.h.b16 %v553
    %v2289 = vunpack.c.l.b16 %v554
    %v2290 = vunpack.c.h.b16 %v554
    %v2291 = vunpack.c.l.b16 %v555
    %v2292 = vunpack.c.h.b16 %v555
    %v2293 = vunpack.c.l.b16 %v556
    %v2294 = vunpack.c.h.b16 %v556
    %v2295 = vunpack.c.l.b16 %v557
    %v2296 = vunpack.c.h.b16 %v557
    %v2297 = vunpack.c.l.b16 %v558
    %v2298 = vunpack.c.h.b16 %v558
    %v2299 = vunpack.c.l.b16 %v559
    %v2300 = vunpack.c.h.b16 %v559
    %v2301 = vunpack.c.l.b16 %v560
    %v2302 = vunpack.c.h.b16 %v560
    %v2303 = vunpack.c.l.b16 %v561
    %v2304 = vunpack.c.h.b16 %v561
    %v2305 = vunpack.c.l.b16 %v562
    %v2306 = vunpack.c.h.b16 %v562
    %v2307 = vunpack.c.l.b16 %v563
    %v2308 = vunpack.c.h.b16 %v563
    %v2309 = vunpack.c.l.b16 %v564
    %v2310 = vunpack.c.h.b16 %v564
    %v2311 = vunpack.c.l.b16 %v565
    %v2312 = vunpack.c.h.b16 %v565
    %v2313 = vunpack.c.l.b16 %v566
    %v2314 = vunpack.c.h.b16 %v566
    %v2315 = vunpack.c.l.b16 %v567
    %v2316 = vunpack.c.h.b16 %v567
    %v2317 = vunpack.c.l.b16 %v568
    %v2318 = vunpack.c.h.b16 %v568
    %v2319 = vunpack.c.l.b16 %v569
    %v2320 = vunpack.c.h.b16 %v569
    %v2321 = vunpack.c.l.b16 %v570
    %v2322 = vunpack.c.h.b16 %v570
    %v2323 = vunpack.c.l.b16 %v571
    %v2324 = vunpack.c.h.b16 %v571
    %v2325 = vunpack.c.l.b16 %v572
    %v2326 = vunpack.c.h.b16 %v572
    %v2327 = vunpack.c.l.b16 %v573
    %v2328 = vunpack.c.h.b16 %v573
    %v2329 = vunpack.c.l.b16 %v574
    %v2330 = vunpack.c.h.b16 %v574
    %v2331 = vunpack.c.l.b16 %v575
    %v2332 = vunpack.c.h.b16 %v575
    %v2333 = vunpack.c.l.b16 %v576
    %v2334 = vunpack.c.h.b16 %v576
    %v2335 = vunpack.c.l.b16 %v577
    %v2336 = vunpack.c.h.b16 %v577
    %v2337 = vunpack.c.l.b16 %v578
    %v2338 = vunpack.c.h.b16 %v578
    %v2339 = vunpack.c.l.b16 %v579
    %v2340 = vunpack.c.h.b16 %v579
    %v2341 = vunpack.c.l.b16 %v580
    %v2342 = vunpack.c.h.b16 %v580
    %v2343 = vunpack.c.l.b16 %v581
    %v2344 = vunpack.c.h.b16 %v581
    %v2345 = vunpack.c.l.b16 %v582
    %v2346 = vunpack.c.h.b16 %v582
    %v2347 = vunpack.c.l.b16 %v583
    %v2348 = vunpack.c.h.b16 %v583
    %v2349 = vunpack.c.l.b16 %v584
    %v2350 = vunpack.c.h.b16 %v584
    %v2351 = vunpack.c.l.b16 %v585
    %v2352 = vunpack.c.h.b16 %v585
    %v2353 = vunpack.c.l.b16 %v586
    %v2354 = vunpack.c.h.b16 %v586
    %v2355 = vunpack.c.l.b16 %v587
    %v2356 = vunpack.c.h.b16 %v587
    %v2357 = vunpack.c.l.b16 %v588
    %v2358 = vunpack.c.h.b16 %v588
    %v2359 = vunpack.c.l.b16 %v589
    %v2360 = vunpack.c.h.b16 %v589
    %v2361 = vunpack.c.l.b16 %v590
    %v2362 = vunpack.c.h.b16 %v590
    %v2363 = vunpack.c.l.b16 %v591
    %v2364 = vunpack.c.h.b16 %v591
    %v2365 = vunpack.c.l.b16 %v592
    %v2366 = vunpack.c.h.b16 %v592
    %v2367 = vunpack.c.l.b16 %v593
    %v2368 = vunpack.c.h.b16 %v593
    %v2369 = vunpack.c.l.b16 %v594
    %v2370 = vunpack.c.h.b16 %v594
    %v2371 = vunpack.c.l.b16 %v595
    %v2372 = vunpack.c.h.b16 %v595
    %v2373 = vunpack.c.l.b16 %v596
    %v2374 = vunpack.c.h.b16 %v596
    %v2375 = vunpack.c.l.b16 %v597
    %v2376 = vunpack.c.h.b16 %v597
    %v2377 = vunpack.c.l.b16 %v598
    %v2378 = vunpack.c.h.b16 %v598
    %v2379 = vunpack.c.l.b16 %v599
    %v2380 = vunpack.c.h.b16 %v599
    %v2381 = vunpack.c.l.b16 %v600
    %v2382 = vunpack.c.h.b16 %v600
    %v2383 = vunpack.c.l.b16 %v601
    %v2384 = vunpack.c.h.b16 %v601
    %v2385 = vunpack.c.l.b16 %v602
    %v2386 = vunpack.c.h.b16 %v602
    %v2387 = vunpack.c.l.b16 %v603
    %v2388 = vunpack.c.h.b16 %v603
    %v2389 = vunpack.c.l.b16 %v604
    %v2390 = vunpack.c.h.b16 %v604
    %v2391 = vunpack.c.l.b16 %v605
    %v2392 = vunpack.c.h.b16 %v605
    %v2393 = vunpack.c.l.b16 %v606
    %v2394 = vunpack.c.h.b16 %v606
    %v2395 = vunpack.c.l.b16 %v607
    %v2396 = vunpack.c.h.b16 %v607
    %v2397 = vunpack.c.l.b16 %v608
    %v2398 = vunpack.c.h.b16 %v608
    %v2399 = vunpack.c.l.b16 %v609
    %v2400 = vunpack.c.h.b16 %v609
    %v2401 = vunpack.c.l.b16 %v610
    %v2402 = vunpack.c.h.b16 %v610
    %v2403 = vunpack.c.l.b16 %v611
    %v2404 = vunpack.c.h.b16 %v611
    %v2405 = vunpack.c.l.b16 %v612
    %v2406 = vunpack.c.h.b16 %v612
    %v2407 = vunpack.c.l.b16 %v613
    %v2408 = vunpack.c.h.b16 %v613
    %v2409 = vunpack.c.l.b16 %v614
    %v2410 = vunpack.c.h.b16 %v614
    %v2411 = vunpack.c.l.b16 %v615
    %v2412 = vunpack.c.h.b16 %v615
    %v2413 = vunpack.c.l.b16 %v616
    %v2414 = vunpack.c.h.b16 %v616
    %v2415 = vunpack.c.l.b16 %v617
    %v2416 = vunpack.c.h.b16 %v617
    %v2417 = vunpack.c.l.b16 %v618
    %v2418 = vunpack.c.h.b16 %v618
    %v2419 = vunpack.c.l.b16 %v619
    %v2420 = vunpack.c.h.b16 %v619
    %v2421 = vunpack.c.l.b16 %v620
    %v2422 = vunpack.c.h.b16 %v620
    %v2423 = vunpack.c.l.b16 %v621
    %v2424 = vunpack.c.h.b16 %v621
    %v2425 = vunpack.c.l.b16 %v622
    %v2426 = vunpack.c.h.b16 %v622
    %v2427 = vunpack.c.l.b16 %v623
    %v2428 = vunpack.c.h.b16 %v623
    %v2429 = vunpack.c.l.b16 %v624
    %v2430 = vunpack.c.h.b16 %v624
    %v2431 = vunpack.c.l.b16 %v625
    %v2432 = vunpack.c.h.b16 %v625
    %v2433 = vunpack.c.l.b16 %v626
    %v2434 = vunpack.c.h.b16 %v626
    %v2435 = vunpack.c.l.b16 %v627
    %v2436 = vunpack.c.h.b16 %v627
    %v2437 = vunpack.c.l.b16 %v628
    %v2438 = vunpack.c.h.b16 %v628
    %v2439 = vunpack.c.l.b16 %v629
    %v2440 = vunpack.c.h.b16 %v629
    %v2441 = vunpack.c.l.b16 %v630
    %v2442 = vunpack.c.h.b16 %v630
    %v2443 = vunpack.c.l.b16 %v631
    %v2444 = vunpack.c.h.b16 %v631
    %v2445 = vunpack.c.l.b16 %v632
    %v2446 = vunpack.c.h.b16 %v632
    %v2447 = vunpack.c.l.b16 %v633
    %v2448 = vunpack.c.h.b16 %v633
    %v2449 = vunpack.c.l.b16 %v634
    %v2450 = vunpack.c.h.b16 %v634
    %v2451 = vunpack.c.l.b16 %v635
    %v2452 = vunpack.c.h.b16 %v635
    %v2453 = vunpack.c.l.b16 %v636
    %v2454 = vunpack.c.h.b16 %v636
    %v2455 = vunpack.c.l.b16 %v637
    %v2456 = vunpack.c.h.b16 %v637
    %v2457 = vunpack.c.l.b16 %v638
    %v2458 = vunpack.c.h.b16 %v638
    %v2459 = vunpack.c.l.b16 %v639
    %v2460 = vunpack.c.h.b16 %v639
    %v2461 = vunpack.c.l.b16 %v640
    %v2462 = vunpack.c.h.b16 %v640
    %v2463 = vunpack.c.l.b16 %v641
    %v2464 = vunpack.c.h.b16 %v641
    %v2465 = vunpack.c.l.b16 %v642
    %v2466 = vunpack.c.h.b16 %v642
    %v2467 = vunpack.c.l.b16 %v643
    %v2468 = vunpack.c.h.b16 %v643
    %v2469 = vunpack.c.l.b16 %v644
    %v2470 = vunpack.c.h.b16 %v644
    %v2471 = vunpack.c.l.b16 %v645
    %v2472 = vunpack.c.h.b16 %v645
    %v2473 = vunpack.c.l.b16 %v646
    %v2474 = vunpack.c.h.b16 %v646
    %v2475 = vunpack.c.l.b16 %v647
    %v2476 = vunpack.c.h.b16 %v647
    %v2477 = vunpack.c.l.b16 %v648
    %v2478 = vunpack.c.h.b16 %v648
    %v2479 = vunpack.c.l.b16 %v649
    %v2480 = vunpack.c.h.b16 %v649
    %v2481 = vunpack.c.l.b16 %v650
    %v2482 = vunpack.c.h.b16 %v650
    %v2483 = vunpack.c.l.b16 %v651
    %v2484 = vunpack.c.h.b16 %v651
    %v2485 = vunpack.c.l.b16 %v652
    %v2486 = vunpack.c.h.b16 %v652
    %v2487 = vunpack.c.l.b16 %v653
    %v2488 = vunpack.c.h.b16 %v653
    %v2489 = vunpack.c.l.b16 %v654
    %v2490 = vunpack.c.h.b16 %v654
    %v2491 = vunpack.c.l.b16 %v655
    %v2492 = vunpack.c.h.b16 %v655
    %v2493 = vunpack.c.l.b16 %v656
    %v2494 = vunpack.c.h.b16 %v656
    %v2495 = vunpack.c.l.b16 %v657
    %v2496 = vunpack.c.h.b16 %v657
    %v2497 = vunpack.c.l.b16 %v658
    %v2498 = vunpack.c.h.b16 %v658
    %v2499 = vunpack.c.l.b16 %v659
    %v2500 = vunpack.c.h.b16 %v659
    %v2501 = vunpack.c.l.b16 %v660
    %v2502 = vunpack.c.h.b16 %v660
    %v2503 = vunpack.c.l.b16 %v661
    %v2504 = vunpack.c.h.b16 %v661
    %v2505 = vunpack.c.l.b16 %v662
    %v2506 = vunpack.c.h.b16 %v662
    %v2507 = vunpack.c.l.b16 %v663
    %v2508 = vunpack.c.h.b16 %v663
    %v2509 = vunpack.c.l.b16 %v664
    %v2510 = vunpack.c.h.b16 %v664
    %v2511 = vunpack.c.l.b16 %v665
    %v2512 = vunpack.c.h.b16 %v665
    %v2513 = vunpack.c.l.b16 %v666
    %v2514 = vunpack.c.h.b16 %v666
    %v2515 = vunpack.c.l.b16 %v667
    %v2516 = vunpack.c.h.b16 %v667
    %v2517 = vunpack.c.l.b16 %v668
    %v2518 = vunpack.c.h.b16 %v668
    %v2519 = vunpack.c.l.b16 %v669
    %v2520 = vunpack.c.h.b16 %v669
    %v2521 = vunpack.c.l.b16 %v670
    %v2522 = vunpack.c.h.b16 %v670
    %v2523 = vunpack.c.l.b16 %v671
    %v2524 = vunpack.c.h.b16 %v671
    %v2525 = vunpack.c.l.b16 %v672
    %v2526 = vunpack.c.h.b16 %v672
    %v2527 = vunpack.c.l.b16 %v673
    %v2528 = vunpack.c.h.b16 %v673
    %v2529 = vunpack.c.l.b16 %v674
    %v2530 = vunpack.c.h.b16 %v674
    %v2531 = vunpack.c.l.b16 %v675
    %v2532 = vunpack.c.h.b16 %v675
    %v2533 = vunpack.c.l.b16 %v676
    %v2534 = vunpack.c.h.b16 %v676
    %v2535 = vunpack.c.l.b16 %v677
    %v2536 = vunpack.c.h.b16 %v677
    %v2537 = vunpack.c.l.b16 %v678
    %v2538 = vunpack.c.h.b16 %v678
    %v2539 = vunpack.c.l.b16 %v679
    %v2540 = vunpack.c.h.b16 %v679
    %v2541 = vunpack.c.l.b16 %v680
    %v2542 = vunpack.c.h.b16 %v680
    %v2543 = vunpack.c.l.b16 %v681
    %v2544 = vunpack.c.h.b16 %v681
    %v2545 = vunpack.c.l.b16 %v682
    %v2546 = vunpack.c.h.b16 %v682
    %v2547 = vunpack.c.l.b16 %v683
    %v2548 = vunpack.c.h.b16 %v683
    %v2549 = vunpack.c.l.b16 %v684
    %v2550 = vunpack.c.h.b16 %v684
    %v2551 = vunpack.c.l.b16 %v685
    %v2552 = vunpack.c.h.b16 %v685
    %v2553 = vunpack.c.l.b16 %v686
    %v2554 = vunpack.c.h.b16 %v686
    %v2555 = vunpack.c.l.b16 %v687
    %v2556 = vunpack.c.h.b16 %v687
    %v2557 = vunpack.c.l.b16 %v688
    %v2558 = vunpack.c.h.b16 %v688
    %v2559 = vunpack.c.l.b16 %v689
    %v2560 = vunpack.c.h.b16 %v689
    %v2561 = vunpack.c.l.b16 %v690
    %v2562 = vunpack.c.h.b16 %v690
    %v2563 = vunpack.c.l.b16 %v691
    %v2564 = vunpack.c.h.b16 %v691
    %v2565 = vunpack.c.l.b16 %v692
    %v2566 = vunpack.c.h.b16 %v692
    %v2567 = vunpack.c.l.b16 %v693
    %v2568 = vunpack.c.h.b16 %v693
    %v2569 = vunpack.c.l.b16 %v694
    %v2570 = vunpack.c.h.b16 %v694
    %v2571 = vunpack.c.l.b16 %v695
    %v2572 = vunpack.c.h.b16 %v695
    %v2573 = vunpack.c.l.b16 %v696
    %v2574 = vunpack.c.h.b16 %v696
    %v2575 = vunpack.c.l.b16 %v697
    %v2576 = vunpack.c.h.b16 %v697
    %v2577 = vunpack.c.l.b16 %v698
    %v2578 = vunpack.c.h.b16 %v698
    %v2579 = vunpack.c.l.b16 %v699
    %v2580 = vunpack.c.h.b16 %v699
    %v2581 = vunpack.c.l.b16 %v700
    %v2582 = vunpack.c.h.b16 %v700
    %v2583 = vunpack.c.l.b16 %v701
    %v2584 = vunpack.c.h.b16 %v701
    %v2585 = vunpack.c.l.b16 %v702
    %v2586 = vunpack.c.h.b16 %v702
    %v2587 = vunpack.c.l.b16 %v703
    %v2588 = vunpack.c.h.b16 %v703
    %v2589 = vunpack.c.l.b16 %v704
    %v2590 = vunpack.c.h.b16 %v704
    %v2591 = vunpack.c.l.b16 %v705
    %v2592 = vunpack.c.h.b16 %v705
    %v2593 = vunpack.c.l.b16 %v706
    %v2594 = vunpack.c.h.b16 %v706
    %v2595 = vunpack.c.l.b16 %v707
    %v2596 = vunpack.c.h.b16 %v707
    %v2597 = vunpack.c.l.b16 %v708
    %v2598 = vunpack.c.h.b16 %v708
    %v2599 = vunpack.c.l.b16 %v709
    %v2600 = vunpack.c.h.b16 %v709
    %v2601 = vunpack.c.l.b16 %v710
    %v2602 = vunpack.c.h.b16 %v710
    %v2603 = vunpack.c.l.b16 %v711
    %v2604 = vunpack.c.h.b16 %v711
    %v2605 = vunpack.c.l.b16 %v712
    %v2606 = vunpack.c.h.b16 %v712
    %v2607 = vunpack.c.l.b16 %v713
    %v2608 = vunpack.c.h.b16 %v713
    %v2609 = vunpack.c.l.b16 %v714
    %v2610 = vunpack.c.h.b16 %v714
    %v2611 = vunpack.c.l.b16 %v715
    %v2612 = vunpack.c.h.b16 %v715
    %v2613 = vunpack.c.l.b16 %v716
    %v2614 = vunpack.c.h.b16 %v716
    %v2615 = vunpack.c.l.b16 %v717
    %v2616 = vunpack.c.h.b16 %v717
    %v2617 = vunpack.c.l.b16 %v718
    %v2618 = vunpack.c.h.b16 %v718
    %v2619 = vunpack.c.l.b16 %v719
    %v2620 = vunpack.c.h.b16 %v719
    %v2621 = vunpack.c.l.b16 %v720
    %v2622 = vunpack.c.h.b16 %v720
    %v2623 = vunpack.c.l.b16 %v721
    %v2624 = vunpack.c.h.b16 %v721
    %v2625 = vunpack.c.l.b16 %v722
    %v2626 = vunpack.c.h.b16 %v722
    %v2627 = vunpack.c.l.b16 %v723
    %v2628 = vunpack.c.h.b16 %v723
    %v2629 = vunpack.c.l.b16 %v724
    %v2630 = vunpack.c.h.b16 %v724
    %v2631 = vunpack.c.l.b16 %v725
    %v2632 = vunpack.c.h.b16 %v725
    %v2633 = vunpack.c.l.b16 %v726
    %v2634 = vunpack.c.h.b16 %v726
    %v2635 = vunpack.c.l.b16 %v727
    %v2636 = vunpack.c.h.b16 %v727
    %v2637 = vunpack.c.l.b16 %v728
    %v2638 = vunpack.c.h.b16 %v728
    %v2639 = vunpack.c.l.b16 %v729
    %v2640 = vunpack.c.h.b16 %v729
    %v2641 = vunpack.c.l.b16 %v730
    %v2642 = vunpack.c.h.b16 %v730
    %v2643 = vunpack.c.l.b16 %v731
    %v2644 = vunpack.c.h.b16 %v731
    %v2645 = vunpack.c.l.b16 %v732
    %v2646 = vunpack.c.h.b16 %v732
    %v2647 = vunpack.c.l.b16 %v733
    %v2648 = vunpack.c.h.b16 %v733
    %v2649 = vunpack.c.l.b16 %v734
    %v2650 = vunpack.c.h.b16 %v734
    %v2651 = vunpack.c.l.b16 %v735
    %v2652 = vunpack.c.h.b16 %v735
    %v2653 = vunpack.c.l.b16 %v736
    %v2654 = vunpack.c.h.b16 %v736
    %v2655 = vunpack.c.l.b16 %v737
    %v2656 = vunpack.c.h.b16 %v737
    %v2657 = vunpack.c.l.b16 %v738
    %v2658 = vunpack.c.h.b16 %v738
    %v2659 = vunpack.c.l.b16 %v739
    %v2660 = vunpack.c.h.b16 %v739
    %v2661 = vunpack.c.l.b16 %v740
    %v2662 = vunpack.c.h.b16 %v740
    %v2663 = vunpack.c.l.b16 %v741
    %v2664 = vunpack.c.h.b16 %v741
    %v2665 = vunpack.c.l.b16 %v742
    %v2666 = vunpack.c.h.b16 %v742
    %v2667 = vunpack.c.l.b16 %v743
    %v2668 = vunpack.c.h.b16 %v743
    %v2669 = vunpack.c.l.b16 %v744
    %v2670 = vunpack.c.h.b16 %v744
    %v2671 = vunpack.c.l.b16 %v745
    %v2672 = vunpack.c.h.b16 %v745
    %v2673 = vunpack.c.l.b16 %v746
    %v2674 = vunpack.c.h.b16 %v746
    %v2675 = vunpack.c.l.b16 %v747
    %v2676 = vunpack.c.h.b16 %v747
    %v2677 = vunpack.c.l.b16 %v748
    %v2678 = vunpack.c.h.b16 %v748
    %v2679 = vunpack.c.l.b16 %v749
    %v2680 = vunpack.c.h.b16 %v749
    %v2681 = vunpack.c.l.b16 %v750
    %v2682 = vunpack.c.h.b16 %v750
    %v2683 = vunpack.c.l.b16 %v751
    %v2684 = vunpack.c.h.b16 %v751
    %v2685 = vunpack.c.l.b16 %v752
    %v2686 = vunpack.c.h.b16 %v752
    %v2687 = vunpack.c.l.b16 %v753
    %v2688 = vunpack.c.h.b16 %v753
    %v2689 = vunpack.c.l.b16 %v754
    %v2690 = vunpack.c.h.b16 %v754
    %v2691 = vunpack.c.l.b16 %v755
    %v2692 = vunpack.c.h.b16 %v755
    %v2693 = vunpack.c.l.b16 %v756
    %v2694 = vunpack.c.h.b16 %v756
    %v2695 = vunpack.c.l.b16 %v757
    %v2696 = vunpack.c.h.b16 %v757
    %v2697 = vunpack.c.l.b16 %v758
    %v2698 = vunpack.c.h.b16 %v758
    %v2699 = vunpack.c.l.b16 %v759
    %v2700 = vunpack.c.h.b16 %v759
    %v2701 = vunpack.c.l.b16 %v760
    %v2702 = vunpack.c.h.b16 %v760
    %v2703 = vunpack.c.l.b16 %v761
    %v2704 = vunpack.c.h.b16 %v761
    %v2705 = vunpack.c.l.b16 %v762
    %v2706 = vunpack.c.h.b16 %v762
    %v2707 = vunpack.c.l.b16 %v763
    %v2708 = vunpack.c.h.b16 %v763
    %v2709 = vunpack.c.l.b16 %v764
    %v2710 = vunpack.c.h.b16 %v764
    %v2711 = vunpack.c.l.b16 %v765
    %v2712 = vunpack.c.h.b16 %v765
    %v2713 = vunpack.c.l.b16 %v766
    %v2714 = vunpack.c.h.b16 %v766
    %v2715 = vunpack.c.l.b16 %v767
    %v2716 = vunpack.c.h.b16 %v767
    %v2717 = vunpack.c.l.b16 %v768
    %v2718 = vunpack.c.h.b16 %v768
    %v2719 = vunpack.c.l.b16 %v769
    %v2720 = vunpack.c.h.b16 %v769
    %v2721 = vunpack.c.l.b16 %v770
    %v2722 = vunpack.c.h.b16 %v770
    %v2723 = vunpack.c.l.b16 %v771
    %v2724 = vunpack.c.h.b16 %v771
    %v2725 = vunpack.c.l.b16 %v772
    %v2726 = vunpack.c.h.b16 %v772
    %v2727 = vunpack.c.l.b16 %v773
    %v2728 = vunpack.c.h.b16 %v773
    %v2729 = vunpack.c.l.b16 %v774
    %v2730 = vunpack.c.h.b16 %v774
    %v2731 = vunpack.c.l.b16 %v775
    %v2732 = vunpack.c.h.b16 %v775
    %v2733 = vunpack.c.l.b16 %v776
    %v2734 = vunpack.c.h.b16 %v776
    %v2735 = vunpack.c.l.b16 %v777
    %v2736 = vunpack.c.h.b16 %v777
    %v2737 = vunpack.c.l.b16 %v778
    %v2738 = vunpack.c.h.b16 %v778
    %v2739 = vunpack.c.l.b16 %v779
    %v2740 = vunpack.c.h.b16 %v779
    %v2741 = vunpack.c.l.b16 %v780
    %v2742 = vunpack.c.h.b16 %v780
    %v2743 = vpack.c.b16 %v1471, %v1463
    %v2744 = vpack.c.b16 %v1472, %v1464
    %v2745 = vpack.c.b16 %v1473, %v1465
    %v2746 = vpack.c.b16 %v1474, %v1466
    %v2747 = vpack.c.b16 %v1475, %v1467
    %v2748 = vpack.c.b16 %v1476, %v1468
    %v2749 = vpack.c.b16 %v1477, %v1469
    %v2750 = vpack.c.b16 %v1478, %v1470
    %v2751 = vpack.c.b16 %v1487, %v1479
    %v2752 = vpack.c.b16 %v1488, %v1480
    %v2753 = vpack.c.b16 %v1489, %v1481
    %v2754 = vpack.c.b16 %v1490, %v1482
    %v2755 = vpack.c.b16 %v1491, %v1483
    %v2756 = vpack.c.b16 %v1492, %v1484
    %v2757 = vpack.c.b16 %v1493, %v1485
    %v2758 = vpack.c.b16 %v1494, %v1486
    %v2759 = vpack.c.b16 %v1503, %v1495
    %v2760 = vpack.c.b16 %v1504, %v1496
    %v2761 = vpack.c.b16 %v1505, %v1497
    %v2762 = vpack.c.b16 %v1506, %v1498
    %v2763 = vpack.c.b16 %v1507, %v1499
    %v2764 = vpack.c.b16 %v1508, %v1500
    %v2765 = vpack.c.b16 %v1509, %v1501
    %v2766 = vpack.c.b16 %v1510, %v1502
    %v2767 = vpack.c.b16 %v1519, %v1511
    %v2768 = vpack.c.b16 %v1520, %v1512
    %v2769 = vpack.c.b16 %v1521, %v1513
    %v2770 = vpack.c.b16 %v1522, %v1514
    %v2771 = vpack.c.b16 %v1523, %v1515
    %v2772 = vpack.c.b16 %v1524, %v1516
    %v2773 = vpack.c.b16 %v1525, %v1517
    %v2774 = vpack.c.b16 %v1526, %v1518
    %v2775 = vpack.c.b16 %v1535, %v1527
    %v2776 = vpack.c.b16 %v1536, %v1528
    %v2777 = vpack.c.b16 %v1537, %v1529
    %v2778 = vpack.c.b16 %v1538, %v1530
    %v2779 = vpack.c.b16 %v1539, %v1531
    %v2780 = vpack.c.b16 %v1540, %v1532
    %v2781 = vpack.c.b16 %v1541, %v1533
    %v2782 = vpack.c.b16 %v1542, %v1534
    %v2783 = vpack.c.b16 %v1551, %v1543
    %v2784 = vpack.c.b16 %v1552, %v1544
    %v2785 = vpack.c.b16 %v1553, %v1545
    %v2786 = vpack.c.b16 %v1554, %v1546
    %v2787 = vpack.c.b16 %v1555, %v1547
    %v2788 = vpack.c.b16 %v1556, %v1548
    %v2789 = vpack.c.b16 %v1557, %v1549
    %v2790 = vpack.c.b16 %v1558, %v1550
    %v2791 = vpack.c.b16 %v1567, %v1559
    %v2792 = vpack.c.b16 %v1568, %v1560
    %v2793 = vpack.c.b16 %v1569, %v1561
    %v2794 = vpack.c.b16 %v1570, %v1562
    %v2795 = vpack.c.b16 %v1571, %v1563
    %v2796 = vpack.c.b16 %v1572, %v1564
    %v2797 = vpack.c.b16 %v1573, %v1565
    %v2798 = vpack.c.b16 %v1574, %v1566
    %v2799 = vpack.c.b16 %v1583, %v1575
    %v2800 = vpack.c.b16 %v1584, %v1576
    %v2801 = vpack.c.b16 %v1585, %v1577
    %v2802 = vpack.c.b16 %v1586, %v1578
    %v2803 = vpack.c.b16 %v1587, %v1579
    %v2804 = vpack.c.b16 %v1588, %v1580
    %v2805 = vpack.c.b16 %v1589, %v1581
    %v2806 = vpack.c.b16 %v1590, %v1582
    %v2807 = vpack.c.b16 %v1599, %v1591
    %v2808 = vpack.c.b16 %v1600, %v1592
    %v2809 = vpack.c.b16 %v1601, %v1593
    %v2810 = vpack.c.b16 %v1602, %v1594
    %v2811 = vpack.c.b16 %v1603, %v1595
    %v2812 = vpack.c.b16 %v1604, %v1596
    %v2813 = vpack.c.b16 %v1605, %v1597
    %v2814 = vpack.c.b16 %v1606, %v1598
    %v2815 = vpack.c.b16 %v1615, %v1607
    %v2816 = vpack.c.b16 %v1616, %v1608
    %v2817 = vpack.c.b16 %v1617, %v1609
    %v2818 = vpack.c.b16 %v1618, %v1610
    %v2819 = vpack.c.b16 %v1619, %v1611
    %v2820 = vpack.c.b16 %v1620, %v1612
    %v2821 = vpack.c.b16 %v1621, %v1613
    %v2822 = vpack.c.b16 %v1622, %v1614
    %v2823 = vpack.c.b16 %v1631, %v1623
    %v2824 = vpack.c.b16 %v1632, %v1624
    %v2825 = vpack.c.b16 %v1633, %v1625
    %v2826 = vpack.c.b16 %v1634, %v1626
    %v2827 = vpack.c.b16 %v1635, %v1627
    %v2828 = vpack.c.b16 %v1636, %v1628
    %v2829 = vpack.c.b16 %v1637, %v1629
    %v2830 = vpack.c.b16 %v1638, %v1630
    %v2831 = vpack.c.b16 %v1647, %v1639
    %v2832 = vpack.c.b16 %v1648, %v1640
    %v2833 = vpack.c.b16 %v1649, %v1641
    %v2834 = vpack.c.b16 %v1650, %v1642
    %v2835 = vpack.c.b16 %v1651, %v1643
    %v2836 = vpack.c.b16 %v1652, %v1644
    %v2837 = vpack.c.b16 %v1653, %v1645
    %v2838 = vpack.c.b16 %v1654, %v1646
    %v2839 = vpack.c.b16 %v1663, %v1655
    %v2840 = vpack.c.b16 %v1664, %v1656
    %v2841 = vpack.c.b16 %v1665, %v1657
    %v2842 = vpack.c.b16 %v1666, %v1658
    %v2843 = vpack.c.b16 %v1667, %v1659
    %v2844 = vpack.c.b16 %v1668, %v1660
    %v2845 = vpack.c.b16 %v1669, %v1661
    %v2846 = vpack.c.b16 %v1670, %v1662
    %v2847 = vpack.c.b16 %v1679, %v1671
    %v2848 = vpack.c.b16 %v1680, %v1672
    %v2849 = vpack.c.b16 %v1681, %v1673
    %v2850 = vpack.c.b16 %v1682, %v1674
    %v2851 = vpack.c.b16 %v1683, %v1675
    %v2852 = vpack.c.b16 %v1684, %v1676
    %v2853 = vpack.c.b16 %v1685, %v1677
    %v2854 = vpack.c.b16 %v1686, %v1678
    %v2855 = vpack.c.b16 %v1695, %v1687
    %v2856 = vpack.c.b16 %v1696, %v1688
    %v2857 = vpack.c.b16 %v1697, %v1689
    %v2858 = vpack.c.b16 %v1698, %v1690
    %v2859 = vpack.c.b16 %v1699, %v1691
    %v2860 = vpack.c.b16 %v1700, %v1692
    %v2861 = vpack.c.b16 %v1701, %v1693
    %v2862 = vpack.c.b16 %v1702, %v1694
    %v2863 = vpack.c.b16 %v1711, %v1703
    %v2864 = vpack.c.b16 %v1712, %v1704
    %v2865 = vpack.c.b16 %v1713, %v1705
    %v2866 = vpack.c.b16 %v1714, %v1706
    %v2867 = vpack.c.b16 %v1715, %v1707
    %v2868 = vpack.c.b16 %v1716, %v1708
    %v2869 = vpack.c.b16 %v1717, %v1709
    %v2870 = vpack.c.b16 %v1718, %v1710
    %v2871 = vpack.c.b16 %v1727, %v1719
    %v2872 = vpack.c.b16 %v1728, %v1720
    %v2873 = vpack.c.b16 %v1729, %v1721
    %v2874 = vpack.c.b16 %v1730, %v1722
    %v2875 = vpack.c.b16 %v1731, %v1723
    %v2876 = vpack.c.b16 %v1732, %v1724
    %v2877 = vpack.c.b16 %v1733, %v1725
    %v2878 = vpack.c.b16 %v1734, %v1726
    %v2879 = vpack.c.b16 %v1743, %v1735
    %v2880 = vpack.c.b16 %v1744, %v1736
    %v2881 = vpack.c.b16 %v1745, %v1737
    %v2882 = vpack.c.b16 %v1746, %v1738
    %v2883 = vpack.c.b16 %v1747, %v1739
    %v2884 = vpack.c.b16 %v1748, %v1740
    %v2885 = vpack.c.b16 %v1749, %v1741
    %v2886 = vpack.c.b16 %v1750, %v1742
    %v2887 = vpack.c.b16 %v1759, %v1751
    %v2888 = vpack.c.b16 %v1760, %v1752
    %v2889 = vpack.c.b16 %v1761, %v1753
    %v2890 = vpack.c.b16 %v1762, %v1754
    %v2891 = vpack.c.b16 %v1763, %v1755
    %v2892 = vpack.c.b16 %v1764, %v1756
    %v2893 = vpack.c.b16 %v1765, %v1757
    %v2894 = vpack.c.b16 %v1766, %v1758
    %v2895 = vpack.c.b16 %v1775, %v1767
    %v2896 = vpack.c.b16 %v1776, %v1768
    %v2897 = vpack.c.b16 %v1777, %v1769
    %v2898 = vpack.c.b16 %v1778, %v1770
    %v2899 = vpack.c.b16 %v1779, %v1771
    %v2900 = vpack.c.b16 %v1780, %v1772
    %v2901 = vpack.c.b16 %v1781, %v1773
    %v2902 = vpack.c.b16 %v1782, %v1774
    %v2903 = vpack.c.b16 %v1791, %v1783
    %v2904 = vpack.c.b16 %v1792, %v1784
    %v2905 = vpack.c.b16 %v1793, %v1785
    %v2906 = vpack.c.b16 %v1794, %v1786
    %v2907 = vpack.c.b16 %v1795, %v1787
    %v2908 = vpack.c.b16 %v1796, %v1788
    %v2909 = vpack.c.b16 %v1797, %v1789
    %v2910 = vpack.c.b16 %v1798, %v1790
    %v2911 = vpack.c.b16 %v1807, %v1799
    %v2912 = vpack.c.b16 %v1808, %v1800
    %v2913 = vpack.c.b16 %v1809, %v1801
    %v2914 = vpack.c.b16 %v1810, %v1802
    %v2915 = vpack.c.b16 %v1811, %v1803
    %v2916 = vpack.c.b16 %v1812, %v1804
    %v2917 = vpack.c.b16 %v1813, %v1805
    %v2918 = vpack.c.b16 %v1814, %v1806
    %v2919 = vpack.c.b16 %v1823, %v1815
    %v2920 = vpack.c.b16 %v1824, %v1816
    %v2921 = vpack.c.b16 %v1825, %v1817
    %v2922 = vpack.c.b16 %v1826, %v1818
    %v2923 = vpack.c.b16 %v1827, %v1819
    %v2924 = vpack.c.b16 %v1828, %v1820
    %v2925 = vpack.c.b16 %v1829, %v1821
    %v2926 = vpack.c.b16 %v1830, %v1822
    %v2927 = vpack.c.b16 %v1839, %v1831
    %v2928 = vpack.c.b16 %v1840, %v1832
    %v2929 = vpack.c.b16 %v1841, %v1833
    %v2930 = vpack.c.b16 %v1842, %v1834
    %v2931 = vpack.c.b16 %v1843, %v1835
    %v2932 = vpack.c.b16 %v1844, %v1836
    %v2933 = vpack.c.b16 %v1845, %v1837
    %v2934 = vpack.c.b16 %v1846, %v1838
    %v2935 = vpack.c.b16 %v1855, %v1847
    %v2936 = vpack.c.b16 %v1856, %v1848
    %v2937 = vpack.c.b16 %v1857, %v1849
    %v2938 = vpack.c.b16 %v1858, %v1850
    %v2939 = vpack.c.b16 %v1859, %v1851
    %v2940 = vpack.c.b16 %v1860, %v1852
    %v2941 = vpack.c.b16 %v1861, %v1853
    %v2942 = vpack.c.b16 %v1862, %v1854
    %v2943 = vpack.c.b16 %v1871, %v1863
    %v2944 = vpack.c.b16 %v1872, %v1864
    %v2945 = vpack.c.b16 %v1873, %v1865
    %v2946 = vpack.c.b16 %v1874, %v1866
    %v2947 = vpack.c.b16 %v1875, %v1867
    %v2948 = vpack.c.b16 %v1876, %v1868
    %v2949 = vpack.c.b16 %v1877, %v1869
    %v2950 = vpack.c.b16 %v1878, %v1870
    %v2951 = vpack.c.b16 %v1887, %v1879
    %v2952 = vpack.c.b16 %v1888, %v1880
    %v2953 = vpack.c.b16 %v1889, %v1881
    %v2954 = vpack.c.b16 %v1890, %v1882
    %v2955 = vpack.c.b16 %v1891, %v1883
    %v2956 = vpack.c.b16 %v1892, %v1884
    %v2957 = vpack.c.b16 %v1893, %v1885
    %v2958 = vpack.c.b16 %v1894, %v1886
    %v2959 = vpack.c.b16 %v1903, %v1895
    %v2960 = vpack.c.b16 %v1904, %v1896
    %v2961 = vpack.c.b16 %v1905, %v1897
    %v2962 = vpack.c.b16 %v1906, %v1898
    %v2963 = vpack.c.b16 %v1907, %v1899
    %v2964 = vpack.c.b16 %v1908, %v1900
    %v2965 = vpack.c.b16 %v1909, %v1901
    %v2966 = vpack.c.b16 %v1910, %v1902
    %v2967 = vpack.c.b16 %v1919, %v1911
    %v2968 = vpack.c.b16 %v1920, %v1912
    %v2969 = vpack.c.b16 %v1921, %v1913
    %v2970 = vpack.c.b16 %v1922, %v1914
    %v2971 = vpack.c.b16 %v1923, %v1915
    %v2972 = vpack.c.b16 %v1924, %v1916
    %v2973 = vpack.c.b16 %v1925, %v1917
    %v2974 = vpack.c.b16 %v1926, %v1918
    %v2975 = vpack.c.b16 %v1935, %v1927
    %v2976 = vpack.c.b16 %v1936, %v1928
    %v2977 = vpack.c.b16 %v1937, %v1929
    %v2978 = vpack.c.b16 %v1938, %v1930
    %v2979 = vpack.c.b16 %v1939, %v1931
    %v2980 = vpack.c.b16 %v1940, %v1932
    %v2981 = vpack.c.b16 %v1941, %v1933
    %v2982 = vpack.c.b16 %v1942, %v1934
    %v2983 = vpack.c.b16 %v1951, %v1943
    %v2984 = vpack.c.b16 %v1952, %v1944
    %v2985 = vpack.c.b16 %v1953, %v1945
    %v2986 = vpack.c.b16 %v1954, %v1946
    %v2987 = vpack.c.b16 %v1955, %v1947
    %v2988 = vpack.c.b16 %v1956, %v1948
    %v2989 = vpack.c.b16 %v1957, %v1949
    %v2990 = vpack.c.b16 %v1958, %v1950
    %v2991 = vpack.c.b16 %v1967, %v1959
    %v2992 = vpack.c.b16 %v1968, %v1960
    %v2993 = vpack.c.b16 %v1969, %v1961
    %v2994 = vpack.c.b16 %v1970, %v1962
    %v2995 = vpack.c.b16 %v1971, %v1963
    %v2996 = vpack.c.b16 %v1972, %v1964
    %v2997 = vpack.c.b16 %v1973, %v1965
    %v2998 = vpack.c.b16 %v1974, %v1966
    %v2999 = vpack.c.b16 %v1983, %v1975
    %v3000 = vpack.c.b16 %v1984, %v1976
    %v3001 = vpack.c.b16 %v1985, %v1977
    %v3002 = vpack.c.b16 %v1986, %v1978
    %v3003 = vpack.c.b16 %v1987, %v1979
    %v3004 = vpack.c.b16 %v1988, %v1980
    %v3005 = vpack.c.b16 %v1989, %v1981
    %v3006 = vpack.c.b16 %v1990, %v1982
    %v3007 = vpack.c.b16 %v1999, %v1991
    %v3008 = vpack.c.b16 %v2000, %v1992
    %v3009 = vpack.c.b16 %v2001, %v1993
    %v3010 = vpack.c.b16 %v2002, %v1994
    %v3011 = vpack.c.b16 %v2003, %v1995
    %v3012 = vpack.c.b16 %v2004, %v1996
    %v3013 = vpack.c.b16 %v2005, %v1997
    %v3014 = vpack.c.b16 %v2006, %v1998
    %v3015 = vpack.c.b16 %v2015, %v2007
    %v3016 = vpack.c.b16 %v2016, %v2008
    %v3017 = vpack.c.b16 %v2017, %v2009
    %v3018 = vpack.c.b16 %v2018, %v2010
    %v3019 = vpack.c.b16 %v2019, %v2011
    %v3020 = vpack.c.b16 %v2020, %v2012
    %v3021 = vpack.c.b16 %v2021, %v2013
    %v3022 = vpack.c.b16 %v2022, %v2014
    %v3023 = vpack.c.b16 %v2031, %v2023
    %v3024 = vpack.c.b16 %v2032, %v2024
    %v3025 = vpack.c.b16 %v2033, %v2025
    %v3026 = vpack.c.b16 %v2034, %v2026
    %v3027 = vpack.c.b16 %v2035, %v2027
    %v3028 = vpack.c.b16 %v2036, %v2028
    %v3029 = vpack.c.b16 %v2037, %v2029
    %v3030 = vpack.c.b16 %v2038, %v2030
    %v3031 = vpack.c.b16 %v2047, %v2039
    %v3032 = vpack.c.b16 %v2048, %v2040
    %v3033 = vpack.c.b16 %v2049, %v2041
    %v3034 = vpack.c.b16 %v2050, %v2042
    %v3035 = vpack.c.b16 %v2051, %v2043
    %v3036 = vpack.c.b16 %v2052, %v2044
    %v3037 = vpack.c.b16 %v2053, %v2045
    %v3038 = vpack.c.b16 %v2054, %v2046
    %v3039 = vpack.c.b16 %v2063, %v2055
    %v3040 = vpack.c.b16 %v2064, %v2056
    %v3041 = vpack.c.b16 %v2065, %v2057
    %v3042 = vpack.c.b16 %v2066, %v2058
    %v3043 = vpack.c.b16 %v2067, %v2059
    %v3044 = vpack.c.b16 %v2068, %v2060
    %v3045 = vpack.c.b16 %v2069, %v2061
    %v3046 = vpack.c.b16 %v2070, %v2062
    %v3047 = vpack.c.b16 %v2079, %v2071
    %v3048 = vpack.c.b16 %v2080, %v2072
    %v3049 = vpack.c.b16 %v2081, %v2073
    %v3050 = vpack.c.b16 %v2082, %v2074
    %v3051 = vpack.c.b16 %v2083, %v2075
    %v3052 = vpack.c.b16 %v2084, %v2076
    %v3053 = vpack.c.b16 %v2085, %v2077
    %v3054 = vpack.c.b16 %v2086, %v2078
    %v3055 = vpack.c.b16 %v2095, %v2087
    %v3056 = vpack.c.b16 %v2096, %v2088
    %v3057 = vpack.c.b16 %v2097, %v2089
    %v3058 = vpack.c.b16 %v2098, %v2090
    %v3059 = vpack.c.b16 %v2099, %v2091
    %v3060 = vpack.c.b16 %v2100, %v2092
    %v3061 = vpack.c.b16 %v2101, %v2093
    %v3062 = vpack.c.b16 %v2102, %v2094
    %v3063 = vpack.c.b16 %v2111, %v2103
    %v3064 = vpack.c.b16 %v2112, %v2104
    %v3065 = vpack.c.b16 %v2113, %v2105
    %v3066 = vpack.c.b16 %v2114, %v2106
    %v3067 = vpack.c.b16 %v2115, %v2107
    %v3068 = vpack.c.b16 %v2116, %v2108
    %v3069 = vpack.c.b16 %v2117, %v2109
    %v3070 = vpack.c.b16 %v2118, %v2110
    %v3071 = vpack.c.b16 %v2127, %v2119
    %v3072 = vpack.c.b16 %v2128, %v2120
    %v3073 = vpack.c.b16 %v2129, %v2121
    %v3074 = vpack.c.b16 %v2130, %v2122
    %v3075 = vpack.c.b16 %v2131, %v2123
    %v3076 = vpack.c.b16 %v2132, %v2124
    %v3077 = vpack.c.b16 %v2133, %v2125
    %v3078 = vpack.c.b16 %v2134, %v2126
    %v3079 = vpack.c.b16 %v2143, %v2135
    %v3080 = vpack.c.b16 %v2144, %v2136
    %v3081 = vpack.c.b16 %v2145, %v2137
    %v3082 = vpack.c.b16 %v2146, %v2138
    %v3083 = vpack.c.b16 %v2147, %v2139
    %v3084 = vpack.c.b16 %v2148, %v2140
    %v3085 = vpack.c.b16 %v2149, %v2141
    %v3086 = vpack.c.b16 %v2150, %v2142
    %v3087 = vpack.c.b16 %v2159, %v2151
    %v3088 = vpack.c.b16 %v2160, %v2152
    %v3089 = vpack.c.b16 %v2161, %v2153
    %v3090 = vpack.c.b16 %v2162, %v2154
    %v3091 = vpack.c.b16 %v2163, %v2155
    %v3092 = vpack.c.b16 %v2164, %v2156
    %v3093 = vpack.c.b16 %v2165, %v2157
    %v3094 = vpack.c.b16 %v2166, %v2158
    %v3095 = vpack.c.b16 %v2175, %v2167
    %v3096 = vpack.c.b16 %v2176, %v2168
    %v3097 = vpack.c.b16 %v2177, %v2169
    %v3098 = vpack.c.b16 %v2178, %v2170
    %v3099 = vpack.c.b16 %v2179, %v2171
    %v3100 = vpack.c.b16 %v2180, %v2172
    %v3101 = vpack.c.b16 %v2181, %v2173
    %v3102 = vpack.c.b16 %v2182, %v2174
    %v3103 = vpack.c.b16 %v2191, %v2183
    %v3104 = vpack.c.b16 %v2192, %v2184
    %v3105 = vpack.c.b16 %v2193, %v2185
    %v3106 = vpack.c.b16 %v2194, %v2186
    %v3107 = vpack.c.b16 %v2195, %v2187
    %v3108 = vpack.c.b16 %v2196, %v2188
    %v3109 = vpack.c.b16 %v2197, %v2189
    %v3110 = vpack.c.b16 %v2198, %v2190
    %v3111 = vpack.c.b16 %v2207, %v2199
    %v3112 = vpack.c.b16 %v2208, %v2200
    %v3113 = vpack.c.b16 %v2209, %v2201
    %v3114 = vpack.c.b16 %v2210, %v2202
    %v3115 = vpack.c.b16 %v2211, %v2203
    %v3116 = vpack.c.b16 %v2212, %v2204
    %v3117 = vpack.c.b16 %v2213, %v2205
    %v3118 = vpack.c.b16 %v2214, %v2206
    %v3119 = vpack.c.b16 %v2223, %v2215
    %v3120 = vpack.c.b16 %v2224, %v2216
    %v3121 = vpack.c.b16 %v2225, %v2217
    %v3122 = vpack.c.b16 %v2226, %v2218
    %v3123 = vpack.c.b16 %v2227, %v2219
    %v3124 = vpack.c.b16 %v2228, %v2220
    %v3125 = vpack.c.b16 %v2229, %v2221
    %v3126 = vpack.c.b16 %v2230, %v2222
    %v3127 = vpack.c.b16 %v2239, %v2231
    %v3128 = vpack.c.b16 %v2240, %v2232
    %v3129 = vpack.c.b16 %v2241, %v2233
    %v3130 = vpack.c.b16 %v2242, %v2234
    %v3131 = vpack.c.b16 %v2243, %v2235
    %v3132 = vpack.c.b16 %v2244, %v2236
    %v3133 = vpack.c.b16 %v2245, %v2237
    %v3134 = vpack.c.b16 %v2246, %v2238
    %v3135 = vpack.c.b16 %v2255, %v2247
    %v3136 = vpack.c.b16 %v2256, %v2248
    %v3137 = vpack.c.b16 %v2257, %v2249
    %v3138 = vpack.c.b16 %v2258, %v2250
    %v3139 = vpack.c.b16 %v2259, %v2251
    %v3140 = vpack.c.b16 %v2260, %v2252
    %v3141 = vpack.c.b16 %v2261, %v2253
    %v3142 = vpack.c.b16 %v2262, %v2254
    %v3143 = vpack.c.b16 %v2271, %v2263
    %v3144 = vpack.c.b16 %v2272, %v2264
    %v3145 = vpack.c.b16 %v2273, %v2265
    %v3146 = vpack.c.b16 %v2274, %v2266
    %v3147 = vpack.c.b16 %v2275, %v2267
    %v3148 = vpack.c.b16 %v2276, %v2268
    %v3149 = vpack.c.b16 %v2277, %v2269
    %v3150 = vpack.c.b16 %v2278, %v2270
    %v3151 = vpack.c.b16 %v2287, %v2279
    %v3152 = vpack.c.b16 %v2288, %v2280
    %v3153 = vpack.c.b16 %v2289, %v2281
    %v3154 = vpack.c.b16 %v2290, %v2282
    %v3155 = vpack.c.b16 %v2291, %v2283
    %v3156 = vpack.c.b16 %v2292, %v2284
    %v3157 = vpack.c.b16 %v2293, %v2285
    %v3158 = vpack.c.b16 %v2294, %v2286
    %v3159 = vpack.c.b16 %v2303, %v2295
    %v3160 = vpack.c.b16 %v2304, %v2296
    %v3161 = vpack.c.b16 %v2305, %v2297
    %v3162 = vpack.c.b16 %v2306, %v2298
    %v3163 = vpack.c.b16 %v2307, %v2299
    %v3164 = vpack.c.b16 %v2308, %v2300
    %v3165 = vpack.c.b16 %v2309, %v2301
    %v3166 = vpack.c.b16 %v2310, %v2302
    %v3167 = vpack.c.b16 %v2319, %v2311
    %v3168 = vpack.c.b16 %v2320, %v2312
    %v3169 = vpack.c.b16 %v2321, %v2313
    %v3170 = vpack.c.b16 %v2322, %v2314
    %v3171 = vpack.c.b16 %v2323, %v2315
    %v3172 = vpack.c.b16 %v2324, %v2316
    %v3173 = vpack.c.b16 %v2325, %v2317
    %v3174 = vpack.c.b16 %v2326, %v2318
    %v3175 = vpack.c.b16 %v2335, %v2327
    %v3176 = vpack.c.b16 %v2336, %v2328
    %v3177 = vpack.c.b16 %v2337, %v2329
    %v3178 = vpack.c.b16 %v2338, %v2330
    %v3179 = vpack.c.b16 %v2339, %v2331
    %v3180 = vpack.c.b16 %v2340, %v2332
    %v3181 = vpack.c.b16 %v2341, %v2333
    %v3182 = vpack.c.b16 %v2342, %v2334
    %v3183 = vpack.c.b16 %v2351, %v2343
    %v3184 = vpack.c.b16 %v2352, %v2344
    %v3185 = vpack.c.b16 %v2353, %v2345
    %v3186 = vpack.c.b16 %v2354, %v2346
    %v3187 = vpack.c.b16 %v2355, %v2347
    %v3188 = vpack.c.b16 %v2356, %v2348
    %v3189 = vpack.c.b16 %v2357, %v2349
    %v3190 = vpack.c.b16 %v2358, %v2350
    %v3191 = vpack.c.b16 %v2367, %v2359
    %v3192 = vpack.c.b16 %v2368, %v2360
    %v3193 = vpack.c.b16 %v2369, %v2361
    %v3194 = vpack.c.b16 %v2370, %v2362
    %v3195 = vpack.c.b16 %v2371, %v2363
    %v3196 = vpack.c.b16 %v2372, %v2364
    %v3197 = vpack.c.b16 %v2373, %v2365
    %v3198 = vpack.c.b16 %v2374, %v2366
    %v3199 = vpack.c.b16 %v2383, %v2375
    %v3200 = vpack.c.b16 %v2384, %v2376
    %v3201 = vpack.c.b16 %v2385, %v2377
    %v3202 = vpack.c.b16 %v2386, %v2378
    %v3203 = vpack.c.b16 %v2387, %v2379
    %v3204 = vpack.c.b16 %v2388, %v2380
    %v3205 = vpack.c.b16 %v2389, %v2381
    %v3206 = vpack.c.b16 %v2390, %v2382
    %v3207 = vpack.c.b16 %v2399, %v2391
    %v3208 = vpack.c.b16 %v2400, %v2392
    %v3209 = vpack.c.b16 %v2401, %v2393
    %v3210 = vpack.c.b16 %v2402, %v2394
    %v3211 = vpack.c.b16 %v2403, %v2395
    %v3212 = vpack.c.b16 %v2404, %v2396
    %v3213 = vpack.c.b16 %v2405, %v2397
    %v3214 = vpack.c.b16 %v2406, %v2398
    %v3215 = vpack.c.b16 %v2415, %v2407
    %v3216 = vpack.c.b16 %v2416, %v2408
    %v3217 = vpack.c.b16 %v2417, %v2409
    %v3218 = vpack.c.b16 %v2418, %v2410
    %v3219 = vpack.c.b16 %v2419, %v2411
    %v3220 = vpack.c.b16 %v2420, %v2412
    %v3221 = vpack.c.b16 %v2421, %v2413
    %v3222 = vpack.c.b16 %v2422, %v2414
    %v3223 = vpack.c.b16 %v2431, %v2423
    %v3224 = vpack.c.b16 %v2432, %v2424
    %v3225 = vpack.c.b16 %v2433, %v2425
    %v3226 = vpack.c.b16 %v2434, %v2426
    %v3227 = vpack.c.b16 %v2435, %v2427
    %v3228 = vpack.c.b16 %v2436, %v2428
    %v3229 = vpack.c.b16 %v2437, %v2429
    %v3230 = vpack.c.b16 %v2438, %v2430
    %v3231 = vpack.c.b16 %v2447, %v2439
    %v3232 = vpack.c.b16 %v2448, %v2440
    %v3233 = vpack.c.b16 %v2449, %v2441
    %v3234 = vpack.c.b16 %v2450, %v2442
    %v3235 = vpack.c.b16 %v2451, %v2443
    %v3236 = vpack.c.b16 %v2452, %v2444
    %v3237 = vpack.c.b16 %v2453, %v2445
    %v3238 = vpack.c.b16 %v2454, %v2446
    %v3239 = vpack.c.b16 %v2463, %v2455
    %v3240 = vpack.c.b16 %v2464, %v2456
    %v3241 = vpack.c.b16 %v2465, %v2457
    %v3242 = vpack.c.b16 %v2466, %v2458
    %v3243 = vpack.c.b16 %v2467, %v2459
    %v3244 = vpack.c.b16 %v2468, %v2460
    %v3245 = vpack.c.b16 %v2469, %v2461
    %v3246 = vpack.c.b16 %v2470, %v2462
    %v3247 = vpack.c.b16 %v2479, %v2471
    %v3248 = vpack.c.b16 %v2480, %v2472
    %v3249 = vpack.c.b16 %v2481, %v2473
    %v3250 = vpack.c.b16 %v2482, %v2474
    %v3251 = vpack.c.b16 %v2483, %v2475
    %v3252 = vpack.c.b16 %v2484, %v2476
    %v3253 = vpack.c.b16 %v2485, %v2477
    %v3254 = vpack.c.b16 %v2486, %v2478
    %v3255 = vpack.c.b16 %v2495, %v2487
    %v3256 = vpack.c.b16 %v2496, %v2488
    %v3257 = vpack.c.b16 %v2497, %v2489
    %v3258 = vpack.c.b16 %v2498, %v2490
    %v3259 = vpack.c.b16 %v2499, %v2491
    %v3260 = vpack.c.b16 %v2500, %v2492
    %v3261 = vpack.c.b16 %v2501, %v2493
    %v3262 = vpack.c.b16 %v2502, %v2494
    %v3263 = vpack.c.b16 %v2511, %v2503
    %v3264 = vpack.c.b16 %v2512, %v2504
    %v3265 = vpack.c.b16 %v2513, %v2505
    %v3266 = vpack.c.b16 %v2514, %v2506
    %v3267 = vpack.c.b16 %v2515, %v2507
    %v3268 = vpack.c.b16 %v2516, %v2508
    %v3269 = vpack.c.b16 %v2517, %v2509
    %v3270 = vpack.c.b16 %v2518, %v2510
    %v3271 = vpack.c.b16 %v2527, %v2519
    %v3272 = vpack.c.b16 %v2528, %v2520
    %v3273 = vpack.c.b16 %v2529, %v2521
    %v3274 = vpack.c.b16 %v2530, %v2522
    %v3275 = vpack.c.b16 %v2531, %v2523
    %v3276 = vpack.c.b16 %v2532, %v2524
    %v3277 = vpack.c.b16 %v2533, %v2525
    %v3278 = vpack.c.b16 %v2534, %v2526
    %v3279 = vpack.c.b16 %v2543, %v2535
    %v3280 = vpack.c.b16 %v2544, %v2536
    %v3281 = vpack.c.b16 %v2545, %v2537
    %v3282 = vpack.c.b16 %v2546, %v2538
    %v3283 = vpack.c.b16 %v2547, %v2539
    %v3284 = vpack.c.b16 %v2548, %v2540
    %v3285 = vpack.c.b16 %v2549, %v2541
    %v3286 = vpack.c.b16 %v2550, %v2542
    %v3287 = vpack.c.b16 %v2559, %v2551
    %v3288 = vpack.c.b16 %v2560, %v2552
    %v3289 = vpack.c.b16 %v2561, %v2553
    %v3290 = vpack.c.b16 %v2562, %v2554
    %v3291 = vpack.c.b16 %v2563, %v2555
    %v3292 = vpack.c.b16 %v2564, %v2556
    %v3293 = vpack.c.b16 %v2565, %v2557
    %v3294 = vpack.c.b16 %v2566, %v2558
    %v3295 = vpack.c.b16 %v2575, %v2567
    %v3296 = vpack.c.b16 %v2576, %v2568
    %v3297 = vpack.c.b16 %v2577, %v2569
    %v3298 = vpack.c.b16 %v2578, %v2570
    %v3299 = vpack.c.b16 %v2579, %v2571
    %v3300 = vpack.c.b16 %v2580, %v2572
    %v3301 = vpack.c.b16 %v2581, %v2573
    %v3302 = vpack.c.b16 %v2582, %v2574
    %v3303 = vpack.c.b16 %v2591, %v2583
    %v3304 = vpack.c.b16 %v2592, %v2584
    %v3305 = vpack.c.b16 %v2593, %v2585
    %v3306 = vpack.c.b16 %v2594, %v2586
    %v3307 = vpack.c.b16 %v2595, %v2587
    %v3308 = vpack.c.b16 %v2596, %v2588
    %v3309 = vpack.c.b16 %v2597, %v2589
    %v3310 = vpack.c.b16 %v2598, %v2590
    %v3311 = vpack.c.b16 %v2607, %v2599
    %v3312 = vpack.c.b16 %v2608, %v2600
    %v3313 = vpack.c.b16 %v2609, %v2601
    %v3314 = vpack.c.b16 %v2610, %v2602
    %v3315 = vpack.c.b16 %v2611, %v2603
    %v3316 = vpack.c.b16 %v2612, %v2604
    %v3317 = vpack.c.b16 %v2613, %v2605
    %v3318 = vpack.c.b16 %v2614, %v2606
    %v3319 = vpack.c.b16 %v2623, %v2615
    %v3320 = vpack.c.b16 %v2624, %v2616
    %v3321 = vpack.c.b16 %v2625, %v2617
    %v3322 = vpack.c.b16 %v2626, %v2618
    %v3323 = vpack.c.b16 %v2627, %v2619
    %v3324 = vpack.c.b16 %v2628, %v2620
    %v3325 = vpack.c.b16 %v2629, %v2621
    %v3326 = vpack.c.b16 %v2630, %v2622
    %v3327 = vpack.c.b16 %v2639, %v2631
    %v3328 = vpack.c.b16 %v2640, %v2632
    %v3329 = vpack.c.b16 %v2641, %v2633
    %v3330 = vpack.c.b16 %v2642, %v2634
    %v3331 = vpack.c.b16 %v2643, %v2635
    %v3332 = vpack.c.b16 %v2644, %v2636
    %v3333 = vpack.c.b16 %v2645, %v2637
    %v3334 = vpack.c.b16 %v2646, %v2638
    %v3335 = vpack.c.b16 %v2655, %v2647
    %v3336 = vpack.c.b16 %v2656, %v2648
    %v3337 = vpack.c.b16 %v2657, %v2649
    %v3338 = vpack.c.b16 %v2658, %v2650
    %v3339 = vpack.c.b16 %v2659, %v2651
    %v3340 = vpack.c.b16 %v2660, %v2652
    %v3341 = vpack.c.b16 %v2661, %v2653
    %v3342 = vpack.c.b16 %v2662, %v2654
    %v3343 = vpack.c.b16 %v2671, %v2663
    %v3344 = vpack.c.b16 %v2672, %v2664
    %v3345 = vpack.c.b16 %v2673, %v2665
    %v3346 = vpack.c.b16 %v2674, %v2666
    %v3347 = vpack.c.b16 %v2675, %v2667
    %v3348 = vpack.c.b16 %v2676, %v2668
    %v3349 = vpack.c.b16 %v2677, %v2669
    %v3350 = vpack.c.b16 %v2678, %v2670
    %v3351 = vpack.c.b16 %v2687, %v2679
    %v3352 = vpack.c.b16 %v2688, %v2680
    %v3353 = vpack.c.b16 %v2689, %v2681
    %v3354 = vpack.c.b16 %v2690, %v2682
    %v3355 = vpack.c.b16 %v2691, %v2683
    %v3356 = vpack.c.b16 %v2692, %v2684
    %v3357 = vpack.c.b16 %v2693, %v2685
    %v3358 = vpack.c.b16 %v2694, %v2686
    %v3359 = vpack.c.b16 %v2703, %v2695
    %v3360 = vpack.c.b16 %v2704, %v2696
    %v3361 = vpack.c.b16 %v2705, %v2697
    %v3362 = vpack.c.b16 %v2706, %v2698
    %v3363 = vpack.c.b16 %v2707, %v2699
    %v3364 = vpack.c.b16 %v2708, %v2700
    %v3365 = vpack.c.b16 %v2709, %v2701
    %v3366 = vpack.c.b16 %v2710, %v2702
    %v3367 = vpack.c.b16 %v2719, %v2711
    %v3368 = vpack.c.b16 %v2720, %v2712
    %v3369 = vpack.c.b16 %v2721, %v2713
    %v3370 = vpack.c.b16 %v2722, %v2714
    %v3371 = vpack.c.b16 %v2723, %v2715
    %v3372 = vpack.c.b16 %v2724, %v2716
    %v3373 = vpack.c.b16 %v2725, %v2717
    %v3374 = vpack.c.b16 %v2726, %v2718
    %v3375 = vpack.c.b16 %v2735, %v2727
    %v3376 = vpack.c.b16 %v2736, %v2728
    %v3377 = vpack.c.b16 %v2737, %v2729
    %v3378 = vpack.c.b16 %v2738, %v2730
    %v3379 = vpack.c.b16 %v2739, %v2731
    %v3380 = vpack.c.b16 %v2740, %v2732
    %v3381 = vpack.c.b16 %v2741, %v2733
    %v3382 = vpack.c.b16 %v2742, %v2734
    %4023 = vmatprep.subr.bf16.mxu0 %v2744
    %4024 = vmatpush1.bf16.msra.mxu0 %v2743
    %4025 = vmatprep.subr.bf16.mxu0 %v2752
    %4026 = vmatpush1.bf16.msra.mxu0 %v2751
    %4027 = vmatprep.subr.bf16.mxu0 %v2760
    %4028 = vmatpush1.bf16.msra.mxu0 %v2759
    %4029 = vmatprep.subr.bf16.mxu0 %v2768
    %4030 = vmatpush1.bf16.msra.mxu0 %v2767
    %4031 = vmatprep.subr.bf16.mxu0 %v2776
    %4032 = vmatpush1.bf16.msra.mxu0 %v2775
    %4033 = vmatprep.subr.bf16.mxu0 %v2784
    %4034 = vmatpush1.bf16.msra.mxu0 %v2783
    %4035 = vmatprep.subr.bf16.mxu0 %v2792
    %4036 = vmatpush1.bf16.msra.mxu0 %v2791
    %4037 = vmatprep.subr.bf16.mxu0 %v2800
    %4038 = vmatpush1.bf16.msra.mxu0 %v2799
    %4039 = vmatprep.subr.bf16.mxu0 %v2808
    %4040 = vmatpush1.bf16.msra.mxu0 %v2807
    %4041 = vmatprep.subr.bf16.mxu0 %v2816
    %4042 = vmatpush1.bf16.msra.mxu0 %v2815
    %4043 = vmatprep.subr.bf16.mxu0 %v2824
    %4044 = vmatpush1.bf16.msra.mxu0 %v2823
    %4045 = vmatprep.subr.bf16.mxu0 %v2832
    %4046 = vmatpush1.bf16.msra.mxu0 %v2831
    %4047 = vmatprep.subr.bf16.mxu0 %v2840
    %4048 = vmatpush1.bf16.msra.mxu0 %v2839
    %4049 = vmatprep.subr.bf16.mxu0 %v2848
    %4050 = vmatpush1.bf16.msra.mxu0 %v2847
    %4051 = vmatprep.subr.bf16.mxu0 %v2856
    %4052 = vmatpush1.bf16.msra.mxu0 %v2855
    %4053 = vmatprep.subr.bf16.mxu0 %v2864
    %4054 = vmatpush1.bf16.msra.mxu0 %v2863
    %4055 = vmatprep.mubr.bf16.mxu0 %v132
    %4056 = vmatmul.mubr.bf16.gmra.mrb[0].mxu0 %v131
    %v4057 = vpop.f32.mrb[0].mxu0
    %v4058 = vadd.f32 %v786, %v4057
    %v4059 = vpop.f32.mrb[0].mxu0
    %v4060 = vadd.f32 %v790, %v4059
    %v4061 = vpop.f32.mrb[0].mxu0
    %v4062 = vpop.f32.mrb[0].mxu0
    %4063 = vdwg.mxu0
    %4064 = vmatprep.subr.bf16.mxu0 %v2872
    %4065 = vmatpush1.bf16.msra.mxu0 %v2871
    %4066 = vmatprep.subr.bf16.mxu0 %v2880
    %4067 = vmatpush1.bf16.msra.mxu0 %v2879
    %4068 = vmatprep.subr.bf16.mxu0 %v2888
    %4069 = vmatpush1.bf16.msra.mxu0 %v2887
    %4070 = vmatprep.subr.bf16.mxu0 %v2896
    %4071 = vmatpush1.bf16.msra.mxu0 %v2895
    %4072 = vmatprep.subr.bf16.mxu0 %v2904
    %4073 = vmatpush1.bf16.msra.mxu0 %v2903
    %4074 = vmatprep.subr.bf16.mxu0 %v2912
    %4075 = vmatpush1.bf16.msra.mxu0 %v2911
    %4076 = vmatprep.subr.bf16.mxu0 %v2920
    %4077 = vmatpush1.bf16.msra.mxu0 %v2919
    %4078 = vmatprep.subr.bf16.mxu0 %v2928
    %4079 = vmatpush1.bf16.msra.mxu0 %v2927
    %4080 = vmatprep.subr.bf16.mxu0 %v2936
    %4081 = vmatpush1.bf16.msra.mxu0 %v2935
    %4082 = vmatprep.subr.bf16.mxu0 %v2944
    %4083 = vmatpush1.bf16.msra.mxu0 %v2943
    %4084 = vmatprep.subr.bf16.mxu0 %v2952
    %4085 = vmatpush1.bf16.msra.mxu0 %v2951
    %4086 = vmatprep.subr.bf16.mxu0 %v2960
    %4087 = vmatpush1.bf16.msra.mxu0 %v2959
    %4088 = vmatprep.subr.bf16.mxu0 %v2968
    %4089 = vmatpush1.bf16.msra.mxu0 %v2967
    %4090 = vmatprep.subr.bf16.mxu0 %v2976
    %4091 = vmatpush1.bf16.msra.mxu0 %v2975
    %4092 = vmatprep.subr.bf16.mxu0 %v2984
    %4093 = vmatpush1.bf16.msra.mxu0 %v2983
    %4094 = vmatprep.subr.bf16.mxu0 %v2992
    %4095 = vmatpush1.bf16.msra.mxu0 %v2991
    %4096 = vmatprep.mubr.bf16.mxu0 %v134
    %4097 = vmatmul.mubr.bf16.gmra.mrb[0].mxu0 %v133
    %v4098 = vpop.f32.mrb[0].mxu0
    %v4099 = vadd.f32 %v4058, %v4098
    %v4100 = vpop.f32.mrb[0].mxu0
    %v4101 = vadd.f32 %v4060, %v4100
    %v4102 = vpop.f32.mrb[0].mxu0
    %v4103 = vpop.f32.mrb[0].mxu0
    %4104 = vdwg.mxu0
    %4105 = vmatprep.subr.bf16.mxu0 %v3000
    %4106 = vmatpush1.bf16.msra.mxu0 %v2999
    %4107 = vmatprep.subr.bf16.mxu0 %v3008
    %4108 = vmatpush1.bf16.msra.mxu0 %v3007
    %4109 = vmatprep.subr.bf16.mxu0 %v3016
    %4110 = vmatpush1.bf16.msra.mxu0 %v3015
    %4111 = vmatprep.subr.bf16.mxu0 %v3024
    %4112 = vmatpush1.bf16.msra.mxu0 %v3023
    %4113 = vmatprep.subr.bf16.mxu0 %v3032
    %4114 = vmatpush1.bf16.msra.mxu0 %v3031
    %4115 = vmatprep.subr.bf16.mxu0 %v3040
    %4116 = vmatpush1.bf16.msra.mxu0 %v3039
    %4117 = vmatprep.subr.bf16.mxu0 %v3048
    %4118 = vmatpush1.bf16.msra.mxu0 %v3047
    %4119 = vmatprep.subr.bf16.mxu0 %v3056
    %4120 = vmatpush1.bf16.msra.mxu0 %v3055
    %4121 = vmatprep.subr.bf16.mxu0 %v3064
    %4122 = vmatpush1.bf16.msra.mxu0 %v3063
    %4123 = vmatprep.subr.bf16.mxu0 %v3072
    %4124 = vmatpush1.bf16.msra.mxu0 %v3071
    %4125 = vmatprep.subr.bf16.mxu0 %v3080
    %4126 = vmatpush1.bf16.msra.mxu0 %v3079
    %4127 = vmatprep.subr.bf16.mxu0 %v3088
    %4128 = vmatpush1.bf16.msra.mxu0 %v3087
    %4129 = vmatprep.subr.bf16.mxu0 %v3096
    %4130 = vmatpush1.bf16.msra.mxu0 %v3095
    %4131 = vmatprep.subr.bf16.mxu0 %v3104
    %4132 = vmatpush1.bf16.msra.mxu0 %v3103
    %4133 = vmatprep.subr.bf16.mxu0 %v3112
    %4134 = vmatpush1.bf16.msra.mxu0 %v3111
    %4135 = vmatprep.subr.bf16.mxu0 %v3120
    %4136 = vmatpush1.bf16.msra.mxu0 %v3119
    %4137 = vmatprep.mubr.bf16.mxu0 %v136
    %4138 = vmatmul.mubr.bf16.gmra.mrb[0].mxu0 %v135
    %v4139 = vpop.f32.mrb[0].mxu0
    %v4140 = vadd.f32 %v4099, %v4139
    %v4141 = vpop.f32.mrb[0].mxu0
    %v4142 = vadd.f32 %v4101, %v4141
    %v4143 = vpop.f32.mrb[0].mxu0
    %v4144 = vpop.f32.mrb[0].mxu0
    %4145 = vdwg.mxu0
    %4146 = vmatprep.subr.bf16.mxu0 %v3128
    %4147 = vmatpush1.bf16.msra.mxu0 %v3127
    %4148 = vmatprep.subr.bf16.mxu0 %v3136
    %4149 = vmatpush1.bf16.msra.mxu0 %v3135
    %4150 = vmatprep.subr.bf16.mxu0 %v3144
    %4151 = vmatpush1.bf16.msra.mxu0 %v3143
    %4152 = vmatprep.subr.bf16.mxu0 %v3152
    %4153 = vmatpush1.bf16.msra.mxu0 %v3151
    %4154 = vmatprep.subr.bf16.mxu0 %v3160
    %4155 = vmatpush1.bf16.msra.mxu0 %v3159
    %4156 = vmatprep.subr.bf16.mxu0 %v3168
    %4157 = vmatpush1.bf16.msra.mxu0 %v3167
    %4158 = vmatprep.subr.bf16.mxu0 %v3176
    %4159 = vmatpush1.bf16.msra.mxu0 %v3175
    %4160 = vmatprep.subr.bf16.mxu0 %v3184
    %4161 = vmatpush1.bf16.msra.mxu0 %v3183
    %4162 = vmatprep.subr.bf16.mxu0 %v3192
    %4163 = vmatpush1.bf16.msra.mxu0 %v3191
    %4164 = vmatprep.subr.bf16.mxu0 %v3200
    %4165 = vmatpush1.bf16.msra.mxu0 %v3199
    %4166 = vmatprep.subr.bf16.mxu0 %v3208
    %4167 = vmatpush1.bf16.msra.mxu0 %v3207
    %4168 = vmatprep.subr.bf16.mxu0 %v3216
    %4169 = vmatpush1.bf16.msra.mxu0 %v3215
    %4170 = vmatprep.subr.bf16.mxu0 %v3224
    %4171 = vmatpush1.bf16.msra.mxu0 %v3223
    %4172 = vmatprep.subr.bf16.mxu0 %v3232
    %4173 = vmatpush1.bf16.msra.mxu0 %v3231
    %4174 = vmatprep.subr.bf16.mxu0 %v3240
    %4175 = vmatpush1.bf16.msra.mxu0 %v3239
    %4176 = vmatprep.subr.bf16.mxu0 %v3248
    %4177 = vmatpush1.bf16.msra.mxu0 %v3247
    %4178 = vmatprep.mubr.bf16.mxu0 %v138
    %4179 = vmatmul.mubr.bf16.gmra.mrb[0].mxu0 %v137
    %v4180 = vpop.f32.mrb[0].mxu0
    %v4181 = vadd.f32 %v4140, %v4180
    %v4182 = vpop.f32.mrb[0].mxu0
    %v4183 = vadd.f32 %v4142, %v4182
    %v4184 = vpop.f32.mrb[0].mxu0
    %v4185 = vpop.f32.mrb[0].mxu0
    %4186 = vdwg.mxu0
    %4187 = vmatprep.subr.bf16.mxu0 %v3256
    %4188 = vmatpush1.bf16.msra.mxu0 %v3255
    %4189 = vmatprep.subr.bf16.mxu0 %v3264
    %4190 = vmatpush1.bf16.msra.mxu0 %v3263
    %4191 = vmatprep.subr.bf16.mxu0 %v3272
    %4192 = vmatpush1.bf16.msra.mxu0 %v3271
    %4193 = vmatprep.subr.bf16.mxu0 %v3280
    %4194 = vmatpush1.bf16.msra.mxu0 %v3279
    %4195 = vmatprep.subr.bf16.mxu0 %v3288
    %4196 = vmatpush1.bf16.msra.mxu0 %v3287
    %4197 = vmatprep.subr.bf16.mxu0 %v3296
    %4198 = vmatpush1.bf16.msra.mxu0 %v3295
    %4199 = vmatprep.subr.bf16.mxu0 %v3304
    %4200 = vmatpush1.bf16.msra.mxu0 %v3303
    %4201 = vmatprep.subr.bf16.mxu0 %v3312
    %4202 = vmatpush1.bf16.msra.mxu0 %v3311
    %4203 = vmatprep.subr.bf16.mxu0 %v3320
    %4204 = vmatpush1.bf16.msra.mxu0 %v3319
    %4205 = vmatprep.subr.bf16.mxu0 %v3328
    %4206 = vmatpush1.bf16.msra.mxu0 %v3327
    %4207 = vmatprep.subr.bf16.mxu0 %v3336
    %4208 = vmatpush1.bf16.msra.mxu0 %v3335
    %4209 = vmatprep.subr.bf16.mxu0 %v3344
    %4210 = vmatpush1.bf16.msra.mxu0 %v3343
    %4211 = vmatprep.subr.bf16.mxu0 %v3352
    %4212 = vmatpush1.bf16.msra.mxu0 %v3351
    %4213 = vmatprep.subr.bf16.mxu0 %v3360
    %4214 = vmatpush1.bf16.msra.mxu0 %v3359
    %4215 = vmatprep.subr.bf16.mxu0 %v3368
    %4216 = vmatpush1.bf16.msra.mxu0 %v3367
    %4217 = vmatprep.subr.bf16.mxu0 %v3376
    %4218 = vmatpush1.bf16.msra.mxu0 %v3375
    %4219 = vmatprep.mubr.bf16.mxu0 %v140
    %4220 = vmatmul.mubr.bf16.gmra.mrb[0].mxu0 %v139
    %v4221 = vpop.f32.mrb[0].mxu0
    %v4222 = vadd.f32 %v4181, %v4221
    %v4223 = vpop.f32.mrb[0].mxu0
    %v4224 = vadd.f32 %v4183, %v4223
    %v4225 = vpop.f32.mrb[0].mxu0
    %v4226 = vpop.f32.mrb[0].mxu0
    %4227 = vdwg.mxu0
    %4228 = vmatprep.subr.bf16.mxu0 %v2746
    %4229 = vmatpush1.bf16.msra.mxu0 %v2745
    %4230 = vmatprep.subr.bf16.mxu0 %v2754
    %4231 = vmatpush1.bf16.msra.mxu0 %v2753
    %4232 = vmatprep.subr.bf16.mxu0 %v2762
    %4233 = vmatpush1.bf16.msra.mxu0 %v2761
    %4234 = vmatprep.subr.bf16.mxu0 %v2770
    %4235 = vmatpush1.bf16.msra.mxu0 %v2769
    %4236 = vmatprep.subr.bf16.mxu0 %v2778
    %4237 = vmatpush1.bf16.msra.mxu0 %v2777
    %4238 = vmatprep.subr.bf16.mxu0 %v2786
    %4239 = vmatpush1.bf16.msra.mxu0 %v2785
    %4240 = vmatprep.subr.bf16.mxu0 %v2794
    %4241 = vmatpush1.bf16.msra.mxu0 %v2793
    %4242 = vmatprep.subr.bf16.mxu0 %v2802
    %4243 = vmatpush1.bf16.msra.mxu0 %v2801
    %4244 = vmatprep.subr.bf16.mxu0 %v2810
    %4245 = vmatpush1.bf16.msra.mxu0 %v2809
    %4246 = vmatprep.subr.bf16.mxu0 %v2818
    %4247 = vmatpush1.bf16.msra.mxu0 %v2817
    %4248 = vmatprep.subr.bf16.mxu0 %v2826
    %4249 = vmatpush1.bf16.msra.mxu0 %v2825
    %4250 = vmatprep.subr.bf16.mxu0 %v2834
    %4251 = vmatpush1.bf16.msra.mxu0 %v2833
    %4252 = vmatprep.subr.bf16.mxu0 %v2842
    %4253 = vmatpush1.bf16.msra.mxu0 %v2841
    %4254 = vmatprep.subr.bf16.mxu0 %v2850
    %4255 = vmatpush1.bf16.msra.mxu0 %v2849
    %4256 = vmatprep.subr.bf16.mxu0 %v2858
    %4257 = vmatpush1.bf16.msra.mxu0 %v2857
    %4258 = vmatprep.subr.bf16.mxu0 %v2866
    %4259 = vmatpush1.bf16.msra.mxu0 %v2865
    %4260 = vmatprep.mubr.bf16.mxu0 %v132
    %4261 = vmatmul.mubr.bf16.gmra.mrb[0].mxu0 %v131
    %v4262 = vpop.f32.mrb[0].mxu0
    %v4263 = vadd.f32 %v794, %v4262
    %v4264 = vpop.f32.mrb[0].mxu0
    %v4265 = vadd.f32 %v798, %v4264
    %v4266 = vpop.f32.mrb[0].mxu0
    %v4267 = vpop.f32.mrb[0].mxu0
    %4268 = vdwg.mxu0
    %4269 = vmatprep.subr.bf16.mxu0 %v2874
    %4270 = vmatpush1.bf16.msra.mxu0 %v2873
    %4271 = vmatprep.subr.bf16.mxu0 %v2882
    %4272 = vmatpush1.bf16.msra.mxu0 %v2881
    %4273 = vmatprep.subr.bf16.mxu0 %v2890
    %4274 = vmatpush1.bf16.msra.mxu0 %v2889
    %4275 = vmatprep.subr.bf16.mxu0 %v2898
    %4276 = vmatpush1.bf16.msra.mxu0 %v2897
    %4277 = vmatprep.subr.bf16.mxu0 %v2906
    %4278 = vmatpush1.bf16.msra.mxu0 %v2905
    %4279 = vmatprep.subr.bf16.mxu0 %v2914
    %4280 = vmatpush1.bf16.msra.mxu0 %v2913
    %4281 = vmatprep.subr.bf16.mxu0 %v2922
    %4282 = vmatpush1.bf16.msra.mxu0 %v2921
    %4283 = vmatprep.subr.bf16.mxu0 %v2930
    %4284 = vmatpush1.bf16.msra.mxu0 %v2929
    %4285 = vmatprep.subr.bf16.mxu0 %v2938
    %4286 = vmatpush1.bf16.msra.mxu0 %v2937
    %4287 = vmatprep.subr.bf16.mxu0 %v2946
    %4288 = vmatpush1.bf16.msra.mxu0 %v2945
    %4289 = vmatprep.subr.bf16.mxu0 %v2954
    %4290 = vmatpush1.bf16.msra.mxu0 %v2953
    %4291 = vmatprep.subr.bf16.mxu0 %v2962
    %4292 = vmatpush1.bf16.msra.mxu0 %v2961
    %4293 = vmatprep.subr.bf16.mxu0 %v2970
    %4294 = vmatpush1.bf16.msra.mxu0 %v2969
    %4295 = vmatprep.subr.bf16.mxu0 %v2978
    %4296 = vmatpush1.bf16.msra.mxu0 %v2977
    %4297 = vmatprep.subr.bf16.mxu0 %v2986
    %4298 = vmatpush1.bf16.msra.mxu0 %v2985
    %4299 = vmatprep.subr.bf16.mxu0 %v2994
    %4300 = vmatpush1.bf16.msra.mxu0 %v2993
    %4301 = vmatprep.mubr.bf16.mxu0 %v134
    %4302 = vmatmul.mubr.bf16.gmra.mrb[0].mxu0 %v133
    %v4303 = vpop.f32.mrb[0].mxu0
    %v4304 = vadd.f32 %v4263, %v4303
    %v4305 = vpop.f32.mrb[0].mxu0
    %v4306 = vadd.f32 %v4265, %v4305
    %v4307 = vpop.f32.mrb[0].mxu0
    %v4308 = vpop.f32.mrb[0].mxu0
    %4309 = vdwg.mxu0
    %4310 = vmatprep.subr.bf16.mxu0 %v3002
    %4311 = vmatpush1.bf16.msra.mxu0 %v3001
    %4312 = vmatprep.subr.bf16.mxu0 %v3010
    %4313 = vmatpush1.bf16.msra.mxu0 %v3009
    %4314 = vmatprep.subr.bf16.mxu0 %v3018
    %4315 = vmatpush1.bf16.msra.mxu0 %v3017
    %4316 = vmatprep.subr.bf16.mxu0 %v3026
    %4317 = vmatpush1.bf16.msra.mxu0 %v3025
    %4318 = vmatprep.subr.bf16.mxu0 %v3034
    %4319 = vmatpush1.bf16.msra.mxu0 %v3033
    %4320 = vmatprep.subr.bf16.mxu0 %v3042
    %4321 = vmatpush1.bf16.msra.mxu0 %v3041
    %4322 = vmatprep.subr.bf16.mxu0 %v3050
    %4323 = vmatpush1.bf16.msra.mxu0 %v3049
    %4324 = vmatprep.subr.bf16.mxu0 %v3058
    %4325 = vmatpush1.bf16.msra.mxu0 %v3057
    %4326 = vmatprep.subr.bf16.mxu0 %v3066
    %4327 = vmatpush1.bf16.msra.mxu0 %v3065
    %4328 = vmatprep.subr.bf16.mxu0 %v3074
    %4329 = vmatpush1.bf16.msra.mxu0 %v3073
    %4330 = vmatprep.subr.bf16.mxu0 %v3082
    %4331 = vmatpush1.bf16.msra.mxu0 %v3081
    %4332 = vmatprep.subr.bf16.mxu0 %v3090
    %4333 = vmatpush1.bf16.msra.mxu0 %v3089
    %4334 = vmatprep.subr.bf16.mxu0 %v3098
    %4335 = vmatpush1.bf16.msra.mxu0 %v3097
    %4336 = vmatprep.subr.bf16.mxu0 %v3106
    %4337 = vmatpush1.bf16.msra.mxu0 %v3105
    %4338 = vmatprep.subr.bf16.mxu0 %v3114
    %4339 = vmatpush1.bf16.msra.mxu0 %v3113
    %4340 = vmatprep.subr.bf16.mxu0 %v3122
    %4341 = vmatpush1.bf16.msra.mxu0 %v3121
    %4342 = vmatprep.mubr.bf16.mxu0 %v136
    %4343 = vmatmul.mubr.bf16.gmra.mrb[0].mxu0 %v135
    %v4344 = vpop.f32.mrb[0].mxu0
    %v4345 = vadd.f32 %v4304, %v4344
    %v4346 = vpop.f32.mrb[0].mxu0
    %v4347 = vadd.f32 %v4306, %v4346
    %v4348 = vpop.f32.mrb[0].mxu0
    %v4349 = vpop.f32.mrb[0].mxu0
    %4350 = vdwg.mxu0
    %4351 = vmatprep.subr.bf16.mxu0 %v3130
    %4352 = vmatpush1.bf16.msra.mxu0 %v3129
    %4353 = vmatprep.subr.bf16.mxu0 %v3138
    %4354 = vmatpush1.bf16.msra.mxu0 %v3137
    %4355 = vmatprep.subr.bf16.mxu0 %v3146
    %4356 = vmatpush1.bf16.msra.mxu0 %v3145
    %4357 = vmatprep.subr.bf16.mxu0 %v3154
    %4358 = vmatpush1.bf16.msra.mxu0 %v3153
    %4359 = vmatprep.subr.bf16.mxu0 %v3162
    %4360 = vmatpush1.bf16.msra.mxu0 %v3161
    %4361 = vmatprep.subr.bf16.mxu0 %v3170
    %4362 = vmatpush1.bf16.msra.mxu0 %v3169
    %4363 = vmatprep.subr.bf16.mxu0 %v3178
    %4364 = vmatpush1.bf16.msra.mxu0 %v3177
    %4365 = vmatprep.subr.bf16.mxu0 %v3186
    %4366 = vmatpush1.bf16.msra.mxu0 %v3185
    %4367 = vmatprep.subr.bf16.mxu0 %v3194
    %4368 = vmatpush1.bf16.msra.mxu0 %v3193
    %4369 = vmatprep.subr.bf16.mxu0 %v3202
    %4370 = vmatpush1.bf16.msra.mxu0 %v3201
    %4371 = vmatprep.subr.bf16.mxu0 %v3210
    %4372 = vmatpush1.bf16.msra.mxu0 %v3209
    %4373 = vmatprep.subr.bf16.mxu0 %v3218
    %4374 = vmatpush1.bf16.msra.mxu0 %v3217
    %4375 = vmatprep.subr.bf16.mxu0 %v3226
    %4376 = vmatpush1.bf16.msra.mxu0 %v3225
    %4377 = vmatprep.subr.bf16.mxu0 %v3234
    %4378 = vmatpush1.bf16.msra.mxu0 %v3233
    %4379 = vmatprep.subr.bf16.mxu0 %v3242
    %4380 = vmatpush1.bf16.msra.mxu0 %v3241
    %4381 = vmatprep.subr.bf16.mxu0 %v3250
    %4382 = vmatpush1.bf16.msra.mxu0 %v3249
    %4383 = vmatprep.mubr.bf16.mxu0 %v138
    %4384 = vmatmul.mubr.bf16.gmra.mrb[0].mxu0 %v137
    %v4385 = vpop.f32.mrb[0].mxu0
    %v4386 = vadd.f32 %v4345, %v4385
    %v4387 = vpop.f32.mrb[0].mxu0
    %v4388 = vadd.f32 %v4347, %v4387
    %v4389 = vpop.f32.mrb[0].mxu0
    %v4390 = vpop.f32.mrb[0].mxu0
    %4391 = vdwg.mxu0
    %4392 = vmatprep.subr.bf16.mxu0 %v3258
    %4393 = vmatpush1.bf16.msra.mxu0 %v3257
    %4394 = vmatprep.subr.bf16.mxu0 %v3266
    %4395 = vmatpush1.bf16.msra.mxu0 %v3265
    %4396 = vmatprep.subr.bf16.mxu0 %v3274
    %4397 = vmatpush1.bf16.msra.mxu0 %v3273
    %4398 = vmatprep.subr.bf16.mxu0 %v3282
    %4399 = vmatpush1.bf16.msra.mxu0 %v3281
    %4400 = vmatprep.subr.bf16.mxu0 %v3290
    %4401 = vmatpush1.bf16.msra.mxu0 %v3289
    %4402 = vmatprep.subr.bf16.mxu0 %v3298
    %4403 = vmatpush1.bf16.msra.mxu0 %v3297
    %4404 = vmatprep.subr.bf16.mxu0 %v3306
    %4405 = vmatpush1.bf16.msra.mxu0 %v3305
    %4406 = vmatprep.subr.bf16.mxu0 %v3314
    %4407 = vmatpush1.bf16.msra.mxu0 %v3313
    %4408 = vmatprep.subr.bf16.mxu0 %v3322
    %4409 = vmatpush1.bf16.msra.mxu0 %v3321
    %4410 = vmatprep.subr.bf16.mxu0 %v3330
    %4411 = vmatpush1.bf16.msra.mxu0 %v3329
    %4412 = vmatprep.subr.bf16.mxu0 %v3338
    %4413 = vmatpush1.bf16.msra.mxu0 %v3337
    %4414 = vmatprep.subr.bf16.mxu0 %v3346
    %4415 = vmatpush1.bf16.msra.mxu0 %v3345
    %4416 = vmatprep.subr.bf16.mxu0 %v3354
    %4417 = vmatpush1.bf16.msra.mxu0 %v3353
    %4418 = vmatprep.subr.bf16.mxu0 %v3362
    %4419 = vmatpush1.bf16.msra.mxu0 %v3361
    %4420 = vmatprep.subr.bf16.mxu0 %v3370
    %4421 = vmatpush1.bf16.msra.mxu0 %v3369
    %4422 = vmatprep.subr.bf16.mxu0 %v3378
    %4423 = vmatpush1.bf16.msra.mxu0 %v3377
    %4424 = vmatprep.mubr.bf16.mxu0 %v140
    %4425 = vmatmul.mubr.bf16.gmra.mrb[0].mxu0 %v139
    %v4426 = vpop.f32.mrb[0].mxu0
    %v4427 = vadd.f32 %v4386, %v4426
    %v4428 = vpop.f32.mrb[0].mxu0
    %v4429 = vadd.f32 %v4388, %v4428
    %v4430 = vpop.f32.mrb[0].mxu0
    %v4431 = vpop.f32.mrb[0].mxu0
    %4432 = vdwg.mxu0
    %4433 = vmatprep.subr.bf16.mxu0 %v2748
    %4434 = vmatpush1.bf16.msra.mxu0 %v2747
    %4435 = vmatprep.subr.bf16.mxu0 %v2756
    %4436 = vmatpush1.bf16.msra.mxu0 %v2755
    %4437 = vmatprep.subr.bf16.mxu0 %v2764
    %4438 = vmatpush1.bf16.msra.mxu0 %v2763
    %4439 = vmatprep.subr.bf16.mxu0 %v2772
    %4440 = vmatpush1.bf16.msra.mxu0 %v2771
    %4441 = vmatprep.subr.bf16.mxu0 %v2780
    %4442 = vmatpush1.bf16.msra.mxu0 %v2779
    %4443 = vmatprep.subr.bf16.mxu0 %v2788
    %4444 = vmatpush1.bf16.msra.mxu0 %v2787
    %4445 = vmatprep.subr.bf16.mxu0 %v2796
    %4446 = vmatpush1.bf16.msra.mxu0 %v2795
    %4447 = vmatprep.subr.bf16.mxu0 %v2804
    %4448 = vmatpush1.bf16.msra.mxu0 %v2803
    %4449 = vmatprep.subr.bf16.mxu0 %v2812
    %4450 = vmatpush1.bf16.msra.mxu0 %v2811
    %4451 = vmatprep.subr.bf16.mxu0 %v2820
    %4452 = vmatpush1.bf16.msra.mxu0 %v2819
    %4453 = vmatprep.subr.bf16.mxu0 %v2828
    %4454 = vmatpush1.bf16.msra.mxu0 %v2827
    %4455 = vmatprep.subr.bf16.mxu0 %v2836
    %4456 = vmatpush1.bf16.msra.mxu0 %v2835
    %4457 = vmatprep.subr.bf16.mxu0 %v2844
    %4458 = vmatpush1.bf16.msra.mxu0 %v2843
    %4459 = vmatprep.subr.bf16.mxu0 %v2852
    %4460 = vmatpush1.bf16.msra.mxu0 %v2851
    %4461 = vmatprep.subr.bf16.mxu0 %v2860
    %4462 = vmatpush1.bf16.msra.mxu0 %v2859
    %4463 = vmatprep.subr.bf16.mxu0 %v2868
    %4464 = vmatpush1.bf16.msra.mxu0 %v2867
    %4465 = vmatprep.mubr.bf16.mxu0 %v132
    %4466 = vmatmul.mubr.bf16.gmra.mrb[0].mxu0 %v131
    %v4467 = vpop.f32.mrb[0].mxu0
    %v4468 = vadd.f32 %v802, %v4467
    %v4469 = vpop.f32.mrb[0].mxu0
    %v4470 = vadd.f32 %v806, %v4469
    %v4471 = vpop.f32.mrb[0].mxu0
    %v4472 = vpop.f32.mrb[0].mxu0
    %4473 = vdwg.mxu0
    %4474 = vmatprep.subr.bf16.mxu0 %v2876
    %4475 = vmatpush1.bf16.msra.mxu0 %v2875
    %4476 = vmatprep.subr.bf16.mxu0 %v2884
    %4477 = vmatpush1.bf16.msra.mxu0 %v2883
    %4478 = vmatprep.subr.bf16.mxu0 %v2892
    %4479 = vmatpush1.bf16.msra.mxu0 %v2891
    %4480 = vmatprep.subr.bf16.mxu0 %v2900
    %4481 = vmatpush1.bf16.msra.mxu0 %v2899
    %4482 = vmatprep.subr.bf16.mxu0 %v2908
    %4483 = vmatpush1.bf16.msra.mxu0 %v2907
    %4484 = vmatprep.subr.bf16.mxu0 %v2916
    %4485 = vmatpush1.bf16.msra.mxu0 %v2915
    %4486 = vmatprep.subr.bf16.mxu0 %v2924
    %4487 = vmatpush1.bf16.msra.mxu0 %v2923
    %4488 = vmatprep.subr.bf16.mxu0 %v2932
    %4489 = vmatpush1.bf16.msra.mxu0 %v2931
    %4490 = vmatprep.subr.bf16.mxu0 %v2940
    %4491 = vmatpush1.bf16.msra.mxu0 %v2939
    %4492 = vmatprep.subr.bf16.mxu0 %v2948
    %4493 = vmatpush1.bf16.msra.mxu0 %v2947
    %4494 = vmatprep.subr.bf16.mxu0 %v2956
    %4495 = vmatpush1.bf16.msra.mxu0 %v2955
    %4496 = vmatprep.subr.bf16.mxu0 %v2964
    %4497 = vmatpush1.bf16.msra.mxu0 %v2963
    %4498 = vmatprep.subr.bf16.mxu0 %v2972
    %4499 = vmatpush1.bf16.msra.mxu0 %v2971
    %4500 = vmatprep.subr.bf16.mxu0 %v2980
    %4501 = vmatpush1.bf16.msra.mxu0 %v2979
    %4502 = vmatprep.subr.bf16.mxu0 %v2988
    %4503 = vmatpush1.bf16.msra.mxu0 %v2987
    %4504 = vmatprep.subr.bf16.mxu0 %v2996
    %4505 = vmatpush1.bf16.msra.mxu0 %v2995
    %4506 = vmatprep.mubr.bf16.mxu0 %v134
    %4507 = vmatmul.mubr.bf16.gmra.mrb[0].mxu0 %v133
    %v4508 = vpop.f32.mrb[0].mxu0
    %v4509 = vadd.f32 %v4468, %v4508
    %v4510 = vpop.f32.mrb[0].mxu0
    %v4511 = vadd.f32 %v4470, %v4510
    %v4512 = vpop.f32.mrb[0].mxu0
    %v4513 = vpop.f32.mrb[0].mxu0
    %4514 = vdwg.mxu0
    %4515 = vmatprep.subr.bf16.mxu0 %v3004
    %4516 = vmatpush1.bf16.msra.mxu0 %v3003
    %4517 = vmatprep.subr.bf16.mxu0 %v3012
    %4518 = vmatpush1.bf16.msra.mxu0 %v3011
    %4519 = vmatprep.subr.bf16.mxu0 %v3020
    %4520 = vmatpush1.bf16.msra.mxu0 %v3019
    %4521 = vmatprep.subr.bf16.mxu0 %v3028
    %4522 = vmatpush1.bf16.msra.mxu0 %v3027
    %4523 = vmatprep.subr.bf16.mxu0 %v3036
    %4524 = vmatpush1.bf16.msra.mxu0 %v3035
    %4525 = vmatprep.subr.bf16.mxu0 %v3044
    %4526 = vmatpush1.bf16.msra.mxu0 %v3043
    %4527 = vmatprep.subr.bf16.mxu0 %v3052
    %4528 = vmatpush1.bf16.msra.mxu0 %v3051
    %4529 = vmatprep.subr.bf16.mxu0 %v3060
    %4530 = vmatpush1.bf16.msra.mxu0 %v3059
    %4531 = vmatprep.subr.bf16.mxu0 %v3068
    %4532 = vmatpush1.bf16.msra.mxu0 %v3067
    %4533 = vmatprep.subr.bf16.mxu0 %v3076
    %4534 = vmatpush1.bf16.msra.mxu0 %v3075
    %4535 = vmatprep.subr.bf16.mxu0 %v3084
    %4536 = vmatpush1.bf16.msra.mxu0 %v3083
    %4537 = vmatprep.subr.bf16.mxu0 %v3092
    %4538 = vmatpush1.bf16.msra.mxu0 %v3091
    %4539 = vmatprep.subr.bf16.mxu0 %v3100
    %4540 = vmatpush1.bf16.msra.mxu0 %v3099
    %4541 = vmatprep.subr.bf16.mxu0 %v3108
    %4542 = vmatpush1.bf16.msra.mxu0 %v3107
    %4543 = vmatprep.subr.bf16.mxu0 %v3116
    %4544 = vmatpush1.bf16.msra.mxu0 %v3115
    %4545 = vmatprep.subr.bf16.mxu0 %v3124
    %4546 = vmatpush1.bf16.msra.mxu0 %v3123
    %4547 = vmatprep.mubr.bf16.mxu0 %v136
    %4548 = vmatmul.mubr.bf16.gmra.mrb[0].mxu0 %v135
    %v4549 = vpop.f32.mrb[0].mxu0
    %v4550 = vadd.f32 %v4509, %v4549
    %v4551 = vpop.f32.mrb[0].mxu0
    %v4552 = vadd.f32 %v4511, %v4551
    %v4553 = vpop.f32.mrb[0].mxu0
    %v4554 = vpop.f32.mrb[0].mxu0
    %4555 = vdwg.mxu0
    %4556 = vmatprep.subr.bf16.mxu0 %v3132
    %4557 = vmatpush1.bf16.msra.mxu0 %v3131
    %4558 = vmatprep.subr.bf16.mxu0 %v3140
    %4559 = vmatpush1.bf16.msra.mxu0 %v3139
    %4560 = vmatprep.subr.bf16.mxu0 %v3148
    %4561 = vmatpush1.bf16.msra.mxu0 %v3147
    %4562 = vmatprep.subr.bf16.mxu0 %v3156
    %4563 = vmatpush1.bf16.msra.mxu0 %v3155
    %4564 = vmatprep.subr.bf16.mxu0 %v3164
    %4565 = vmatpush1.bf16.msra.mxu0 %v3163
    %4566 = vmatprep.subr.bf16.mxu0 %v3172
    %4567 = vmatpush1.bf16.msra.mxu0 %v3171
    %4568 = vmatprep.subr.bf16.mxu0 %v3180
    %4569 = vmatpush1.bf16.msra.mxu0 %v3179
    %4570 = vmatprep.subr.bf16.mxu0 %v3188
    %4571 = vmatpush1.bf16.msra.mxu0 %v3187
    %4572 = vmatprep.subr.bf16.mxu0 %v3196
    %4573 = vmatpush1.bf16.msra.mxu0 %v3195
    %4574 = vmatprep.subr.bf16.mxu0 %v3204
    %4575 = vmatpush1.bf16.msra.mxu0 %v3203
    %4576 = vmatprep.subr.bf16.mxu0 %v3212
    %4577 = vmatpush1.bf16.msra.mxu0 %v3211
    %4578 = vmatprep.subr.bf16.mxu0 %v3220
    %4579 = vmatpush1.bf16.msra.mxu0 %v3219
    %4580 = vmatprep.subr.bf16.mxu0 %v3228
    %4581 = vmatpush1.bf16.msra.mxu0 %v3227
    %4582 = vmatprep.subr.bf16.mxu0 %v3236
    %4583 = vmatpush1.bf16.msra.mxu0 %v3235
    %4584 = vmatprep.subr.bf16.mxu0 %v3244
    %4585 = vmatpush1.bf16.msra.mxu0 %v3243
    %4586 = vmatprep.subr.bf16.mxu0 %v3252
    %4587 = vmatpush1.bf16.msra.mxu0 %v3251
    %4588 = vmatprep.mubr.bf16.mxu0 %v138
    %4589 = vmatmul.mubr.bf16.gmra.mrb[0].mxu0 %v137
    %v4590 = vpop.f32.mrb[0].mxu0
    %v4591 = vadd.f32 %v4550, %v4590
    %v4592 = vpop.f32.mrb[0].mxu0
    %v4593 = vadd.f32 %v4552, %v4592
    %v4594 = vpop.f32.mrb[0].mxu0
    %v4595 = vpop.f32.mrb[0].mxu0
    %4596 = vdwg.mxu0
    %4597 = vmatprep.subr.bf16.mxu0 %v3260
    %4598 = vmatpush1.bf16.msra.mxu0 %v3259
    %4599 = vmatprep.subr.bf16.mxu0 %v3268
    %4600 = vmatpush1.bf16.msra.mxu0 %v3267
    %4601 = vmatprep.subr.bf16.mxu0 %v3276
    %4602 = vmatpush1.bf16.msra.mxu0 %v3275
    %4603 = vmatprep.subr.bf16.mxu0 %v3284
    %4604 = vmatpush1.bf16.msra.mxu0 %v3283
    %4605 = vmatprep.subr.bf16.mxu0 %v3292
    %4606 = vmatpush1.bf16.msra.mxu0 %v3291
    %4607 = vmatprep.subr.bf16.mxu0 %v3300
    %4608 = vmatpush1.bf16.msra.mxu0 %v3299
    %4609 = vmatprep.subr.bf16.mxu0 %v3308
    %4610 = vmatpush1.bf16.msra.mxu0 %v3307
    %4611 = vmatprep.subr.bf16.mxu0 %v3316
    %4612 = vmatpush1.bf16.msra.mxu0 %v3315
    %4613 = vmatprep.subr.bf16.mxu0 %v3324
    %4614 = vmatpush1.bf16.msra.mxu0 %v3323
    %4615 = vmatprep.subr.bf16.mxu0 %v3332
    %4616 = vmatpush1.bf16.msra.mxu0 %v3331
    %4617 = vmatprep.subr.bf16.mxu0 %v3340
    %4618 = vmatpush1.bf16.msra.mxu0 %v3339
    %4619 = vmatprep.subr.bf16.mxu0 %v3348
    %4620 = vmatpush1.bf16.msra.mxu0 %v3347
    %4621 = vmatprep.subr.bf16.mxu0 %v3356
    %4622 = vmatpush1.bf16.msra.mxu0 %v3355
    %4623 = vmatprep.subr.bf16.mxu0 %v3364
    %4624 = vmatpush1.bf16.msra.mxu0 %v3363
    %4625 = vmatprep.subr.bf16.mxu0 %v3372
    %4626 = vmatpush1.bf16.msra.mxu0 %v3371
    %4627 = vmatprep.subr.bf16.mxu0 %v3380
    %4628 = vmatpush1.bf16.msra.mxu0 %v3379
    %4629 = vmatprep.mubr.bf16.mxu0 %v140
    %4630 = vmatmul.mubr.bf16.gmra.mrb[0].mxu0 %v139
    %v4631 = vpop.f32.mrb[0].mxu0
    %v4632 = vadd.f32 %v4591, %v4631
    %v4633 = vpop.f32.mrb[0].mxu0
    %v4634 = vadd.f32 %v4593, %v4633
    %v4635 = vpop.f32.mrb[0].mxu0
    %v4636 = vpop.f32.mrb[0].mxu0
    %4637 = vdwg.mxu0
    %4638 = vmatprep.subr.bf16.mxu0 %v2750
    %4639 = vmatpush1.bf16.msra.mxu0 %v2749
    %4640 = vmatprep.subr.bf16.mxu0 %v2758
    %4641 = vmatpush1.bf16.msra.mxu0 %v2757
    %4642 = vmatprep.subr.bf16.mxu0 %v2766
    %4643 = vmatpush1.bf16.msra.mxu0 %v2765
    %4644 = vmatprep.subr.bf16.mxu0 %v2774
    %4645 = vmatpush1.bf16.msra.mxu0 %v2773
    %4646 = vmatprep.subr.bf16.mxu0 %v2782
    %4647 = vmatpush1.bf16.msra.mxu0 %v2781
    %4648 = vmatprep.subr.bf16.mxu0 %v2790
    %4649 = vmatpush1.bf16.msra.mxu0 %v2789
    %4650 = vmatprep.subr.bf16.mxu0 %v2798
    %4651 = vmatpush1.bf16.msra.mxu0 %v2797
    %4652 = vmatprep.subr.bf16.mxu0 %v2806
    %4653 = vmatpush1.bf16.msra.mxu0 %v2805
    %4654 = vmatprep.subr.bf16.mxu0 %v2814
    %4655 = vmatpush1.bf16.msra.mxu0 %v2813
    %4656 = vmatprep.subr.bf16.mxu0 %v2822
    %4657 = vmatpush1.bf16.msra.mxu0 %v2821
    %4658 = vmatprep.subr.bf16.mxu0 %v2830
    %4659 = vmatpush1.bf16.msra.mxu0 %v2829
    %4660 = vmatprep.subr.bf16.mxu0 %v2838
    %4661 = vmatpush1.bf16.msra.mxu0 %v2837
    %4662 = vmatprep.subr.bf16.mxu0 %v2846
    %4663 = vmatpush1.bf16.msra.mxu0 %v2845
    %4664 = vmatprep.subr.bf16.mxu0 %v2854
    %4665 = vmatpush1.bf16.msra.mxu0 %v2853
    %4666 = vmatprep.subr.bf16.mxu0 %v2862
    %4667 = vmatpush1.bf16.msra.mxu0 %v2861
    %4668 = vmatprep.subr.bf16.mxu0 %v2870
    %4669 = vmatpush1.bf16.msra.mxu0 %v2869
    %4670 = vmatprep.mubr.bf16.mxu0 %v132
    %4671 = vmatmul.mubr.bf16.gmra.mrb[0].mxu0 %v131
    %v4672 = vpop.f32.mrb[0].mxu0
    %v4673 = vadd.f32 %v810, %v4672
    %v4674 = vpop.f32.mrb[0].mxu0
    %v4675 = vadd.f32 %v814, %v4674
    %v4676 = vpop.f32.mrb[0].mxu0
    %v4677 = vpop.f32.mrb[0].mxu0
    %4678 = vdwg.mxu0
    %4679 = vmatprep.subr.bf16.mxu0 %v2878
    %4680 = vmatpush1.bf16.msra.mxu0 %v2877
    %4681 = vmatprep.subr.bf16.mxu0 %v2886
    %4682 = vmatpush1.bf16.msra.mxu0 %v2885
    %4683 = vmatprep.subr.bf16.mxu0 %v2894
    %4684 = vmatpush1.bf16.msra.mxu0 %v2893
    %4685 = vmatprep.subr.bf16.mxu0 %v2902
    %4686 = vmatpush1.bf16.msra.mxu0 %v2901
    %4687 = vmatprep.subr.bf16.mxu0 %v2910
    %4688 = vmatpush1.bf16.msra.mxu0 %v2909
    %4689 = vmatprep.subr.bf16.mxu0 %v2918
    %4690 = vmatpush1.bf16.msra.mxu0 %v2917
    %4691 = vmatprep.subr.bf16.mxu0 %v2926
    %4692 = vmatpush1.bf16.msra.mxu0 %v2925
    %4693 = vmatprep.subr.bf16.mxu0 %v2934
    %4694 = vmatpush1.bf16.msra.mxu0 %v2933
    %4695 = vmatprep.subr.bf16.mxu0 %v2942
    %4696 = vmatpush1.bf16.msra.mxu0 %v2941
    %4697 = vmatprep.subr.bf16.mxu0 %v2950
    %4698 = vmatpush1.bf16.msra.mxu0 %v2949
    %4699 = vmatprep.subr.bf16.mxu0 %v2958
    %4700 = vmatpush1.bf16.msra.mxu0 %v2957
    %4701 = vmatprep.subr.bf16.mxu0 %v2966
    %4702 = vmatpush1.bf16.msra.mxu0 %v2965
    %4703 = vmatprep.subr.bf16.mxu0 %v2974
    %4704 = vmatpush1.bf16.msra.mxu0 %v2973
    %4705 = vmatprep.subr.bf16.mxu0 %v2982
    %4706 = vmatpush1.bf16.msra.mxu0 %v2981
    %4707 = vmatprep.subr.bf16.mxu0 %v2990
    %4708 = vmatpush1.bf16.msra.mxu0 %v2989
    %4709 = vmatprep.subr.bf16.mxu0 %v2998
    %4710 = vmatpush1.bf16.msra.mxu0 %v2997
    %4711 = vmatprep.mubr.bf16.mxu0 %v134
    %4712 = vmatmul.mubr.bf16.gmra.mrb[0].mxu0 %v133
    %v4713 = vpop.f32.mrb[0].mxu0
    %v4714 = vadd.f32 %v4673, %v4713
    %v4715 = vpop.f32.mrb[0].mxu0
    %v4716 = vadd.f32 %v4675, %v4715
    %v4717 = vpop.f32.mrb[0].mxu0
    %v4718 = vpop.f32.mrb[0].mxu0
    %4719 = vdwg.mxu0
    %4720 = vmatprep.subr.bf16.mxu0 %v3006
    %4721 = vmatpush1.bf16.msra.mxu0 %v3005
    %4722 = vmatprep.subr.bf16.mxu0 %v3014
    %4723 = vmatpush1.bf16.msra.mxu0 %v3013
    %4724 = vmatprep.subr.bf16.mxu0 %v3022
    %4725 = vmatpush1.bf16.msra.mxu0 %v3021
    %4726 = vmatprep.subr.bf16.mxu0 %v3030
    %4727 = vmatpush1.bf16.msra.mxu0 %v3029
    %4728 = vmatprep.subr.bf16.mxu0 %v3038
    %4729 = vmatpush1.bf16.msra.mxu0 %v3037
    %4730 = vmatprep.subr.bf16.mxu0 %v3046
    %4731 = vmatpush1.bf16.msra.mxu0 %v3045
    %4732 = vmatprep.subr.bf16.mxu0 %v3054
    %4733 = vmatpush1.bf16.msra.mxu0 %v3053
    %4734 = vmatprep.subr.bf16.mxu0 %v3062
    %4735 = vmatpush1.bf16.msra.mxu0 %v3061
    %4736 = vmatprep.subr.bf16.mxu0 %v3070
    %4737 = vmatpush1.bf16.msra.mxu0 %v3069
    %4738 = vmatprep.subr.bf16.mxu0 %v3078
    %4739 = vmatpush1.bf16.msra.mxu0 %v3077
    %4740 = vmatprep.subr.bf16.mxu0 %v3086
    %4741 = vmatpush1.bf16.msra.mxu0 %v3085
    %4742 = vmatprep.subr.bf16.mxu0 %v3094
    %4743 = vmatpush1.bf16.msra.mxu0 %v3093
    %4744 = vmatprep.subr.bf16.mxu0 %v3102
    %4745 = vmatpush1.bf16.msra.mxu0 %v3101
    %4746 = vmatprep.subr.bf16.mxu0 %v3110
    %4747 = vmatpush1.bf16.msra.mxu0 %v3109
    %4748 = vmatprep.subr.bf16.mxu0 %v3118
    %4749 = vmatpush1.bf16.msra.mxu0 %v3117
    %4750 = vmatprep.subr.bf16.mxu0 %v3126
    %4751 = vmatpush1.bf16.msra.mxu0 %v3125
    %4752 = vmatprep.mubr.bf16.mxu0 %v136
    %4753 = vmatmul.mubr.bf16.gmra.mrb[0].mxu0 %v135
    %v4754 = vpop.f32.mrb[0].mxu0
    %v4755 = vadd.f32 %v4714, %v4754
    %v4756 = vpop.f32.mrb[0].mxu0
    %v4757 = vadd.f32 %v4716, %v4756
    %v4758 = vpop.f32.mrb[0].mxu0
    %v4759 = vpop.f32.mrb[0].mxu0
    %4760 = vdwg.mxu0
    %4761 = vmatprep.subr.bf16.mxu0 %v3134
    %4762 = vmatpush1.bf16.msra.mxu0 %v3133
    %4763 = vmatprep.subr.bf16.mxu0 %v3142
    %4764 = vmatpush1.bf16.msra.mxu0 %v3141
    %4765 = vmatprep.subr.bf16.mxu0 %v3150
    %4766 = vmatpush1.bf16.msra.mxu0 %v3149
    %4767 = vmatprep.subr.bf16.mxu0 %v3158
    %4768 = vmatpush1.bf16.msra.mxu0 %v3157
    %4769 = vmatprep.subr.bf16.mxu0 %v3166
    %4770 = vmatpush1.bf16.msra.mxu0 %v3165
    %4771 = vmatprep.subr.bf16.mxu0 %v3174
    %4772 = vmatpush1.bf16.msra.mxu0 %v3173
    %4773 = vmatprep.subr.bf16.mxu0 %v3182
    %4774 = vmatpush1.bf16.msra.mxu0 %v3181
    %4775 = vmatprep.subr.bf16.mxu0 %v3190
    %4776 = vmatpush1.bf16.msra.mxu0 %v3189
    %4777 = vmatprep.subr.bf16.mxu0 %v3198
    %4778 = vmatpush1.bf16.msra.mxu0 %v3197
    %4779 = vmatprep.subr.bf16.mxu0 %v3206
    %4780 = vmatpush1.bf16.msra.mxu0 %v3205
    %4781 = vmatprep.subr.bf16.mxu0 %v3214
    %4782 = vmatpush1.bf16.msra.mxu0 %v3213
    %4783 = vmatprep.subr.bf16.mxu0 %v3222
    %4784 = vmatpush1.bf16.msra.mxu0 %v3221
    %4785 = vmatprep.subr.bf16.mxu0 %v3230
    %4786 = vmatpush1.bf16.msra.mxu0 %v3229
    %4787 = vmatprep.subr.bf16.mxu0 %v3238
    %4788 = vmatpush1.bf16.msra.mxu0 %v3237
    %4789 = vmatprep.subr.bf16.mxu0 %v3246
    %4790 = vmatpush1.bf16.msra.mxu0 %v3245
    %4791 = vmatprep.subr.bf16.mxu0 %v3254
    %4792 = vmatpush1.bf16.msra.mxu0 %v3253
    %4793 = vmatprep.mubr.bf16.mxu0 %v138
    %4794 = vmatmul.mubr.bf16.gmra.mrb[0].mxu0 %v137
    %v4795 = vpop.f32.mrb[0].mxu0
    %v4796 = vadd.f32 %v4755, %v4795
    %v4797 = vpop.f32.mrb[0].mxu0
    %v4798 = vadd.f32 %v4757, %v4797
    %v4799 = vpop.f32.mrb[0].mxu0
    %v4800 = vpop.f32.mrb[0].mxu0
    %4801 = vdwg.mxu0
    %4802 = vmatprep.subr.bf16.mxu0 %v3262
    %4803 = vmatpush1.bf16.msra.mxu0 %v3261
    %4804 = vmatprep.subr.bf16.mxu0 %v3270
    %4805 = vmatpush1.bf16.msra.mxu0 %v3269
    %4806 = vmatprep.subr.bf16.mxu0 %v3278
    %4807 = vmatpush1.bf16.msra.mxu0 %v3277
    %4808 = vmatprep.subr.bf16.mxu0 %v3286
    %4809 = vmatpush1.bf16.msra.mxu0 %v3285
    %4810 = vmatprep.subr.bf16.mxu0 %v3294
    %4811 = vmatpush1.bf16.msra.mxu0 %v3293
    %4812 = vmatprep.subr.bf16.mxu0 %v3302
    %4813 = vmatpush1.bf16.msra.mxu0 %v3301
    %4814 = vmatprep.subr.bf16.mxu0 %v3310
    %4815 = vmatpush1.bf16.msra.mxu0 %v3309
    %4816 = vmatprep.subr.bf16.mxu0 %v3318
    %4817 = vmatpush1.bf16.msra.mxu0 %v3317
    %4818 = vmatprep.subr.bf16.mxu0 %v3326
    %4819 = vmatpush1.bf16.msra.mxu0 %v3325
    %4820 = vmatprep.subr.bf16.mxu0 %v3334
    %4821 = vmatpush1.bf16.msra.mxu0 %v3333
    %4822 = vmatprep.subr.bf16.mxu0 %v3342
    %4823 = vmatpush1.bf16.msra.mxu0 %v3341
    %4824 = vmatprep.subr.bf16.mxu0 %v3350
    %4825 = vmatpush1.bf16.msra.mxu0 %v3349
    %4826 = vmatprep.subr.bf16.mxu0 %v3358
    %4827 = vmatpush1.bf16.msra.mxu0 %v3357
    %4828 = vmatprep.subr.bf16.mxu0 %v3366
    %4829 = vmatpush1.bf16.msra.mxu0 %v3365
    %4830 = vmatprep.subr.bf16.mxu0 %v3374
    %4831 = vmatpush1.bf16.msra.mxu0 %v3373
    %4832 = vmatprep.subr.bf16.mxu0 %v3382
    %4833 = vmatpush1.bf16.msra.mxu0 %v3381
    %4834 = vmatprep.mubr.bf16.mxu0 %v140
    %4835 = vmatmul.mubr.bf16.gmra.mrb[0].mxu0 %v139
    %v4836 = vpop.f32.mrb[0].mxu0
    %v4837 = vadd.f32 %v4796, %v4836
    %v4838 = vpop.f32.mrb[0].mxu0
    %v4839 = vadd.f32 %v4798, %v4838
    %v4840 = vpop.f32.mrb[0].mxu0
    %v4841 = vpop.f32.mrb[0].mxu0
    %4842 = vdwg.mxu0
    %v4843 = vmax.f32 %v4222, 0.0
    %v4844 = vmax.f32 %v4224, 0.0
    %v4845 = vmax.f32 %v4427, 0.0
    %v4846 = vmax.f32 %v4429, 0.0
    %v4847 = vmax.f32 %v4632, 0.0
    %v4848 = vmax.f32 %v4634, 0.0
    %v4849 = vmax.f32 %v4837, 0.0
    %v4850 = vmax.f32 %v4839, 0.0
    %v4851 = vpack.c.bf16 %v4843, %v4843
    %v4852 = vpack.c.bf16 %v4844, %v4844
    %v4853 = vpack.c.bf16 %v4845, %v4845
    %v4854 = vpack.c.bf16 %v4846, %v4846
    %v4855 = vpack.c.bf16 %v4847, %v4847
    %v4856 = vpack.c.bf16 %v4848, %v4848
    %v4857 = vpack.c.bf16 %v4849, %v4849
    %v4858 = vpack.c.bf16 %v4850, %v4850
    %v4859 = vld [vmem:[#allocation9] sm:$0xff]
    %v4860 = vld [vmem:[#allocation9 + $0x8] sm:$0xff]
    %v4861 = vld [vmem:[#allocation9 + $0x10] sm:$0xff]
    %v4862 = vld [vmem:[#allocation9 + $0x18] sm:$0xff]
    %v4863 = vld [vmem:[#allocation9 + $0x20] sm:$0xff]
    %v4864 = vld [vmem:[#allocation9 + $0x28] sm:$0xff]
    %v4865 = vld [vmem:[#allocation9 + $0x30] sm:$0xff]
    %v4866 = vld [vmem:[#allocation9 + $0x38] sm:$0xff]
    %v4867 = vld [vmem:[#allocation9 + $0x40] sm:$0xff]
    %v4868 = vld [vmem:[#allocation9 + $0x48] sm:$0xff]
    %v4869 = vld [vmem:[#allocation9 + $0x50] sm:$0xff]
    %v4870 = vld [vmem:[#allocation9 + $0x58] sm:$0xff]
    %v4871 = vld [vmem:[#allocation9 + $0x60] sm:$0xff]
    %v4872 = vld [vmem:[#allocation9 + $0x68] sm:$0xff]
    %v4873 = vld [vmem:[#allocation9 + $0x70] sm:$0xff]
    %v4874 = vld [vmem:[#allocation9 + $0x78] sm:$0xff]
    %v4875 = vld [vmem:[#allocation9 + $0x80] sm:$0xff]
    %v4876 = vld [vmem:[#allocation9 + $0x88] sm:$0xff]
    %v4877 = vld [vmem:[#allocation9 + $0x90] sm:$0xff]
    %v4878 = vld [vmem:[#allocation9 + $0x98] sm:$0xff]
    %v4879 = vld [vmem:[#allocation9 + $0xa0] sm:$0xff]
    %v4880 = vld [vmem:[#allocation9 + $0xa8] sm:$0xff]
    %v4881 = vld [vmem:[#allocation9 + $0xb0] sm:$0xff]
    %v4882 = vld [vmem:[#allocation9 + $0xb8] sm:$0xff]
    %v4883 = vld [vmem:[#allocation9 + $0xc0] sm:$0xff]
    %v4884 = vld [vmem:[#allocation9 + $0xc8] sm:$0xff]
    %v4885 = vld [vmem:[#allocation9 + $0xd0] sm:$0xff]
    %v4886 = vld [vmem:[#allocation9 + $0xd8] sm:$0xff]
    %v4887 = vld [vmem:[#allocation9 + $0xe0] sm:$0xff]
    %v4888 = vld [vmem:[#allocation9 + $0xe8] sm:$0xff]
    %v4889 = vld [vmem:[#allocation9 + $0xf0] sm:$0xff]
    %v4890 = vld [vmem:[#allocation9 + $0xf8] sm:$0xff]
    %v4891 = vld [vmem:[#allocation9 + $0x100] sm:$0xff]
    %v4892 = vld [vmem:[#allocation9 + $0x108] sm:$0xff]
    %v4893 = vld [vmem:[#allocation9 + $0x110] sm:$0xff]
    %v4894 = vld [vmem:[#allocation9 + $0x118] sm:$0xff]
    %v4895 = vld [vmem:[#allocation9 + $0x120] sm:$0xff]
    %v4896 = vld [vmem:[#allocation9 + $0x128] sm:$0xff]
    %v4897 = vld [vmem:[#allocation9 + $0x130] sm:$0xff]
    %v4898 = vld [vmem:[#allocation9 + $0x138] sm:$0xff]
    %v4899 = vld [vmem:[#allocation9 + $0x140] sm:$0xff]
    %v4900 = vld [vmem:[#allocation9 + $0x148] sm:$0xff]
    %v4901 = vld [vmem:[#allocation9 + $0x150] sm:$0xff]
    %v4902 = vld [vmem:[#allocation9 + $0x158] sm:$0xff]
    %v4903 = vld [vmem:[#allocation9 + $0x160] sm:$0xff]
    %v4904 = vld [vmem:[#allocation9 + $0x168] sm:$0xff]
    %v4905 = vld [vmem:[#allocation9 + $0x170] sm:$0xff]
    %v4906 = vld [vmem:[#allocation9 + $0x178] sm:$0xff]
    %v4907 = vld [vmem:[#allocation9 + $0x180] sm:$0xff]
    %v4908 = vld [vmem:[#allocation9 + $0x188] sm:$0xff]
    %v4909 = vld [vmem:[#allocation9 + $0x190] sm:$0xff]
    %v4910 = vld [vmem:[#allocation9 + $0x198] sm:$0xff]
    %v4911 = vld [vmem:[#allocation9 + $0x1a0] sm:$0xff]
    %v4912 = vld [vmem:[#allocation9 + $0x1a8] sm:$0xff]
    %v4913 = vld [vmem:[#allocation9 + $0x1b0] sm:$0xff]
    %v4914 = vld [vmem:[#allocation9 + $0x1b8] sm:$0xff]
    %v4915 = vld [vmem:[#allocation9 + $0x1c0] sm:$0xff]
    %v4916 = vld [vmem:[#allocation9 + $0x1c8] sm:$0xff]
    %v4917 = vld [vmem:[#allocation9 + $0x1d0] sm:$0xff]
    %v4918 = vld [vmem:[#allocation9 + $0x1d8] sm:$0xff]
    %v4919 = vld [vmem:[#allocation9 + $0x1e0] sm:$0xff]
    %v4920 = vld [vmem:[#allocation9 + $0x1e8] sm:$0xff]
    %v4921 = vld [vmem:[#allocation9 + $0x1f0] sm:$0xff]
    %v4922 = vld [vmem:[#allocation9 + $0x1f8] sm:$0xff]
    %v4923 = vld [vmem:[#allocation9 + $0x200] sm:$0xff]
    %v4924 = vld [vmem:[#allocation9 + $0x208] sm:$0xff]
    %v4925 = vld [vmem:[#allocation9 + $0x210] sm:$0xff]
    %v4926 = vld [vmem:[#allocation9 + $0x218] sm:$0xff]
    %v4927 = vld [vmem:[#allocation9 + $0x220] sm:$0xff]
    %v4928 = vld [vmem:[#allocation9 + $0x228] sm:$0xff]
    %v4929 = vld [vmem:[#allocation9 + $0x230] sm:$0xff]
    %v4930 = vld [vmem:[#allocation9 + $0x238] sm:$0xff]
    %v4931 = vld [vmem:[#allocation9 + $0x240] sm:$0xff]
    %v4932 = vld [vmem:[#allocation9 + $0x248] sm:$0xff]
    %v4933 = vld [vmem:[#allocation9 + $0x250] sm:$0xff]
    %v4934 = vld [vmem:[#allocation9 + $0x258] sm:$0xff]
    %v4935 = vld [vmem:[#allocation9 + $0x260] sm:$0xff]
    %v4936 = vld [vmem:[#allocation9 + $0x268] sm:$0xff]
    %v4937 = vld [vmem:[#allocation9 + $0x270] sm:$0xff]
    %v4938 = vld [vmem:[#allocation9 + $0x278] sm:$0xff]
    %v4939 = vld [vmem:[#allocation9 + $0x280] sm:$0xff]
    %v4940 = vld [vmem:[#allocation9 + $0x288] sm:$0xff]
    %v4941 = vld [vmem:[#allocation9 + $0x290] sm:$0xff]
    %v4942 = vld [vmem:[#allocation9 + $0x298] sm:$0xff]
    %v4943 = vld [vmem:[#allocation9 + $0x2a0] sm:$0xff]
    %v4944 = vld [vmem:[#allocation9 + $0x2a8] sm:$0xff]
    %v4945 = vld [vmem:[#allocation9 + $0x2b0] sm:$0xff]
    %v4946 = vld [vmem:[#allocation9 + $0x2b8] sm:$0xff]
    %v4947 = vld [vmem:[#allocation9 + $0x2c0] sm:$0xff]
    %v4948 = vld [vmem:[#allocation9 + $0x2c8] sm:$0xff]
    %v4949 = vld [vmem:[#allocation9 + $0x2d0] sm:$0xff]
    %v4950 = vld [vmem:[#allocation9 + $0x2d8] sm:$0xff]
    %v4951 = vld [vmem:[#allocation9 + $0x2e0] sm:$0xff]
    %v4952 = vld [vmem:[#allocation9 + $0x2e8] sm:$0xff]
    %v4953 = vld [vmem:[#allocation9 + $0x2f0] sm:$0xff]
    %v4954 = vld [vmem:[#allocation9 + $0x2f8] sm:$0xff]
    %v4955 = vld [vmem:[#allocation9 + $0x300] sm:$0xff]
    %v4956 = vld [vmem:[#allocation9 + $0x308] sm:$0xff]
    %v4957 = vld [vmem:[#allocation9 + $0x310] sm:$0xff]
    %v4958 = vld [vmem:[#allocation9 + $0x318] sm:$0xff]
    %v4959 = vld [vmem:[#allocation9 + $0x320] sm:$0xff]
    %v4960 = vld [vmem:[#allocation9 + $0x328] sm:$0xff]
    %v4961 = vld [vmem:[#allocation9 + $0x330] sm:$0xff]
    %v4962 = vld [vmem:[#allocation9 + $0x338] sm:$0xff]
    %v4963 = vld [vmem:[#allocation9 + $0x340] sm:$0xff]
    %v4964 = vld [vmem:[#allocation9 + $0x348] sm:$0xff]
    %v4965 = vld [vmem:[#allocation9 + $0x350] sm:$0xff]
    %v4966 = vld [vmem:[#allocation9 + $0x358] sm:$0xff]
    %v4967 = vld [vmem:[#allocation9 + $0x360] sm:$0xff]
    %v4968 = vld [vmem:[#allocation9 + $0x368] sm:$0xff]
    %v4969 = vld [vmem:[#allocation9 + $0x370] sm:$0xff]
    %v4970 = vld [vmem:[#allocation9 + $0x378] sm:$0xff]
    %v4971 = vld [vmem:[#allocation9 + $0x380] sm:$0xff]
    %v4972 = vld [vmem:[#allocation9 + $0x388] sm:$0xff]
    %v4973 = vld [vmem:[#allocation9 + $0x390] sm:$0xff]
    %v4974 = vld [vmem:[#allocation9 + $0x398] sm:$0xff]
    %v4975 = vld [vmem:[#allocation9 + $0x3a0] sm:$0xff]
    %v4976 = vld [vmem:[#allocation9 + $0x3a8] sm:$0xff]
    %v4977 = vld [vmem:[#allocation9 + $0x3b0] sm:$0xff]
    %v4978 = vld [vmem:[#allocation9 + $0x3b8] sm:$0xff]
    %v4979 = vld [vmem:[#allocation9 + $0x3c0] sm:$0xff]
    %v4980 = vld [vmem:[#allocation9 + $0x3c8] sm:$0xff]
    %v4981 = vld [vmem:[#allocation9 + $0x3d0] sm:$0xff]
    %v4982 = vld [vmem:[#allocation9 + $0x3d8] sm:$0xff]
    %v4983 = vld [vmem:[#allocation9 + $0x3e0] sm:$0xff]
    %v4984 = vld [vmem:[#allocation9 + $0x3e8] sm:$0xff]
    %v4985 = vld [vmem:[#allocation9 + $0x3f0] sm:$0xff]
    %v4986 = vld [vmem:[#allocation9 + $0x3f8] sm:$0xff]
    %v4987 = vld [vmem:[#allocation11] sm:$0x3]
    %v4989 = vlaneseq
    %v4990 = vshrl.u32 %v4989, 7
    %v4991 = vsub.s32 0, %v4990
    %v4992 = vrot.slane %v4987, %v4991
    %v4993 = vlaneseq
    %v4994 = vshrl.u32 %v4993, 7
    %v4995 = vsub.s32 1, %v4994
    %v4996 = vrot.slane %v4987, %v4995
    %v5127 = vunpack.c.l.b16 %v4859
    %v5128 = vunpack.c.h.b16 %v4859
    %v5129 = vunpack.c.l.b16 %v4860
    %v5130 = vunpack.c.h.b16 %v4860
    %v5131 = vunpack.c.l.b16 %v4861
    %v5132 = vunpack.c.h.b16 %v4861
    %v5133 = vunpack.c.l.b16 %v4862
    %v5134 = vunpack.c.h.b16 %v4862
    %v5135 = vunpack.c.l.b16 %v4863
    %v5136 = vunpack.c.h.b16 %v4863
    %v5137 = vunpack.c.l.b16 %v4864
    %v5138 = vunpack.c.h.b16 %v4864
    %v5139 = vunpack.c.l.b16 %v4865
    %v5140 = vunpack.c.h.b16 %v4865
    %v5141 = vunpack.c.l.b16 %v4866
    %v5142 = vunpack.c.h.b16 %v4866
    %v5143 = vunpack.c.l.b16 %v4867
    %v5144 = vunpack.c.h.b16 %v4867
    %v5145 = vunpack.c.l.b16 %v4868
    %v5146 = vunpack.c.h.b16 %v4868
    %v5147 = vunpack.c.l.b16 %v4869
    %v5148 = vunpack.c.h.b16 %v4869
    %v5149 = vunpack.c.l.b16 %v4870
    %v5150 = vunpack.c.h.b16 %v4870
    %v5151 = vunpack.c.l.b16 %v4871
    %v5152 = vunpack.c.h.b16 %v4871
    %v5153 = vunpack.c.l.b16 %v4872
    %v5154 = vunpack.c.h.b16 %v4872
    %v5155 = vunpack.c.l.b16 %v4873
    %v5156 = vunpack.c.h.b16 %v4873
    %v5157 = vunpack.c.l.b16 %v4874
    %v5158 = vunpack.c.h.b16 %v4874
    %v5159 = vunpack.c.l.b16 %v4875
    %v5160 = vunpack.c.h.b16 %v4875
    %v5161 = vunpack.c.l.b16 %v4876
    %v5162 = vunpack.c.h.b16 %v4876
    %v5163 = vunpack.c.l.b16 %v4877
    %v5164 = vunpack.c.h.b16 %v4877
    %v5165 = vunpack.c.l.b16 %v4878
    %v5166 = vunpack.c.h.b16 %v4878
    %v5167 = vunpack.c.l.b16 %v4879
    %v5168 = vunpack.c.h.b16 %v4879
    %v5169 = vunpack.c.l.b16 %v4880
    %v5170 = vunpack.c.h.b16 %v4880
    %v5171 = vunpack.c.l.b16 %v4881
    %v5172 = vunpack.c.h.b16 %v4881
    %v5173 = vunpack.c.l.b16 %v4882
    %v5174 = vunpack.c.h.b16 %v4882
    %v5175 = vunpack.c.l.b16 %v4883
    %v5176 = vunpack.c.h.b16 %v4883
    %v5177 = vunpack.c.l.b16 %v4884
    %v5178 = vunpack.c.h.b16 %v4884
    %v5179 = vunpack.c.l.b16 %v4885
    %v5180 = vunpack.c.h.b16 %v4885
    %v5181 = vunpack.c.l.b16 %v4886
    %v5182 = vunpack.c.h.b16 %v4886
    %v5183 = vunpack.c.l.b16 %v4887
    %v5184 = vunpack.c.h.b16 %v4887
    %v5185 = vunpack.c.l.b16 %v4888
    %v5186 = vunpack.c.h.b16 %v4888
    %v5187 = vunpack.c.l.b16 %v4889
    %v5188 = vunpack.c.h.b16 %v4889
    %v5189 = vunpack.c.l.b16 %v4890
    %v5190 = vunpack.c.h.b16 %v4890
    %v5191 = vunpack.c.l.b16 %v4891
    %v5192 = vunpack.c.h.b16 %v4891
    %v5193 = vunpack.c.l.b16 %v4892
    %v5194 = vunpack.c.h.b16 %v4892
    %v5195 = vunpack.c.l.b16 %v4893
    %v5196 = vunpack.c.h.b16 %v4893
    %v5197 = vunpack.c.l.b16 %v4894
    %v5198 = vunpack.c.h.b16 %v4894
    %v5199 = vunpack.c.l.b16 %v4895
    %v5200 = vunpack.c.h.b16 %v4895
    %v5201 = vunpack.c.l.b16 %v4896
    %v5202 = vunpack.c.h.b16 %v4896
    %v5203 = vunpack.c.l.b16 %v4897
    %v5204 = vunpack.c.h.b16 %v4897
    %v5205 = vunpack.c.l.b16 %v4898
    %v5206 = vunpack.c.h.b16 %v4898
    %v5207 = vunpack.c.l.b16 %v4899
    %v5208 = vunpack.c.h.b16 %v4899
    %v5209 = vunpack.c.l.b16 %v4900
    %v5210 = vunpack.c.h.b16 %v4900
    %v5211 = vunpack.c.l.b16 %v4901
    %v5212 = vunpack.c.h.b16 %v4901
    %v5213 = vunpack.c.l.b16 %v4902
    %v5214 = vunpack.c.h.b16 %v4902
    %v5215 = vunpack.c.l.b16 %v4903
    %v5216 = vunpack.c.h.b16 %v4903
    %v5217 = vunpack.c.l.b16 %v4904
    %v5218 = vunpack.c.h.b16 %v4904
    %v5219 = vunpack.c.l.b16 %v4905
    %v5220 = vunpack.c.h.b16 %v4905
    %v5221 = vunpack.c.l.b16 %v4906
    %v5222 = vunpack.c.h.b16 %v4906
    %v5223 = vunpack.c.l.b16 %v4907
    %v5224 = vunpack.c.h.b16 %v4907
    %v5225 = vunpack.c.l.b16 %v4908
    %v5226 = vunpack.c.h.b16 %v4908
    %v5227 = vunpack.c.l.b16 %v4909
    %v5228 = vunpack.c.h.b16 %v4909
    %v5229 = vunpack.c.l.b16 %v4910
    %v5230 = vunpack.c.h.b16 %v4910
    %v5231 = vunpack.c.l.b16 %v4911
    %v5232 = vunpack.c.h.b16 %v4911
    %v5233 = vunpack.c.l.b16 %v4912
    %v5234 = vunpack.c.h.b16 %v4912
    %v5235 = vunpack.c.l.b16 %v4913
    %v5236 = vunpack.c.h.b16 %v4913
    %v5237 = vunpack.c.l.b16 %v4914
    %v5238 = vunpack.c.h.b16 %v4914
    %v5239 = vunpack.c.l.b16 %v4915
    %v5240 = vunpack.c.h.b16 %v4915
    %v5241 = vunpack.c.l.b16 %v4916
    %v5242 = vunpack.c.h.b16 %v4916
    %v5243 = vunpack.c.l.b16 %v4917
    %v5244 = vunpack.c.h.b16 %v4917
    %v5245 = vunpack.c.l.b16 %v4918
    %v5246 = vunpack.c.h.b16 %v4918
    %v5247 = vunpack.c.l.b16 %v4919
    %v5248 = vunpack.c.h.b16 %v4919
    %v5249 = vunpack.c.l.b16 %v4920
    %v5250 = vunpack.c.h.b16 %v4920
    %v5251 = vunpack.c.l.b16 %v4921
    %v5252 = vunpack.c.h.b16 %v4921
    %v5253 = vunpack.c.l.b16 %v4922
    %v5254 = vunpack.c.h.b16 %v4922
    %v5255 = vunpack.c.l.b16 %v4923
    %v5256 = vunpack.c.h.b16 %v4923
    %v5257 = vunpack.c.l.b16 %v4924
    %v5258 = vunpack.c.h.b16 %v4924
    %v5259 = vunpack.c.l.b16 %v4925
    %v5260 = vunpack.c.h.b16 %v4925
    %v5261 = vunpack.c.l.b16 %v4926
    %v5262 = vunpack.c.h.b16 %v4926
    %v5263 = vunpack.c.l.b16 %v4927
    %v5264 = vunpack.c.h.b16 %v4927
    %v5265 = vunpack.c.l.b16 %v4928
    %v5266 = vunpack.c.h.b16 %v4928
    %v5267 = vunpack.c.l.b16 %v4929
    %v5268 = vunpack.c.h.b16 %v4929
    %v5269 = vunpack.c.l.b16 %v4930
    %v5270 = vunpack.c.h.b16 %v4930
    %v5271 = vunpack.c.l.b16 %v4931
    %v5272 = vunpack.c.h.b16 %v4931
    %v5273 = vunpack.c.l.b16 %v4932
    %v5274 = vunpack.c.h.b16 %v4932
    %v5275 = vunpack.c.l.b16 %v4933
    %v5276 = vunpack.c.h.b16 %v4933
    %v5277 = vunpack.c.l.b16 %v4934
    %v5278 = vunpack.c.h.b16 %v4934
    %v5279 = vunpack.c.l.b16 %v4935
    %v5280 = vunpack.c.h.b16 %v4935
    %v5281 = vunpack.c.l.b16 %v4936
    %v5282 = vunpack.c.h.b16 %v4936
    %v5283 = vunpack.c.l.b16 %v4937
    %v5284 = vunpack.c.h.b16 %v4937
    %v5285 = vunpack.c.l.b16 %v4938
    %v5286 = vunpack.c.h.b16 %v4938
    %v5287 = vunpack.c.l.b16 %v4939
    %v5288 = vunpack.c.h.b16 %v4939
    %v5289 = vunpack.c.l.b16 %v4940
    %v5290 = vunpack.c.h.b16 %v4940
    %v5291 = vunpack.c.l.b16 %v4941
    %v5292 = vunpack.c.h.b16 %v4941
    %v5293 = vunpack.c.l.b16 %v4942
    %v5294 = vunpack.c.h.b16 %v4942
    %v5295 = vunpack.c.l.b16 %v4943
    %v5296 = vunpack.c.h.b16 %v4943
    %v5297 = vunpack.c.l.b16 %v4944
    %v5298 = vunpack.c.h.b16 %v4944
    %v5299 = vunpack.c.l.b16 %v4945
    %v5300 = vunpack.c.h.b16 %v4945
    %v5301 = vunpack.c.l.b16 %v4946
    %v5302 = vunpack.c.h.b16 %v4946
    %v5303 = vunpack.c.l.b16 %v4947
    %v5304 = vunpack.c.h.b16 %v4947
    %v5305 = vunpack.c.l.b16 %v4948
    %v5306 = vunpack.c.h.b16 %v4948
    %v5307 = vunpack.c.l.b16 %v4949
    %v5308 = vunpack.c.h.b16 %v4949
    %v5309 = vunpack.c.l.b16 %v4950
    %v5310 = vunpack.c.h.b16 %v4950
    %v5311 = vunpack.c.l.b16 %v4951
    %v5312 = vunpack.c.h.b16 %v4951
    %v5313 = vunpack.c.l.b16 %v4952
    %v5314 = vunpack.c.h.b16 %v4952
    %v5315 = vunpack.c.l.b16 %v4953
    %v5316 = vunpack.c.h.b16 %v4953
    %v5317 = vunpack.c.l.b16 %v4954
    %v5318 = vunpack.c.h.b16 %v4954
    %v5319 = vunpack.c.l.b16 %v4955
    %v5320 = vunpack.c.h.b16 %v4955
    %v5321 = vunpack.c.l.b16 %v4956
    %v5322 = vunpack.c.h.b16 %v4956
    %v5323 = vunpack.c.l.b16 %v4957
    %v5324 = vunpack.c.h.b16 %v4957
    %v5325 = vunpack.c.l.b16 %v4958
    %v5326 = vunpack.c.h.b16 %v4958
    %v5327 = vunpack.c.l.b16 %v4959
    %v5328 = vunpack.c.h.b16 %v4959
    %v5329 = vunpack.c.l.b16 %v4960
    %v5330 = vunpack.c.h.b16 %v4960
    %v5331 = vunpack.c.l.b16 %v4961
    %v5332 = vunpack.c.h.b16 %v4961
    %v5333 = vunpack.c.l.b16 %v4962
    %v5334 = vunpack.c.h.b16 %v4962
    %v5335 = vunpack.c.l.b16 %v4963
    %v5336 = vunpack.c.h.b16 %v4963
    %v5337 = vunpack.c.l.b16 %v4964
    %v5338 = vunpack.c.h.b16 %v4964
    %v5339 = vunpack.c.l.b16 %v4965
    %v5340 = vunpack.c.h.b16 %v4965
    %v5341 = vunpack.c.l.b16 %v4966
    %v5342 = vunpack.c.h.b16 %v4966
    %v5343 = vunpack.c.l.b16 %v4967
    %v5344 = vunpack.c.h.b16 %v4967
    %v5345 = vunpack.c.l.b16 %v4968
    %v5346 = vunpack.c.h.b16 %v4968
    %v5347 = vunpack.c.l.b16 %v4969
    %v5348 = vunpack.c.h.b16 %v4969
    %v5349 = vunpack.c.l.b16 %v4970
    %v5350 = vunpack.c.h.b16 %v4970
    %v5351 = vunpack.c.l.b16 %v4971
    %v5352 = vunpack.c.h.b16 %v4971
    %v5353 = vunpack.c.l.b16 %v4972
    %v5354 = vunpack.c.h.b16 %v4972
    %v5355 = vunpack.c.l.b16 %v4973
    %v5356 = vunpack.c.h.b16 %v4973
    %v5357 = vunpack.c.l.b16 %v4974
    %v5358 = vunpack.c.h.b16 %v4974
    %v5359 = vunpack.c.l.b16 %v4975
    %v5360 = vunpack.c.h.b16 %v4975
    %v5361 = vunpack.c.l.b16 %v4976
    %v5362 = vunpack.c.h.b16 %v4976
    %v5363 = vunpack.c.l.b16 %v4977
    %v5364 = vunpack.c.h.b16 %v4977
    %v5365 = vunpack.c.l.b16 %v4978
    %v5366 = vunpack.c.h.b16 %v4978
    %v5367 = vunpack.c.l.b16 %v4979
    %v5368 = vunpack.c.h.b16 %v4979
    %v5369 = vunpack.c.l.b16 %v4980
    %v5370 = vunpack.c.h.b16 %v4980
    %v5371 = vunpack.c.l.b16 %v4981
    %v5372 = vunpack.c.h.b16 %v4981
    %v5373 = vunpack.c.l.b16 %v4982
    %v5374 = vunpack.c.h.b16 %v4982
    %v5375 = vunpack.c.l.b16 %v4983
    %v5376 = vunpack.c.h.b16 %v4983
    %v5377 = vunpack.c.l.b16 %v4984
    %v5378 = vunpack.c.h.b16 %v4984
    %v5379 = vunpack.c.l.b16 %v4985
    %v5380 = vunpack.c.h.b16 %v4985
    %v5381 = vunpack.c.l.b16 %v4986
    %v5382 = vunpack.c.h.b16 %v4986
    %v5383 = vpack.c.b16 %v5129, %v5127
    %v5384 = vpack.c.b16 %v5130, %v5128
    %v5385 = vpack.c.b16 %v5133, %v5131
    %v5386 = vpack.c.b16 %v5134, %v5132
    %v5387 = vpack.c.b16 %v5137, %v5135
    %v5388 = vpack.c.b16 %v5138, %v5136
    %v5389 = vpack.c.b16 %v5141, %v5139
    %v5390 = vpack.c.b16 %v5142, %v5140
    %v5391 = vpack.c.b16 %v5145, %v5143
    %v5392 = vpack.c.b16 %v5146, %v5144
    %v5393 = vpack.c.b16 %v5149, %v5147
    %v5394 = vpack.c.b16 %v5150, %v5148
    %v5395 = vpack.c.b16 %v5153, %v5151
    %v5396 = vpack.c.b16 %v5154, %v5152
    %v5397 = vpack.c.b16 %v5157, %v5155
    %v5398 = vpack.c.b16 %v5158, %v5156
    %v5399 = vpack.c.b16 %v5161, %v5159
    %v5400 = vpack.c.b16 %v5162, %v5160
    %v5401 = vpack.c.b16 %v5165, %v5163
    %v5402 = vpack.c.b16 %v5166, %v5164
    %v5403 = vpack.c.b16 %v5169, %v5167
    %v5404 = vpack.c.b16 %v5170, %v5168
    %v5405 = vpack.c.b16 %v5173, %v5171
    %v5406 = vpack.c.b16 %v5174, %v5172
    %v5407 = vpack.c.b16 %v5177, %v5175
    %v5408 = vpack.c.b16 %v5178, %v5176
    %v5409 = vpack.c.b16 %v5181, %v5179
    %v5410 = vpack.c.b16 %v5182, %v5180
    %v5411 = vpack.c.b16 %v5185, %v5183
    %v5412 = vpack.c.b16 %v5186, %v5184
    %v5413 = vpack.c.b16 %v5189, %v5187
    %v5414 = vpack.c.b16 %v5190, %v5188
    %v5415 = vpack.c.b16 %v5193, %v5191
    %v5416 = vpack.c.b16 %v5194, %v5192
    %v5417 = vpack.c.b16 %v5197, %v5195
    %v5418 = vpack.c.b16 %v5198, %v5196
    %v5419 = vpack.c.b16 %v5201, %v5199
    %v5420 = vpack.c.b16 %v5202, %v5200
    %v5421 = vpack.c.b16 %v5205, %v5203
    %v5422 = vpack.c.b16 %v5206, %v5204
    %v5423 = vpack.c.b16 %v5209, %v5207
    %v5424 = vpack.c.b16 %v5210, %v5208
    %v5425 = vpack.c.b16 %v5213, %v5211
    %v5426 = vpack.c.b16 %v5214, %v5212
    %v5427 = vpack.c.b16 %v5217, %v5215
    %v5428 = vpack.c.b16 %v5218, %v5216
    %v5429 = vpack.c.b16 %v5221, %v5219
    %v5430 = vpack.c.b16 %v5222, %v5220
    %v5431 = vpack.c.b16 %v5225, %v5223
    %v5432 = vpack.c.b16 %v5226, %v5224
    %v5433 = vpack.c.b16 %v5229, %v5227
    %v5434 = vpack.c.b16 %v5230, %v5228
    %v5435 = vpack.c.b16 %v5233, %v5231
    %v5436 = vpack.c.b16 %v5234, %v5232
    %v5437 = vpack.c.b16 %v5237, %v5235
    %v5438 = vpack.c.b16 %v5238, %v5236
    %v5439 = vpack.c.b16 %v5241, %v5239
    %v5440 = vpack.c.b16 %v5242, %v5240
    %v5441 = vpack.c.b16 %v5245, %v5243
    %v5442 = vpack.c.b16 %v5246, %v5244
    %v5443 = vpack.c.b16 %v5249, %v5247
    %v5444 = vpack.c.b16 %v5250, %v5248
    %v5445 = vpack.c.b16 %v5253, %v5251
    %v5446 = vpack.c.b16 %v5254, %v5252
    %v5447 = vpack.c.b16 %v5257, %v5255
    %v5448 = vpack.c.b16 %v5258, %v5256
    %v5449 = vpack.c.b16 %v5261, %v5259
    %v5450 = vpack.c.b16 %v5262, %v5260
    %v5451 = vpack.c.b16 %v5265, %v5263
    %v5452 = vpack.c.b16 %v5266, %v5264
    %v5453 = vpack.c.b16 %v5269, %v5267
    %v5454 = vpack.c.b16 %v5270, %v5268
    %v5455 = vpack.c.b16 %v5273, %v5271
    %v5456 = vpack.c.b16 %v5274, %v5272
    %v5457 = vpack.c.b16 %v5277, %v5275
    %v5458 = vpack.c.b16 %v5278, %v5276
    %v5459 = vpack.c.b16 %v5281, %v5279
    %v5460 = vpack.c.b16 %v5282, %v5280
    %v5461 = vpack.c.b16 %v5285, %v5283
    %v5462 = vpack.c.b16 %v5286, %v5284
    %v5463 = vpack.c.b16 %v5289, %v5287
    %v5464 = vpack.c.b16 %v5290, %v5288
    %v5465 = vpack.c.b16 %v5293, %v5291
    %v5466 = vpack.c.b16 %v5294, %v5292
    %v5467 = vpack.c.b16 %v5297, %v5295
    %v5468 = vpack.c.b16 %v5298, %v5296
    %v5469 = vpack.c.b16 %v5301, %v5299
    %v5470 = vpack.c.b16 %v5302, %v5300
    %v5471 = vpack.c.b16 %v5305, %v5303
    %v5472 = vpack.c.b16 %v5306, %v5304
    %v5473 = vpack.c.b16 %v5309, %v5307
    %v5474 = vpack.c.b16 %v5310, %v5308
    %v5475 = vpack.c.b16 %v5313, %v5311
    %v5476 = vpack.c.b16 %v5314, %v5312
    %v5477 = vpack.c.b16 %v5317, %v5315
    %v5478 = vpack.c.b16 %v5318, %v5316
    %v5479 = vpack.c.b16 %v5321, %v5319
    %v5480 = vpack.c.b16 %v5322, %v5320
    %v5481 = vpack.c.b16 %v5325, %v5323
    %v5482 = vpack.c.b16 %v5326, %v5324
    %v5483 = vpack.c.b16 %v5329, %v5327
    %v5484 = vpack.c.b16 %v5330, %v5328
    %v5485 = vpack.c.b16 %v5333, %v5331
    %v5486 = vpack.c.b16 %v5334, %v5332
    %v5487 = vpack.c.b16 %v5337, %v5335
    %v5488 = vpack.c.b16 %v5338, %v5336
    %v5489 = vpack.c.b16 %v5341, %v5339
    %v5490 = vpack.c.b16 %v5342, %v5340
    %v5491 = vpack.c.b16 %v5345, %v5343
    %v5492 = vpack.c.b16 %v5346, %v5344
    %v5493 = vpack.c.b16 %v5349, %v5347
    %v5494 = vpack.c.b16 %v5350, %v5348
    %v5495 = vpack.c.b16 %v5353, %v5351
    %v5496 = vpack.c.b16 %v5354, %v5352
    %v5497 = vpack.c.b16 %v5357, %v5355
    %v5498 = vpack.c.b16 %v5358, %v5356
    %v5499 = vpack.c.b16 %v5361, %v5359
    %v5500 = vpack.c.b16 %v5362, %v5360
    %v5501 = vpack.c.b16 %v5365, %v5363
    %v5502 = vpack.c.b16 %v5366, %v5364
    %v5503 = vpack.c.b16 %v5369, %v5367
    %v5504 = vpack.c.b16 %v5370, %v5368
    %v5505 = vpack.c.b16 %v5373, %v5371
    %v5506 = vpack.c.b16 %v5374, %v5372
    %v5507 = vpack.c.b16 %v5377, %v5375
    %v5508 = vpack.c.b16 %v5378, %v5376
    %v5509 = vpack.c.b16 %v5381, %v5379
    %v5510 = vpack.c.b16 %v5382, %v5380
    %5639 = vmatprep.subr.bf16.mxu0 %v5384
    %5640 = vmatpush1.bf16.msra.mxu0 %v5383
    %5641 = vmatprep.subr.bf16.mxu0 %v5386
    %5642 = vmatpush1.bf16.msra.mxu0 %v5385
    %5643 = vmatprep.subr.bf16.mxu0 %v5388
    %5644 = vmatpush1.bf16.msra.mxu0 %v5387
    %5645 = vmatprep.subr.bf16.mxu0 %v5390
    %5646 = vmatpush1.bf16.msra.mxu0 %v5389
    %5647 = vmatprep.subr.bf16.mxu0 %v5392
    %5648 = vmatpush1.bf16.msra.mxu0 %v5391
    %5649 = vmatprep.subr.bf16.mxu0 %v5394
    %5650 = vmatpush1.bf16.msra.mxu0 %v5393
    %5651 = vmatprep.subr.bf16.mxu0 %v5396
    %5652 = vmatpush1.bf16.msra.mxu0 %v5395
    %5653 = vmatprep.subr.bf16.mxu0 %v5398
    %5654 = vmatpush1.bf16.msra.mxu0 %v5397
    %5655 = vmatprep.subr.bf16.mxu0 %v5400
    %5656 = vmatpush1.bf16.msra.mxu0 %v5399
    %5657 = vmatprep.subr.bf16.mxu0 %v5402
    %5658 = vmatpush1.bf16.msra.mxu0 %v5401
    %5659 = vmatprep.subr.bf16.mxu0 %v5404
    %5660 = vmatpush1.bf16.msra.mxu0 %v5403
    %5661 = vmatprep.subr.bf16.mxu0 %v5406
    %5662 = vmatpush1.bf16.msra.mxu0 %v5405
    %5663 = vmatprep.subr.bf16.mxu0 %v5408
    %5664 = vmatpush1.bf16.msra.mxu0 %v5407
    %5665 = vmatprep.subr.bf16.mxu0 %v5410
    %5666 = vmatpush1.bf16.msra.mxu0 %v5409
    %5667 = vmatprep.subr.bf16.mxu0 %v5412
    %5668 = vmatpush1.bf16.msra.mxu0 %v5411
    %5669 = vmatprep.subr.bf16.mxu0 %v5414
    %5670 = vmatpush1.bf16.msra.mxu0 %v5413
    %5671 = vmatprep.mubr.bf16.mxu0 %v4852
    %5672 = vmatmul.mubr.bf16.gmra.mrb[0].mxu0 %v4851
    %v5673 = vpop.f32.mrb[0].mxu0
    %v5674 = vadd.f32 %v4992, %v5673
    %v5675 = vpop.f32.mrb[0].mxu0
    %v5676 = vadd.f32 %v4996, %v5675
    %v5677 = vpop.f32.mrb[0].mxu0
    %v5678 = vpop.f32.mrb[0].mxu0
    %5679 = vdwg.mxu0
    %5680 = vmatprep.subr.bf16.mxu0 %v5416
    %5681 = vmatpush1.bf16.msra.mxu0 %v5415
    %5682 = vmatprep.subr.bf16.mxu0 %v5418
    %5683 = vmatpush1.bf16.msra.mxu0 %v5417
    %5684 = vmatprep.subr.bf16.mxu0 %v5420
    %5685 = vmatpush1.bf16.msra.mxu0 %v5419
    %5686 = vmatprep.subr.bf16.mxu0 %v5422
    %5687 = vmatpush1.bf16.msra.mxu0 %v5421
    %5688 = vmatprep.subr.bf16.mxu0 %v5424
    %5689 = vmatpush1.bf16.msra.mxu0 %v5423
    %5690 = vmatprep.subr.bf16.mxu0 %v5426
    %5691 = vmatpush1.bf16.msra.mxu0 %v5425
    %5692 = vmatprep.subr.bf16.mxu0 %v5428
    %5693 = vmatpush1.bf16.msra.mxu0 %v5427
    %5694 = vmatprep.subr.bf16.mxu0 %v5430
    %5695 = vmatpush1.bf16.msra.mxu0 %v5429
    %5696 = vmatprep.subr.bf16.mxu0 %v5432
    %5697 = vmatpush1.bf16.msra.mxu0 %v5431
    %5698 = vmatprep.subr.bf16.mxu0 %v5434
    %5699 = vmatpush1.bf16.msra.mxu0 %v5433
    %5700 = vmatprep.subr.bf16.mxu0 %v5436
    %5701 = vmatpush1.bf16.msra.mxu0 %v5435
    %5702 = vmatprep.subr.bf16.mxu0 %v5438
    %5703 = vmatpush1.bf16.msra.mxu0 %v5437
    %5704 = vmatprep.subr.bf16.mxu0 %v5440
    %5705 = vmatpush1.bf16.msra.mxu0 %v5439
    %5706 = vmatprep.subr.bf16.mxu0 %v5442
    %5707 = vmatpush1.bf16.msra.mxu0 %v5441
    %5708 = vmatprep.subr.bf16.mxu0 %v5444
    %5709 = vmatpush1.bf16.msra.mxu0 %v5443
    %5710 = vmatprep.subr.bf16.mxu0 %v5446
    %5711 = vmatpush1.bf16.msra.mxu0 %v5445
    %5712 = vmatprep.mubr.bf16.mxu0 %v4854
    %5713 = vmatmul.mubr.bf16.gmra.mrb[0].mxu0 %v4853
    %v5714 = vpop.f32.mrb[0].mxu0
    %v5715 = vadd.f32 %v5674, %v5714
    %v5716 = vpop.f32.mrb[0].mxu0
    %v5717 = vadd.f32 %v5676, %v5716
    %v5718 = vpop.f32.mrb[0].mxu0
    %v5719 = vpop.f32.mrb[0].mxu0
    %5720 = vdwg.mxu0
    %5721 = vmatprep.subr.bf16.mxu0 %v5448
    %5722 = vmatpush1.bf16.msra.mxu0 %v5447
    %5723 = vmatprep.subr.bf16.mxu0 %v5450
    %5724 = vmatpush1.bf16.msra.mxu0 %v5449
    %5725 = vmatprep.subr.bf16.mxu0 %v5452
    %5726 = vmatpush1.bf16.msra.mxu0 %v5451
    %5727 = vmatprep.subr.bf16.mxu0 %v5454
    %5728 = vmatpush1.bf16.msra.mxu0 %v5453
    %5729 = vmatprep.subr.bf16.mxu0 %v5456
    %5730 = vmatpush1.bf16.msra.mxu0 %v5455
    %5731 = vmatprep.subr.bf16.mxu0 %v5458
    %5732 = vmatpush1.bf16.msra.mxu0 %v5457
    %5733 = vmatprep.subr.bf16.mxu0 %v5460
    %5734 = vmatpush1.bf16.msra.mxu0 %v5459
    %5735 = vmatprep.subr.bf16.mxu0 %v5462
    %5736 = vmatpush1.bf16.msra.mxu0 %v5461
    %5737 = vmatprep.subr.bf16.mxu0 %v5464
    %5738 = vmatpush1.bf16.msra.mxu0 %v5463
    %5739 = vmatprep.subr.bf16.mxu0 %v5466
    %5740 = vmatpush1.bf16.msra.mxu0 %v5465
    %5741 = vmatprep.subr.bf16.mxu0 %v5468
    %5742 = vmatpush1.bf16.msra.mxu0 %v5467
    %5743 = vmatprep.subr.bf16.mxu0 %v5470
    %5744 = vmatpush1.bf16.msra.mxu0 %v5469
    %5745 = vmatprep.subr.bf16.mxu0 %v5472
    %5746 = vmatpush1.bf16.msra.mxu0 %v5471
    %5747 = vmatprep.subr.bf16.mxu0 %v5474
    %5748 = vmatpush1.bf16.msra.mxu0 %v5473
    %5749 = vmatprep.subr.bf16.mxu0 %v5476
    %5750 = vmatpush1.bf16.msra.mxu0 %v5475
    %5751 = vmatprep.subr.bf16.mxu0 %v5478
    %5752 = vmatpush1.bf16.msra.mxu0 %v5477
    %5753 = vmatprep.mubr.bf16.mxu0 %v4856
    %5754 = vmatmul.mubr.bf16.gmra.mrb[0].mxu0 %v4855
    %v5755 = vpop.f32.mrb[0].mxu0
    %v5756 = vadd.f32 %v5715, %v5755
    %v5757 = vpop.f32.mrb[0].mxu0
    %v5758 = vadd.f32 %v5717, %v5757
    %v5759 = vpop.f32.mrb[0].mxu0
    %v5760 = vpop.f32.mrb[0].mxu0
    %5761 = vdwg.mxu0
    %5762 = vmatprep.subr.bf16.mxu0 %v5480
    %5763 = vmatpush1.bf16.msra.mxu0 %v5479
    %5764 = vmatprep.subr.bf16.mxu0 %v5482
    %5765 = vmatpush1.bf16.msra.mxu0 %v5481
    %5766 = vmatprep.subr.bf16.mxu0 %v5484
    %5767 = vmatpush1.bf16.msra.mxu0 %v5483
    %5768 = vmatprep.subr.bf16.mxu0 %v5486
    %5769 = vmatpush1.bf16.msra.mxu0 %v5485
    %5770 = vmatprep.subr.bf16.mxu0 %v5488
    %5771 = vmatpush1.bf16.msra.mxu0 %v5487
    %5772 = vmatprep.subr.bf16.mxu0 %v5490
    %5773 = vmatpush1.bf16.msra.mxu0 %v5489
    %5774 = vmatprep.subr.bf16.mxu0 %v5492
    %5775 = vmatpush1.bf16.msra.mxu0 %v5491
    %5776 = vmatprep.subr.bf16.mxu0 %v5494
    %5777 = vmatpush1.bf16.msra.mxu0 %v5493
    %5778 = vmatprep.subr.bf16.mxu0 %v5496
    %5779 = vmatpush1.bf16.msra.mxu0 %v5495
    %5780 = vmatprep.subr.bf16.mxu0 %v5498
    %5781 = vmatpush1.bf16.msra.mxu0 %v5497
    %5782 = vmatprep.subr.bf16.mxu0 %v5500
    %5783 = vmatpush1.bf16.msra.mxu0 %v5499
    %5784 = vmatprep.subr.bf16.mxu0 %v5502
    %5785 = vmatpush1.bf16.msra.mxu0 %v5501
    %5786 = vmatprep.subr.bf16.mxu0 %v5504
    %5787 = vmatpush1.bf16.msra.mxu0 %v5503
    %5788 = vmatprep.subr.bf16.mxu0 %v5506
    %5789 = vmatpush1.bf16.msra.mxu0 %v5505
    %5790 = vmatprep.subr.bf16.mxu0 %v5508
    %5791 = vmatpush1.bf16.msra.mxu0 %v5507
    %5792 = vmatprep.subr.bf16.mxu0 %v5510
    %5793 = vmatpush1.bf16.msra.mxu0 %v5509
    %5794 = vmatprep.mubr.bf16.mxu0 %v4858
    %5795 = vmatmul.mubr.bf16.gmra.mrb[0].mxu0 %v4857
    %v5796 = vpop.f32.mrb[0].mxu0
    %v5797 = vadd.f32 %v5756, %v5796
    %v5798 = vpop.f32.mrb[0].mxu0
    %v5799 = vadd.f32 %v5758, %v5798
    %v5800 = vpop.f32.mrb[0].mxu0
    %v5801 = vpop.f32.mrb[0].mxu0
    %5802 = vdwg.mxu0
    %v5803 = vmax.f32 %v5797, 0.0
    %v5804 = vmax.f32 %v5799, 0.0
    %v5805 = vpack.c.bf16 %v5803, %v5803
    %v5806 = vpack.c.bf16 %v5804, %v5804
    %v5807 = vld [vmem:[%s5] sm:$0xf]
    %v5808 = vld [vmem:[%s5 + $0x4] sm:$0xf]
    %v5809 = vld [vmem:[%s5 + $0x8] sm:$0xf]
    %v5810 = vld [vmem:[%s5 + $0xc] sm:$0xf]
    %v5811 = vld [vmem:[%s5 + $0x10] sm:$0xf]
    %v5812 = vld [vmem:[%s5 + $0x14] sm:$0xf]
    %v5813 = vld [vmem:[%s5 + $0x18] sm:$0xf]
    %v5814 = vld [vmem:[%s5 + $0x1c] sm:$0xf]
    %v5815 = vld [vmem:[%s5 + $0x20] sm:$0xf]
    %v5816 = vld [vmem:[%s5 + $0x24] sm:$0xf]
    %v5817 = vld [vmem:[%s5 + $0x28] sm:$0xf]
    %v5818 = vld [vmem:[%s5 + $0x2c] sm:$0xf]
    %v5819 = vld [vmem:[%s5 + $0x30] sm:$0xf]
    %v5820 = vld [vmem:[%s5 + $0x34] sm:$0xf]
    %v5821 = vld [vmem:[%s5 + $0x38] sm:$0xf]
    %v5822 = vld [vmem:[%s5 + $0x3c] sm:$0xf]
    %v5823 = vld [vmem:[%s5 + $0x40] sm:$0xf]
    %v5824 = vld [vmem:[%s5 + $0x44] sm:$0xf]
    %v5825 = vld [vmem:[%s5 + $0x48] sm:$0xf]
    %v5826 = vld [vmem:[%s5 + $0x4c] sm:$0xf]
    %v5827 = vld [vmem:[%s5 + $0x50] sm:$0xf]
    %v5828 = vld [vmem:[%s5 + $0x54] sm:$0xf]
    %v5829 = vld [vmem:[%s5 + $0x58] sm:$0xf]
    %v5830 = vld [vmem:[%s5 + $0x5c] sm:$0xf]
    %v5831 = vld [vmem:[%s5 + $0x60] sm:$0xf]
    %v5832 = vld [vmem:[%s5 + $0x64] sm:$0xf]
    %v5833 = vld [vmem:[%s5 + $0x68] sm:$0xf]
    %v5834 = vld [vmem:[%s5 + $0x6c] sm:$0xf]
    %v5835 = vld [vmem:[%s5 + $0x70] sm:$0xf]
    %v5836 = vld [vmem:[%s5 + $0x74] sm:$0xf]
    %v5837 = vld [vmem:[%s5 + $0x78] sm:$0xf]
    %v5838 = vld [vmem:[%s5 + $0x7c] sm:$0xf]
    %v5839 = vld [vmem:[#allocation12] sm:$0x1]
    %v5841 = vlaneseq
    %v5842 = vshrl.u32 %v5841, 7
    %v5843 = vsub.s32 0, %v5842
    %v5844 = vrot.slane %v5839, %v5843
    %v5878 = vunpack.c.l.b16 %v5807
    %v5879 = vunpack.c.l.b16 %v5808
    %v5880 = vunpack.c.l.b16 %v5809
    %v5881 = vunpack.c.l.b16 %v5810
    %v5882 = vunpack.c.l.b16 %v5811
    %v5883 = vunpack.c.l.b16 %v5812
    %v5884 = vunpack.c.l.b16 %v5813
    %v5885 = vunpack.c.l.b16 %v5814
    %v5886 = vunpack.c.l.b16 %v5815
    %v5887 = vunpack.c.l.b16 %v5816
    %v5888 = vunpack.c.l.b16 %v5817
    %v5889 = vunpack.c.l.b16 %v5818
    %v5890 = vunpack.c.l.b16 %v5819
    %v5891 = vunpack.c.l.b16 %v5820
    %v5892 = vunpack.c.l.b16 %v5821
    %v5893 = vunpack.c.l.b16 %v5822
    %v5894 = vunpack.c.l.b16 %v5823
    %v5895 = vunpack.c.l.b16 %v5824
    %v5896 = vunpack.c.l.b16 %v5825
    %v5897 = vunpack.c.l.b16 %v5826
    %v5898 = vunpack.c.l.b16 %v5827
    %v5899 = vunpack.c.l.b16 %v5828
    %v5900 = vunpack.c.l.b16 %v5829
    %v5901 = vunpack.c.l.b16 %v5830
    %v5902 = vunpack.c.l.b16 %v5831
    %v5903 = vunpack.c.l.b16 %v5832
    %v5904 = vunpack.c.l.b16 %v5833
    %v5905 = vunpack.c.l.b16 %v5834
    %v5906 = vunpack.c.l.b16 %v5835
    %v5907 = vunpack.c.l.b16 %v5836
    %v5908 = vunpack.c.l.b16 %v5837
    %v5909 = vunpack.c.l.b16 %v5838
    %v5910 = vpack.c.b16 %v5879, %v5878
    %v5911 = vpack.c.b16 %v5881, %v5880
    %v5912 = vpack.c.b16 %v5883, %v5882
    %v5913 = vpack.c.b16 %v5885, %v5884
    %v5914 = vpack.c.b16 %v5887, %v5886
    %v5915 = vpack.c.b16 %v5889, %v5888
    %v5916 = vpack.c.b16 %v5891, %v5890
    %v5917 = vpack.c.b16 %v5893, %v5892
    %v5918 = vpack.c.b16 %v5895, %v5894
    %v5919 = vpack.c.b16 %v5897, %v5896
    %v5920 = vpack.c.b16 %v5899, %v5898
    %v5921 = vpack.c.b16 %v5901, %v5900
    %v5922 = vpack.c.b16 %v5903, %v5902
    %v5923 = vpack.c.b16 %v5905, %v5904
    %v5924 = vpack.c.b16 %v5907, %v5906
    %v5925 = vpack.c.b16 %v5909, %v5908
    %5942 = vmatprep.subr.bf16.mxu0 0
    %5943 = vmatpush1.bf16.msra.mxu0 %v5910
    %5944 = vmatprep.subr.bf16.mxu0 0
    %5945 = vmatpush1.bf16.msra.mxu0 %v5911
    %5946 = vmatprep.subr.bf16.mxu0 0
    %5947 = vmatpush1.bf16.msra.mxu0 %v5912
    %5948 = vmatprep.subr.bf16.mxu0 0
    %5949 = vmatpush1.bf16.msra.mxu0 %v5913
    %5950 = vmatprep.subr.bf16.mxu0 0
    %5951 = vmatpush1.bf16.msra.mxu0 %v5914
    %5952 = vmatprep.subr.bf16.mxu0 0
    %5953 = vmatpush1.bf16.msra.mxu0 %v5915
    %5954 = vmatprep.subr.bf16.mxu0 0
    %5955 = vmatpush1.bf16.msra.mxu0 %v5916
    %5956 = vmatprep.subr.bf16.mxu0 0
    %5957 = vmatpush1.bf16.msra.mxu0 %v5917
    %5958 = vmatprep.subr.bf16.mxu0 0
    %5959 = vmatpush1.bf16.msra.mxu0 %v5918
    %5960 = vmatprep.subr.bf16.mxu0 0
    %5961 = vmatpush1.bf16.msra.mxu0 %v5919
    %5962 = vmatprep.subr.bf16.mxu0 0
    %5963 = vmatpush1.bf16.msra.mxu0 %v5920
    %5964 = vmatprep.subr.bf16.mxu0 0
    %5965 = vmatpush1.bf16.msra.mxu0 %v5921
    %5966 = vmatprep.subr.bf16.mxu0 0
    %5967 = vmatpush1.bf16.msra.mxu0 %v5922
    %5968 = vmatprep.subr.bf16.mxu0 0
    %5969 = vmatpush1.bf16.msra.mxu0 %v5923
    %5970 = vmatprep.subr.bf16.mxu0 0
    %5971 = vmatpush1.bf16.msra.mxu0 %v5924
    %5972 = vmatprep.subr.bf16.mxu0 0
    %5973 = vmatpush1.bf16.msra.mxu0 %v5925
    %5974 = vmatprep.mubr.bf16.mxu0 %v5806
    %5975 = vmatmul.mubr.bf16.gmra.mrb[0].mxu0 %v5805
    %v5976 = vpop.f32.mrb[0].mxu0
    %v5977 = vadd.f32 %v5844, %v5976
    %v5978 = vpop.f32.mrb[0].mxu0
    %v5979 = vpop.f32.mrb[0].mxu0
    %v5980 = vpop.f32.mrb[0].mxu0
    %5981 = vdwg.mxu0
    %v5982 = vmax.f32 %v5977, 0.0
    %v5983 = vld [vmem:[#allocation14] sm:$0x1]
    %v5984 = vpack.c.bf16 %v5982, %v5982
    %v5985 = vld [vmem:[#allocation2] sm:$0x1]
    %5987 = vset.pattern.permute.xlu0 0
    %5988 = vperm.xlu0 %5987, %v5985
    %v5989 = vpop.permute.xlu0 %5988
    %v5991 = vlaneseq
    %v5992 = vshrl.u32 %v5991, 7
    %v5993 = vsub.s32 0, %v5992
    %v5994 = vrot.slane %v5989, %v5993
    %vm5995 = vcmask 523264
    %v5997 = vsel %vm5995, %v5983, 0
    %v6000 = vsel %vm5995, %v5984, 0
    %6002 = vmatprep.subr.bf16.mxu0 0
    %6003 = vmatpush1.bf16.xpose.msra.mxu0 %v6000
    %6004 = vmatprep.subr.bf16.mxu0 0
    %6005 = vmatpush1.bf16.xpose.msra.mxu0 0
    %6006 = vmatprep.subr.bf16.mxu0 0
    %6007 = vmatpush1.bf16.xpose.msra.mxu0 0
    %6008 = vmatprep.subr.bf16.mxu0 0
    %6009 = vmatpush1.bf16.xpose.msra.mxu0 0
    %6010 = vmatprep.subr.bf16.mxu0 0
    %6011 = vmatpush1.bf16.xpose.msra.mxu0 0
    %6012 = vmatprep.subr.bf16.mxu0 0
    %6013 = vmatpush1.bf16.xpose.msra.mxu0 0
    %6014 = vmatprep.subr.bf16.mxu0 0
    %6015 = vmatpush1.bf16.xpose.msra.mxu0 0
    %6016 = vmatprep.subr.bf16.mxu0 0
    %6017 = vmatpush1.bf16.xpose.msra.mxu0 0
    %6018 = vmatprep.subr.bf16.mxu0 0
    %6019 = vmatpush1.bf16.xpose.msra.mxu0 0
    %6020 = vmatprep.subr.bf16.mxu0 0
    %6021 = vmatpush1.bf16.xpose.msra.mxu0 0
    %6022 = vmatprep.subr.bf16.mxu0 0
    %6023 = vmatpush1.bf16.xpose.msra.mxu0 0
    %6024 = vmatprep.subr.bf16.mxu0 0
    %6025 = vmatpush1.bf16.xpose.msra.mxu0 0
    %6026 = vmatprep.subr.bf16.mxu0 0
    %6027 = vmatpush1.bf16.xpose.msra.mxu0 0
    %6028 = vmatprep.subr.bf16.mxu0 0
    %6029 = vmatpush1.bf16.xpose.msra.mxu0 0
    %6030 = vmatprep.subr.bf16.mxu0 0
    %6031 = vmatpush1.bf16.xpose.msra.mxu0 0
    %6032 = vmatprep.subr.bf16.mxu0 0
    %6033 = vmatpush1.bf16.xpose.msra.mxu0 0
    %6034 = vmatprep.mubr.bf16.mxu0 0
    %6035 = vmatmul.mubr.bf16.gmra.mrb[0].mxu0 %v5997
    %v6036 = vpop.f32.mrb[0].mxu0
    %v6037 = vadd.f32 %v5994, %v6036
    %v6038 = vpop.f32.mrb[0].mxu0
    %v6039 = vpop.f32.mrb[0].mxu0
    %v6040 = vpop.f32.mrb[0].mxu0
    %6041 = vdwg.mxu0
    %v6042 = vand.u32 2147483647, %v6037
    %v6043 = vsub.f32 0.0, %v6042
    %v6044 = vmul.f32 %v6043, 1.442695
    %v6045 = vpow.pop %v6044
    %vm6046 = vcmp.ge.f32.partialorder %v6037, 0.0
    %v6047 = vadd.f32 %v6045, 1.0
    %v6048 = vrcp.pop %v6047
    %v6049 = vmul.f32 1.0, %v6048
    %v6050 = vmul.f32 %v6045, %v6048
    %v6051 = vsel %vm6046, %v6049, %v6050
    %vm6052 = vcmask 57344
    %6053 = vst.msk [vmem:[#allocation15] sm:$0x1] %vm6052, %v6051
    // Predicated region
    $region66: #{tpu_custom_call.1} parent=1 // pred_check
      _
    $region67: #{tpu_custom_call.1} parent=1 // pred_check_branch
      %6055 = sbr.rel (0) target = $region69
    $region68: #{tpu_custom_call.1} parent=1 // pred_region
      %s6057 = ssub.s32 16, 16
      %6058 = vsyncadd [#allocation5], %s6057
      %s6060 = sshll.u32 [#allocation15], 4
      %s6061 = int_to_ptr.vmem [resolvable:$true] %s6060
      %6063 = dma.vmem_to_hbm [thread:$0]  %s6061, 16, %s9, [#allocation5]
    $region69: #{tpu_custom_call.1} parent=1 // pred_fallthru
      _
    // Predicated region
    $region70: #{tpu_custom_call.1} parent=1 // pred_check
      _
    $region71: #{tpu_custom_call.1} parent=1 // pred_check_branch
      %6065 = sbr.rel (0) target = $region73
    $region72: #{tpu_custom_call.1} parent=1 // pred_region
      %6066 = dma.done [#allocation5], 16
    $region73: #{tpu_custom_call.1} parent=1 // pred_fallthru
      _
    %6067 = vsyncpa [#allocation4], 1
    %6068 = vsyncpa [#allocation7], 1
    %6069 = vsyncpa [#allocation10], 1
    %6070 = vsyncpa [#allocation13], 1
    %6071 = vsyncpa [#allocation5], 1

</llo_original>
